<compile_context>
chip_gen: v6e
topology: v6e:2x2x1
jax: 0.10.0
libtpu: 0.0.40
codegen_flags: <defaults>
</compile_context>

<pallas_src>
import jax
import jax.numpy as jnp
import numpy as np
from jax.experimental import pallas as pl
from jax.experimental.pallas import tpu as pltpu

# ---- module hyper-parameters (from the PyTorch source) ----------------------
N_EMBED = 384
BLOCK_SIZE = 128
HEAD_SIZE = 64          # head_size = n_embed // n_head in the surrounding model
NEG_INF = -1e30         # finite "masked" value (NaN-safe vs. -inf)


# ---- fused single-head attention kernel (batch_block per grid step) ---------
def _head_kernel(x_ref, wqkv_ref, bqkv_ref, mask_ref, o_ref):
    BB, T, C = x_ref.shape
    H = o_ref.shape[-1]
    scale = C ** -0.5            # reference scales by n_embed (C), not head_size

    # Fused QKV projection: one bf16 MXU issue with N = 3*H, f32 accumulation.
    x2 = x_ref[...].reshape(BB * T, C)                               # bf16
    qkv = jnp.dot(x2, wqkv_ref[...],
                  preferred_element_type=jnp.float32) + bqkv_ref[...]
    qkv = qkv.reshape(BB, T, 3 * H)

    # Apply the scale to q (T x 64) instead of the (T x T) scores.
    q = (qkv[..., 0:H] * scale).astype(jnp.bfloat16)
    k = qkv[..., H:2 * H].astype(jnp.bfloat16)
    v = qkv[..., 2 * H:3 * H].astype(jnp.bfloat16)

    # Scores: batched q @ k^T (contract head dims, no materialized transpose).
    s = jnp.einsum("bqh,bkh->bqk", q, k,
                   preferred_element_type=jnp.float32)
    s = s + mask_ref[...]                      # additive causal mask (0 / -1e30)

    # Numerically-stable softmax in f32; reciprocal on the EUP slot.
    s = s - jnp.max(s, axis=-1, keepdims=True)
    p = jnp.exp(s)
    denom = jnp.sum(p, axis=-1, keepdims=True)
    p = p * pl.reciprocal(denom, approx=True)
    # dropout on the attention weights is identity in eval mode

    out = jnp.einsum("bqk,bkh->bqh", p.astype(jnp.bfloat16), v,
                     preferred_element_type=jnp.float32)
    o_ref[...] = out.astype(o_ref.dtype)


def head_cached_forward(params, x, *, batch_blocks=1):
    """x: (B, T, C) float32 -> (B, T, head_size) float32.

    batch_blocks: number of grid steps over the batch. Use 1 on v5e/v6e
    (single TensorCore: fewer steps = less pipeline overhead); use 2 on v7x so
    the "parallel" batch axis shards across the two TensorCores.
    """
    B, T, C = x.shape
    H = params["wq"].shape[1]
    assert B % batch_blocks == 0
    BB = B // batch_blocks

    # bf16 operands so the HBM->VMEM DMA moves half the bytes.
    x_bf = x.astype(jnp.bfloat16)
    wqkv = jnp.concatenate([params["wq"], params["wk"], params["wv"]],
                           axis=1).astype(jnp.bfloat16)
    bqkv = jnp.concatenate([params["bq"], params["bk"], params["bv"]],
                           axis=1).astype(jnp.float32)
    tril = jnp.tril(jnp.ones((T, T), dtype=bool))
    mask = jnp.where(tril, 0.0, NEG_INF).astype(jnp.float32)

    return pl.pallas_call(
        _head_kernel,
        out_shape=jax.ShapeDtypeStruct((B, T, H), jnp.float32),
        grid=(batch_blocks,),
        in_specs=[
            pl.BlockSpec((BB, T, C), lambda b: (b, 0, 0)),   # x block
            pl.BlockSpec((C, 3 * H), lambda b: (0, 0)),      # packed QKV weight
            pl.BlockSpec((1, 3 * H), lambda b: (0, 0)),      # packed QKV bias
            pl.BlockSpec((T, T), lambda b: (0, 0)),          # additive causal mask
        ],
        out_specs=pl.BlockSpec((BB, T, H), lambda b: (b, 0, 0)),
        compiler_params=pltpu.CompilerParams(
            dimension_semantics=("parallel",)),
    )(x_bf, wqkv, bqkv, mask)


# ---- deterministic parameter init (Linear weights stored as (in, out)) ------
def init_params(key):
    ks = jax.random.split(key, 6)

    def dense(kw, kb, i, o):
        w = jax.random.normal(kw, (i, o), jnp.float32) * 0.02
        b = jax.random.normal(kb, (1, o), jnp.float32) * 0.02
        return w, b

    wq, bq = dense(ks[0], ks[1], N_EMBED, HEAD_SIZE)
    wk, bk = dense(ks[2], ks[3], N_EMBED, HEAD_SIZE)
    wv, bv = dense(ks[4], ks[5], N_EMBED, HEAD_SIZE)
    return {"wq": wq, "bq": bq, "wk": wk, "bk": bk, "wv": wv, "bv": bv}


# ---- pure-JAX reference (HIGHEST precision, for correctness check) ----------
def reference_forward(params, x):
    hp = jax.lax.Precision.HIGHEST
    B, T, C = x.shape
    q = jnp.einsum("btc,ch->bth", x, params["wq"], precision=hp) + params["bq"]
    k = jnp.einsum("btc,ch->bth", x, params["wk"], precision=hp) + params["bk"]
    v = jnp.einsum("btc,ch->bth", x, params["wv"], precision=hp) + params["bv"]
    s = jnp.einsum("bth,bsh->bts", q, k, precision=hp) * (C ** -0.5)
    mask = jnp.tril(jnp.ones((T, T), bool))
    s = jnp.where(mask[None], s, -jnp.inf)
    w = jax.nn.softmax(s, axis=-1)
    return jnp.einsum("bts,bsh->bth", w, v, precision=hp)


# ---- main --------------------------------------------------------------------
if __name__ == "__main__":
    key = jax.random.PRNGKey(0)
    pkey, xkey = jax.random.split(key)
    params = init_params(pkey)

    B, T = 4, BLOCK_SIZE
    x = jax.random.normal(xkey, (B, T, N_EMBED), jnp.float32)

    out = jax.block_until_ready(head_cached_forward(params, x))
    assert out.shape == (B, T, HEAD_SIZE)

    ref = jax.block_until_ready(reference_forward(params, x))
    np.testing.assert_allclose(np.asarray(out), np.asarray(ref),
                               rtol=2e-2, atol=2e-2)

    print("KERNEL_OK")
</pallas_src>

<mosaic_0001>
module attributes {stable_mosaic.version = 11 : i64} {
  func.func @_head_kernel(%arg0: i32, %arg1: memref<4x128x384xbf16, #tpu.memory_space<vmem>>, %arg2: memref<384x192xbf16, #tpu.memory_space<vmem>>, %arg3: memref<1x192xf32, #tpu.memory_space<vmem>>, %arg4: memref<128x128xf32, #tpu.memory_space<vmem>>, %arg5: memref<4x128x64xf32, #tpu.memory_space<vmem>>) attributes {dimension_semantics = [#tpu.dimension_semantics<parallel>], iteration_bounds = array<i64: 1>, scalar_prefetch = 0 : i64, scratch_operands = 0 : i64, tpu.core_type = #tpu.core_type<tc>, window_params = [{transform_indices = @transform_0, window_bounds = array<i64: 4, 128, 384>}, {pipeline_mode = #tpu.pipeline_mode<synchronous>, transform_indices = @transform_1, window_bounds = array<i64: 384, 192>}, {pipeline_mode = #tpu.pipeline_mode<synchronous>, transform_indices = @transform_2, window_bounds = array<i64: 1, 192>}, {pipeline_mode = #tpu.pipeline_mode<synchronous>, transform_indices = @transform_3, window_bounds = array<i64: 128, 128>}, {transform_indices = @transform_4, window_bounds = array<i64: 4, 128, 64>}]} {
    %c0 = arith.constant 0 : index
    %c0_0 = arith.constant 0 : index
    %c0_1 = arith.constant 0 : index
    %0 = vector.load %arg1[%c0, %c0_0, %c0_1] : memref<4x128x384xbf16, #tpu.memory_space<vmem>>, vector<4x128x384xbf16>
    %1 = vector.shape_cast %0 : vector<4x128x384xbf16> to vector<512x384xbf16>
    %c0_2 = arith.constant 0 : index
    %c0_3 = arith.constant 0 : index
    %2 = vector.load %arg2[%c0_2, %c0_3] : memref<384x192xbf16, #tpu.memory_space<vmem>>, vector<384x192xbf16>
    %cst = arith.constant dense<0.000000e+00> : vector<512x192xf32>
    %3 = tpu.matmul %1, %2, %cst {dimension_numbers = #tpu.dot_dimension_numbers<[1], [0], [0], [1], [0, 0, 1, 1], [], []>} : vector<512x384xbf16>, vector<384x192xbf16>, vector<512x192xf32> -> vector<512x192xf32>
    %c0_4 = arith.constant 0 : index
    %c0_5 = arith.constant 0 : index
    %4 = vector.load %arg3[%c0_4, %c0_5] : memref<1x192xf32, #tpu.memory_space<vmem>>, vector<1x192xf32>
    %5 = vector.broadcast %4 : vector<1x192xf32> to vector<512x192xf32>
    %6 = arith.addf %3, %5 : vector<512x192xf32>
    %7 = vector.shape_cast %6 : vector<512x192xf32> to vector<4x128x192xf32>
    %8 = vector.extract_strided_slice %7 {offsets = [0, 0, 0], sizes = [4, 128, 64], strides = [1, 1, 1]} : vector<4x128x192xf32> to vector<4x128x64xf32>
    %cst_6 = arith.constant 0.0510310382 : f32
    %9 = vector.broadcast %cst_6 : f32 to vector<4x128x64xf32>
    %10 = arith.mulf %8, %9 : vector<4x128x64xf32>
    %11 = arith.truncf %10 : vector<4x128x64xf32> to vector<4x128x64xbf16>
    %12 = vector.extract_strided_slice %7 {offsets = [0, 0, 64], sizes = [4, 128, 64], strides = [1, 1, 1]} : vector<4x128x192xf32> to vector<4x128x64xf32>
    %13 = arith.truncf %12 : vector<4x128x64xf32> to vector<4x128x64xbf16>
    %14 = vector.extract_strided_slice %7 {offsets = [0, 0, 128], sizes = [4, 128, 64], strides = [1, 1, 1]} : vector<4x128x192xf32> to vector<4x128x64xf32>
    %15 = arith.truncf %14 : vector<4x128x64xf32> to vector<4x128x64xbf16>
    "tpu.trace_start"() <{level = 10 : i32, message = "bqh,bkh->bqk"}> : () -> ()
    %cst_7 = arith.constant dense<0.000000e+00> : vector<4x128x128xf32>
    %16 = tpu.matmul %11, %13, %cst_7 {dimension_numbers = #tpu.dot_dimension_numbers<[2], [2], [1], [1], [0, 0, 0, 1, 1, 1], [0], [0]>} : vector<4x128x64xbf16>, vector<4x128x64xbf16>, vector<4x128x128xf32> -> vector<4x128x128xf32>
    "tpu.trace_stop"() : () -> ()
    %c0_8 = arith.constant 0 : index
    %c0_9 = arith.constant 0 : index
    %17 = vector.load %arg4[%c0_8, %c0_9] : memref<128x128xf32, #tpu.memory_space<vmem>>, vector<128x128xf32>
    %18 = vector.shape_cast %17 : vector<128x128xf32> to vector<1x128x128xf32>
    %19 = vector.broadcast %18 : vector<1x128x128xf32> to vector<4x128x128xf32>
    %20 = arith.addf %16, %19 : vector<4x128x128xf32>
    %cst_10 = arith.constant dense<0xFF800000> : vector<4x128xf32>
    %21 = vector.multi_reduction <maximumf>, %20, %cst_10 [2] : vector<4x128x128xf32> to vector<4x128xf32>
    %22 = vector.shape_cast %21 : vector<4x128xf32> to vector<4x128x1xf32>
    %23 = vector.broadcast %22 : vector<4x128x1xf32> to vector<4x128x128xf32>
    %24 = arith.subf %20, %23 : vector<4x128x128xf32>
    %25 = math.exp %24 : vector<4x128x128xf32>
    %cst_11 = arith.constant dense<0.000000e+00> : vector<4x128xf32>
    %26 = vector.multi_reduction <add>, %25, %cst_11 [2] : vector<4x128x128xf32> to vector<4x128xf32>
    %27 = vector.shape_cast %26 : vector<4x128xf32> to vector<4x128x1xf32>
    %28 = tpu.reciprocal %27 {approx = true} : vector<4x128x1xf32> -> vector<4x128x1xf32>
    %29 = vector.broadcast %28 : vector<4x128x1xf32> to vector<4x128x128xf32>
    %30 = arith.mulf %25, %29 : vector<4x128x128xf32>
    %31 = arith.truncf %30 : vector<4x128x128xf32> to vector<4x128x128xbf16>
    "tpu.trace_start"() <{level = 10 : i32, message = "bqk,bkh->bqh"}> : () -> ()
    %cst_12 = arith.constant dense<0.000000e+00> : vector<4x128x64xf32>
    %32 = tpu.matmul %31, %15, %cst_12 {dimension_numbers = #tpu.dot_dimension_numbers<[2], [1], [1], [2], [0, 0, 0, 1, 1, 2], [0], [0]>} : vector<4x128x128xbf16>, vector<4x128x64xbf16>, vector<4x128x64xf32> -> vector<4x128x64xf32>
    "tpu.trace_stop"() : () -> ()
    %c0_13 = arith.constant 0 : index
    %c0_14 = arith.constant 0 : index
    %c0_15 = arith.constant 0 : index
    %33 = vector.load %arg5[%c0_13, %c0_14, %c0_15] : memref<4x128x64xf32, #tpu.memory_space<vmem>>, vector<4x128x64xf32>
    tpu.vector_store %arg5[%c0_13, %c0_14, %c0_15], %32 {strides = array<i32>} : memref<4x128x64xf32, #tpu.memory_space<vmem>>, vector<4x128x64xf32>,
    return
  }
  func.func @transform_0(%arg0: i32) -> (i32, i32, i32) {
    %c0_i32 = arith.constant 0 : i32
    %c0_i32_0 = arith.constant 0 : i32
    %c0_i32_1 = arith.constant 0 : i32
    return %arg0, %c0_i32, %c0_i32_0 : i32, i32, i32
  }
  func.func @transform_1(%arg0: i32) -> (i32, i32) {
    %c0_i32 = arith.constant 0 : i32
    %c0_i32_0 = arith.constant 0 : i32
    %c0_i32_1 = arith.constant 0 : i32
    return %c0_i32, %c0_i32_0 : i32, i32
  }
  func.func @transform_2(%arg0: i32) -> (i32, i32) {
    %c0_i32 = arith.constant 0 : i32
    %c0_i32_0 = arith.constant 0 : i32
    %c0_i32_1 = arith.constant 0 : i32
    return %c0_i32, %c0_i32_0 : i32, i32
  }
  func.func @transform_3(%arg0: i32) -> (i32, i32) {
    %c0_i32 = arith.constant 0 : i32
    %c0_i32_0 = arith.constant 0 : i32
    %c0_i32_1 = arith.constant 0 : i32
    return %c0_i32, %c0_i32_0 : i32, i32
  }
  func.func @transform_4(%arg0: i32) -> (i32, i32, i32) {
    %c0_i32 = arith.constant 0 : i32
    %c0_i32_0 = arith.constant 0 : i32
    %c0_i32_1 = arith.constant 0 : i32
    return %arg0, %c0_i32, %c0_i32_0 : i32, i32, i32
  }
}

</mosaic_0001>

<llo_original>
// kernel: tpu_custom_call.1
$region0: #{tpu_custom_call.1}
  #allocation0 [shape = 'u32[]', space=smem, size = 0x4, offset = 0x4, fixed_abs, tag = 'smem constant byte address 0x4 - core index']
  #allocation1 [shape = 'u32[144,128]{1,0:T(1,128)}', space=vmem, size = 0x12000, scoped, tag = 'internal scratch']
  %s0 = inlined_call_operand.hbm [shape: bf16[4,128,384], index: 0, kind: input, shape index: {}]
  %s1 = inlined_call_operand.vmem [shape: bf16[384,192], index: 1, kind: input, shape index: {}]
  %s2 = inlined_call_operand.vmem [shape: f32[1,192], index: 2, kind: input, shape index: {}]
  %s3 = inlined_call_operand.vmem [shape: f32[128,128], index: 3, kind: input, shape index: {}]
  %s4 = inlined_call_operand.vmem [shape: f32[4,128,64], index: 4, kind: output, shape index: {}]
  %s5 = sld [smem:[#allocation0]]
  $region30: #{tpu_custom_call.1} parent=0
    _
  %s7 = ssub.s32 1, %s5
  %s8 = scalar_select 0, %s7, %s5
  $region1: #{tpu_custom_call.1} parent=0
    #allocation2 [shape = 'u8[393216]{0}', space=vmem, size = 0x60000, scoped, tag = 'input window, operand 0, single buffered']
    #allocation3 [shape = 's32[1]{0}', space=sflag, size = 0x4, scoped, tag = 'scoped memory for tpu_custom_call.1']
    %9 = vsyncpa [#allocation3], 0
    // Predicated region
    $region2: #{tpu_custom_call.1} parent=1 // pred_check
      _
    $region3: #{tpu_custom_call.1} parent=1 // pred_check_branch
      %11 = sbr.rel (0) target = $region5
    $region4: #{tpu_custom_call.1} parent=1 // pred_region
      %s13 = ssub.s32 12288, 12288
      %14 = vsyncadd [#allocation3], %s13
      %s15 = sshll.u32 [#allocation2], 4
      %s16 = int_to_ptr.vmem [resolvable:$true] %s15
      %21 = dma.hbm_to_vmem [thread:$0]  %s0, 12288, %s16, [#allocation3], 192, 192, 12
    $region5: #{tpu_custom_call.1} parent=1 // pred_fallthru
      _
    // Predicated region
    $region6: #{tpu_custom_call.1} parent=1 // pred_check
      _
    $region7: #{tpu_custom_call.1} parent=1 // pred_check_branch
      %23 = sbr.rel (0) target = $region9
    $region8: #{tpu_custom_call.1} parent=1 // pred_region
      _
    $region9: #{tpu_custom_call.1} parent=1 // pred_fallthru
      _
    // Predicated region
    $region10: #{tpu_custom_call.1} parent=1 // pred_check
      _
    $region11: #{tpu_custom_call.1} parent=1 // pred_check_branch
      %25 = sbr.rel (0) target = $region13
    $region12: #{tpu_custom_call.1} parent=1 // pred_region
      _
    $region13: #{tpu_custom_call.1} parent=1 // pred_fallthru
      _
    // Predicated region
    $region14: #{tpu_custom_call.1} parent=1 // pred_check
      _
    $region15: #{tpu_custom_call.1} parent=1 // pred_check_branch
      %27 = sbr.rel (0) target = $region17
    $region16: #{tpu_custom_call.1} parent=1 // pred_region
      _
    $region17: #{tpu_custom_call.1} parent=1 // pred_fallthru
      _
    // Predicated region
    $region18: #{tpu_custom_call.1} parent=1 // pred_check
      _
    $region19: #{tpu_custom_call.1} parent=1 // pred_check_branch
      %29 = sbr.rel (0) target = $region21
    $region20: #{tpu_custom_call.1} parent=1 // pred_region
      %30 = dma.done [#allocation3], 12288
    $region21: #{tpu_custom_call.1} parent=1 // pred_fallthru
      _
    %v32 = vld [vmem:[#allocation2] sm:$0xff]
    %v33 = vld [vmem:[#allocation2 + $0x8] sm:$0xf]
    %v34 = vld [vmem:[#allocation2 + $0xc] sm:$0xff]
    %v35 = vld [vmem:[#allocation2 + $0x14] sm:$0xf]
    %v36 = vld [vmem:[#allocation2 + $0x18] sm:$0xff]
    %v37 = vld [vmem:[#allocation2 + $0x20] sm:$0xf]
    %v38 = vld [vmem:[#allocation2 + $0x24] sm:$0xff]
    %v39 = vld [vmem:[#allocation2 + $0x2c] sm:$0xf]
    %v40 = vld [vmem:[#allocation2 + $0x30] sm:$0xff]
    %v41 = vld [vmem:[#allocation2 + $0x38] sm:$0xf]
    %v42 = vld [vmem:[#allocation2 + $0x3c] sm:$0xff]
    %v43 = vld [vmem:[#allocation2 + $0x44] sm:$0xf]
    %v44 = vld [vmem:[#allocation2 + $0x48] sm:$0xff]
    %v45 = vld [vmem:[#allocation2 + $0x50] sm:$0xf]
    %v46 = vld [vmem:[#allocation2 + $0x54] sm:$0xff]
    %v47 = vld [vmem:[#allocation2 + $0x5c] sm:$0xf]
    %v48 = vld [vmem:[#allocation2 + $0x60] sm:$0xff]
    %v49 = vld [vmem:[#allocation2 + $0x68] sm:$0xf]
    %v50 = vld [vmem:[#allocation2 + $0x6c] sm:$0xff]
    %v51 = vld [vmem:[#allocation2 + $0x74] sm:$0xf]
    %v52 = vld [vmem:[#allocation2 + $0x78] sm:$0xff]
    %v53 = vld [vmem:[#allocation2 + $0x80] sm:$0xf]
    %v54 = vld [vmem:[#allocation2 + $0x84] sm:$0xff]
    %v55 = vld [vmem:[#allocation2 + $0x8c] sm:$0xf]
    %v56 = vld [vmem:[#allocation2 + $0x90] sm:$0xff]
    %v57 = vld [vmem:[#allocation2 + $0x98] sm:$0xf]
    %v58 = vld [vmem:[#allocation2 + $0x9c] sm:$0xff]
    %v59 = vld [vmem:[#allocation2 + $0xa4] sm:$0xf]
    %v60 = vld [vmem:[#allocation2 + $0xa8] sm:$0xff]
    %v61 = vld [vmem:[#allocation2 + $0xb0] sm:$0xf]
    %v62 = vld [vmem:[#allocation2 + $0xb4] sm:$0xff]
    %v63 = vld [vmem:[#allocation2 + $0xbc] sm:$0xf]
    %v64 = vld [vmem:[#allocation2 + $0xc0] sm:$0xff]
    %v65 = vld [vmem:[#allocation2 + $0xc8] sm:$0xf]
    %v66 = vld [vmem:[#allocation2 + $0xcc] sm:$0xff]
    %v67 = vld [vmem:[#allocation2 + $0xd4] sm:$0xf]
    %v68 = vld [vmem:[#allocation2 + $0xd8] sm:$0xff]
    %v69 = vld [vmem:[#allocation2 + $0xe0] sm:$0xf]
    %v70 = vld [vmem:[#allocation2 + $0xe4] sm:$0xff]
    %v71 = vld [vmem:[#allocation2 + $0xec] sm:$0xf]
    %v72 = vld [vmem:[#allocation2 + $0xf0] sm:$0xff]
    %v73 = vld [vmem:[#allocation2 + $0xf8] sm:$0xf]
    %v74 = vld [vmem:[#allocation2 + $0xfc] sm:$0xff]
    %v75 = vld [vmem:[#allocation2 + $0x104] sm:$0xf]
    %v76 = vld [vmem:[#allocation2 + $0x108] sm:$0xff]
    %v77 = vld [vmem:[#allocation2 + $0x110] sm:$0xf]
    %v78 = vld [vmem:[#allocation2 + $0x114] sm:$0xff]
    %v79 = vld [vmem:[#allocation2 + $0x11c] sm:$0xf]
    %v80 = vld [vmem:[#allocation2 + $0x120] sm:$0xff]
    %v81 = vld [vmem:[#allocation2 + $0x128] sm:$0xf]
    %v82 = vld [vmem:[#allocation2 + $0x12c] sm:$0xff]
    %v83 = vld [vmem:[#allocation2 + $0x134] sm:$0xf]
    %v84 = vld [vmem:[#allocation2 + $0x138] sm:$0xff]
    %v85 = vld [vmem:[#allocation2 + $0x140] sm:$0xf]
    %v86 = vld [vmem:[#allocation2 + $0x144] sm:$0xff]
    %v87 = vld [vmem:[#allocation2 + $0x14c] sm:$0xf]
    %v88 = vld [vmem:[#allocation2 + $0x150] sm:$0xff]
    %v89 = vld [vmem:[#allocation2 + $0x158] sm:$0xf]
    %v90 = vld [vmem:[#allocation2 + $0x15c] sm:$0xff]
    %v91 = vld [vmem:[#allocation2 + $0x164] sm:$0xf]
    %v92 = vld [vmem:[#allocation2 + $0x168] sm:$0xff]
    %v93 = vld [vmem:[#allocation2 + $0x170] sm:$0xf]
    %v94 = vld [vmem:[#allocation2 + $0x174] sm:$0xff]
    %v95 = vld [vmem:[#allocation2 + $0x17c] sm:$0xf]
    %v96 = vld [vmem:[#allocation2 + $0x180] sm:$0xff]
    %v97 = vld [vmem:[#allocation2 + $0x188] sm:$0xf]
    %v98 = vld [vmem:[#allocation2 + $0x18c] sm:$0xff]
    %v99 = vld [vmem:[#allocation2 + $0x194] sm:$0xf]
    %v100 = vld [vmem:[#allocation2 + $0x198] sm:$0xff]
    %v101 = vld [vmem:[#allocation2 + $0x1a0] sm:$0xf]
    %v102 = vld [vmem:[#allocation2 + $0x1a4] sm:$0xff]
    %v103 = vld [vmem:[#allocation2 + $0x1ac] sm:$0xf]
    %v104 = vld [vmem:[#allocation2 + $0x1b0] sm:$0xff]
    %v105 = vld [vmem:[#allocation2 + $0x1b8] sm:$0xf]
    %v106 = vld [vmem:[#allocation2 + $0x1bc] sm:$0xff]
    %v107 = vld [vmem:[#allocation2 + $0x1c4] sm:$0xf]
    %v108 = vld [vmem:[#allocation2 + $0x1c8] sm:$0xff]
    %v109 = vld [vmem:[#allocation2 + $0x1d0] sm:$0xf]
    %v110 = vld [vmem:[#allocation2 + $0x1d4] sm:$0xff]
    %v111 = vld [vmem:[#allocation2 + $0x1dc] sm:$0xf]
    %v112 = vld [vmem:[#allocation2 + $0x1e0] sm:$0xff]
    %v113 = vld [vmem:[#allocation2 + $0x1e8] sm:$0xf]
    %v114 = vld [vmem:[#allocation2 + $0x1ec] sm:$0xff]
    %v115 = vld [vmem:[#allocation2 + $0x1f4] sm:$0xf]
    %v116 = vld [vmem:[#allocation2 + $0x1f8] sm:$0xff]
    %v117 = vld [vmem:[#allocation2 + $0x200] sm:$0xf]
    %v118 = vld [vmem:[#allocation2 + $0x204] sm:$0xff]
    %v119 = vld [vmem:[#allocation2 + $0x20c] sm:$0xf]
    %v120 = vld [vmem:[#allocation2 + $0x210] sm:$0xff]
    %v121 = vld [vmem:[#allocation2 + $0x218] sm:$0xf]
    %v122 = vld [vmem:[#allocation2 + $0x21c] sm:$0xff]
    %v123 = vld [vmem:[#allocation2 + $0x224] sm:$0xf]
    %v124 = vld [vmem:[#allocation2 + $0x228] sm:$0xff]
    %v125 = vld [vmem:[#allocation2 + $0x230] sm:$0xf]
    %v126 = vld [vmem:[#allocation2 + $0x234] sm:$0xff]
    %v127 = vld [vmem:[#allocation2 + $0x23c] sm:$0xf]
    %v128 = vld [vmem:[#allocation2 + $0x240] sm:$0xff]
    %v129 = vld [vmem:[#allocation2 + $0x248] sm:$0xf]
    %v130 = vld [vmem:[#allocation2 + $0x24c] sm:$0xff]
    %v131 = vld [vmem:[#allocation2 + $0x254] sm:$0xf]
    %v132 = vld [vmem:[#allocation2 + $0x258] sm:$0xff]
    %v133 = vld [vmem:[#allocation2 + $0x260] sm:$0xf]
    %v134 = vld [vmem:[#allocation2 + $0x264] sm:$0xff]
    %v135 = vld [vmem:[#allocation2 + $0x26c] sm:$0xf]
    %v136 = vld [vmem:[#allocation2 + $0x270] sm:$0xff]
    %v137 = vld [vmem:[#allocation2 + $0x278] sm:$0xf]
    %v138 = vld [vmem:[#allocation2 + $0x27c] sm:$0xff]
    %v139 = vld [vmem:[#allocation2 + $0x284] sm:$0xf]
    %v140 = vld [vmem:[#allocation2 + $0x288] sm:$0xff]
    %v141 = vld [vmem:[#allocation2 + $0x290] sm:$0xf]
    %v142 = vld [vmem:[#allocation2 + $0x294] sm:$0xff]
    %v143 = vld [vmem:[#allocation2 + $0x29c] sm:$0xf]
    %v144 = vld [vmem:[#allocation2 + $0x2a0] sm:$0xff]
    %v145 = vld [vmem:[#allocation2 + $0x2a8] sm:$0xf]
    %v146 = vld [vmem:[#allocation2 + $0x2ac] sm:$0xff]
    %v147 = vld [vmem:[#allocation2 + $0x2b4] sm:$0xf]
    %v148 = vld [vmem:[#allocation2 + $0x2b8] sm:$0xff]
    %v149 = vld [vmem:[#allocation2 + $0x2c0] sm:$0xf]
    %v150 = vld [vmem:[#allocation2 + $0x2c4] sm:$0xff]
    %v151 = vld [vmem:[#allocation2 + $0x2cc] sm:$0xf]
    %v152 = vld [vmem:[#allocation2 + $0x2d0] sm:$0xff]
    %v153 = vld [vmem:[#allocation2 + $0x2d8] sm:$0xf]
    %v154 = vld [vmem:[#allocation2 + $0x2dc] sm:$0xff]
    %v155 = vld [vmem:[#allocation2 + $0x2e4] sm:$0xf]
    %v156 = vld [vmem:[#allocation2 + $0x2e8] sm:$0xff]
    %v157 = vld [vmem:[#allocation2 + $0x2f0] sm:$0xf]
    %v158 = vld [vmem:[#allocation2 + $0x2f4] sm:$0xff]
    %v159 = vld [vmem:[#allocation2 + $0x2fc] sm:$0xf]
    %v160 = vld [vmem:[%s1] sm:$0xff]
    %v161 = vld [vmem:[%s1 + $0x8] sm:$0xff]
    %v162 = vld [vmem:[%s1 + $0x10] sm:$0xff]
    %v163 = vld [vmem:[%s1 + $0x18] sm:$0xff]
    %v164 = vld [vmem:[%s1 + $0x20] sm:$0xff]
    %v165 = vld [vmem:[%s1 + $0x28] sm:$0xff]
    %v166 = vld [vmem:[%s1 + $0x30] sm:$0xff]
    %v167 = vld [vmem:[%s1 + $0x38] sm:$0xff]
    %v168 = vld [vmem:[%s1 + $0x40] sm:$0xff]
    %v169 = vld [vmem:[%s1 + $0x48] sm:$0xff]
    %v170 = vld [vmem:[%s1 + $0x50] sm:$0xff]
    %v171 = vld [vmem:[%s1 + $0x58] sm:$0xff]
    %v172 = vld [vmem:[%s1 + $0x60] sm:$0xff]
    %v173 = vld [vmem:[%s1 + $0x68] sm:$0xff]
    %v174 = vld [vmem:[%s1 + $0x70] sm:$0xff]
    %v175 = vld [vmem:[%s1 + $0x78] sm:$0xff]
    %v176 = vld [vmem:[%s1 + $0x80] sm:$0xff]
    %v177 = vld [vmem:[%s1 + $0x88] sm:$0xff]
    %v178 = vld [vmem:[%s1 + $0x90] sm:$0xff]
    %v179 = vld [vmem:[%s1 + $0x98] sm:$0xff]
    %v180 = vld [vmem:[%s1 + $0xa0] sm:$0xff]
    %v181 = vld [vmem:[%s1 + $0xa8] sm:$0xff]
    %v182 = vld [vmem:[%s1 + $0xb0] sm:$0xff]
    %v183 = vld [vmem:[%s1 + $0xb8] sm:$0xff]
    %v184 = vld [vmem:[%s1 + $0xc0] sm:$0xff]
    %v185 = vld [vmem:[%s1 + $0xc8] sm:$0xff]
    %v186 = vld [vmem:[%s1 + $0xd0] sm:$0xff]
    %v187 = vld [vmem:[%s1 + $0xd8] sm:$0xff]
    %v188 = vld [vmem:[%s1 + $0xe0] sm:$0xff]
    %v189 = vld [vmem:[%s1 + $0xe8] sm:$0xff]
    %v190 = vld [vmem:[%s1 + $0xf0] sm:$0xff]
    %v191 = vld [vmem:[%s1 + $0xf8] sm:$0xff]
    %v192 = vld [vmem:[%s1 + $0x100] sm:$0xff]
    %v193 = vld [vmem:[%s1 + $0x108] sm:$0xff]
    %v194 = vld [vmem:[%s1 + $0x110] sm:$0xff]
    %v195 = vld [vmem:[%s1 + $0x118] sm:$0xff]
    %v196 = vld [vmem:[%s1 + $0x120] sm:$0xff]
    %v197 = vld [vmem:[%s1 + $0x128] sm:$0xff]
    %v198 = vld [vmem:[%s1 + $0x130] sm:$0xff]
    %v199 = vld [vmem:[%s1 + $0x138] sm:$0xff]
    %v200 = vld [vmem:[%s1 + $0x140] sm:$0xff]
    %v201 = vld [vmem:[%s1 + $0x148] sm:$0xff]
    %v202 = vld [vmem:[%s1 + $0x150] sm:$0xff]
    %v203 = vld [vmem:[%s1 + $0x158] sm:$0xff]
    %v204 = vld [vmem:[%s1 + $0x160] sm:$0xff]
    %v205 = vld [vmem:[%s1 + $0x168] sm:$0xff]
    %v206 = vld [vmem:[%s1 + $0x170] sm:$0xff]
    %v207 = vld [vmem:[%s1 + $0x178] sm:$0xff]
    %v208 = vld [vmem:[%s2] sm:$0x3]
    %v210 = vlaneseq
    %v211 = vshrl.u32 %v210, 7
    %v212 = vsub.s32 0, %v211
    %v213 = vrot.slane %v208, %v212
    %v214 = vlaneseq
    %v215 = vshrl.u32 %v214, 7
    %v216 = vsub.s32 1, %v215
    %v217 = vrot.slane %v208, %v216
    %v348 = vunpack.c.l.b16 %v32
    %v349 = vunpack.c.h.b16 %v32
    %v350 = vunpack.c.l.b16 %v33
    %v351 = vunpack.c.l.b16 %v34
    %v352 = vunpack.c.h.b16 %v34
    %v353 = vunpack.c.l.b16 %v35
    %v354 = vunpack.c.l.b16 %v36
    %v355 = vunpack.c.h.b16 %v36
    %v356 = vunpack.c.l.b16 %v37
    %v357 = vunpack.c.l.b16 %v38
    %v358 = vunpack.c.h.b16 %v38
    %v359 = vunpack.c.l.b16 %v39
    %v360 = vunpack.c.l.b16 %v40
    %v361 = vunpack.c.h.b16 %v40
    %v362 = vunpack.c.l.b16 %v41
    %v363 = vunpack.c.l.b16 %v42
    %v364 = vunpack.c.h.b16 %v42
    %v365 = vunpack.c.l.b16 %v43
    %v366 = vunpack.c.l.b16 %v44
    %v367 = vunpack.c.h.b16 %v44
    %v368 = vunpack.c.l.b16 %v45
    %v369 = vunpack.c.l.b16 %v46
    %v370 = vunpack.c.h.b16 %v46
    %v371 = vunpack.c.l.b16 %v47
    %v372 = vunpack.c.l.b16 %v48
    %v373 = vunpack.c.h.b16 %v48
    %v374 = vunpack.c.l.b16 %v49
    %v375 = vunpack.c.l.b16 %v50
    %v376 = vunpack.c.h.b16 %v50
    %v377 = vunpack.c.l.b16 %v51
    %v378 = vunpack.c.l.b16 %v52
    %v379 = vunpack.c.h.b16 %v52
    %v380 = vunpack.c.l.b16 %v53
    %v381 = vunpack.c.l.b16 %v54
    %v382 = vunpack.c.h.b16 %v54
    %v383 = vunpack.c.l.b16 %v55
    %v384 = vunpack.c.l.b16 %v56
    %v385 = vunpack.c.h.b16 %v56
    %v386 = vunpack.c.l.b16 %v57
    %v387 = vunpack.c.l.b16 %v58
    %v388 = vunpack.c.h.b16 %v58
    %v389 = vunpack.c.l.b16 %v59
    %v390 = vunpack.c.l.b16 %v60
    %v391 = vunpack.c.h.b16 %v60
    %v392 = vunpack.c.l.b16 %v61
    %v393 = vunpack.c.l.b16 %v62
    %v394 = vunpack.c.h.b16 %v62
    %v395 = vunpack.c.l.b16 %v63
    %v396 = vunpack.c.l.b16 %v64
    %v397 = vunpack.c.h.b16 %v64
    %v398 = vunpack.c.l.b16 %v65
    %v399 = vunpack.c.l.b16 %v66
    %v400 = vunpack.c.h.b16 %v66
    %v401 = vunpack.c.l.b16 %v67
    %v402 = vunpack.c.l.b16 %v68
    %v403 = vunpack.c.h.b16 %v68
    %v404 = vunpack.c.l.b16 %v69
    %v405 = vunpack.c.l.b16 %v70
    %v406 = vunpack.c.h.b16 %v70
    %v407 = vunpack.c.l.b16 %v71
    %v408 = vunpack.c.l.b16 %v72
    %v409 = vunpack.c.h.b16 %v72
    %v410 = vunpack.c.l.b16 %v73
    %v411 = vunpack.c.l.b16 %v74
    %v412 = vunpack.c.h.b16 %v74
    %v413 = vunpack.c.l.b16 %v75
    %v414 = vunpack.c.l.b16 %v76
    %v415 = vunpack.c.h.b16 %v76
    %v416 = vunpack.c.l.b16 %v77
    %v417 = vunpack.c.l.b16 %v78
    %v418 = vunpack.c.h.b16 %v78
    %v419 = vunpack.c.l.b16 %v79
    %v420 = vunpack.c.l.b16 %v80
    %v421 = vunpack.c.h.b16 %v80
    %v422 = vunpack.c.l.b16 %v81
    %v423 = vunpack.c.l.b16 %v82
    %v424 = vunpack.c.h.b16 %v82
    %v425 = vunpack.c.l.b16 %v83
    %v426 = vunpack.c.l.b16 %v84
    %v427 = vunpack.c.h.b16 %v84
    %v428 = vunpack.c.l.b16 %v85
    %v429 = vunpack.c.l.b16 %v86
    %v430 = vunpack.c.h.b16 %v86
    %v431 = vunpack.c.l.b16 %v87
    %v432 = vunpack.c.l.b16 %v88
    %v433 = vunpack.c.h.b16 %v88
    %v434 = vunpack.c.l.b16 %v89
    %v435 = vunpack.c.l.b16 %v90
    %v436 = vunpack.c.h.b16 %v90
    %v437 = vunpack.c.l.b16 %v91
    %v438 = vunpack.c.l.b16 %v92
    %v439 = vunpack.c.h.b16 %v92
    %v440 = vunpack.c.l.b16 %v93
    %v441 = vunpack.c.l.b16 %v94
    %v442 = vunpack.c.h.b16 %v94
    %v443 = vunpack.c.l.b16 %v95
    %v444 = vunpack.c.l.b16 %v96
    %v445 = vunpack.c.h.b16 %v96
    %v446 = vunpack.c.l.b16 %v97
    %v447 = vunpack.c.l.b16 %v98
    %v448 = vunpack.c.h.b16 %v98
    %v449 = vunpack.c.l.b16 %v99
    %v450 = vunpack.c.l.b16 %v100
    %v451 = vunpack.c.h.b16 %v100
    %v452 = vunpack.c.l.b16 %v101
    %v453 = vunpack.c.l.b16 %v102
    %v454 = vunpack.c.h.b16 %v102
    %v455 = vunpack.c.l.b16 %v103
    %v456 = vunpack.c.l.b16 %v104
    %v457 = vunpack.c.h.b16 %v104
    %v458 = vunpack.c.l.b16 %v105
    %v459 = vunpack.c.l.b16 %v106
    %v460 = vunpack.c.h.b16 %v106
    %v461 = vunpack.c.l.b16 %v107
    %v462 = vunpack.c.l.b16 %v108
    %v463 = vunpack.c.h.b16 %v108
    %v464 = vunpack.c.l.b16 %v109
    %v465 = vunpack.c.l.b16 %v110
    %v466 = vunpack.c.h.b16 %v110
    %v467 = vunpack.c.l.b16 %v111
    %v468 = vunpack.c.l.b16 %v112
    %v469 = vunpack.c.h.b16 %v112
    %v470 = vunpack.c.l.b16 %v113
    %v471 = vunpack.c.l.b16 %v114
    %v472 = vunpack.c.h.b16 %v114
    %v473 = vunpack.c.l.b16 %v115
    %v474 = vunpack.c.l.b16 %v116
    %v475 = vunpack.c.h.b16 %v116
    %v476 = vunpack.c.l.b16 %v117
    %v477 = vunpack.c.l.b16 %v118
    %v478 = vunpack.c.h.b16 %v118
    %v479 = vunpack.c.l.b16 %v119
    %v480 = vunpack.c.l.b16 %v120
    %v481 = vunpack.c.h.b16 %v120
    %v482 = vunpack.c.l.b16 %v121
    %v483 = vunpack.c.l.b16 %v122
    %v484 = vunpack.c.h.b16 %v122
    %v485 = vunpack.c.l.b16 %v123
    %v486 = vunpack.c.l.b16 %v124
    %v487 = vunpack.c.h.b16 %v124
    %v488 = vunpack.c.l.b16 %v125
    %v489 = vunpack.c.l.b16 %v126
    %v490 = vunpack.c.h.b16 %v126
    %v491 = vunpack.c.l.b16 %v127
    %v492 = vunpack.c.l.b16 %v128
    %v493 = vunpack.c.h.b16 %v128
    %v494 = vunpack.c.l.b16 %v129
    %v495 = vunpack.c.l.b16 %v130
    %v496 = vunpack.c.h.b16 %v130
    %v497 = vunpack.c.l.b16 %v131
    %v498 = vunpack.c.l.b16 %v132
    %v499 = vunpack.c.h.b16 %v132
    %v500 = vunpack.c.l.b16 %v133
    %v501 = vunpack.c.l.b16 %v134
    %v502 = vunpack.c.h.b16 %v134
    %v503 = vunpack.c.l.b16 %v135
    %v504 = vunpack.c.l.b16 %v136
    %v505 = vunpack.c.h.b16 %v136
    %v506 = vunpack.c.l.b16 %v137
    %v507 = vunpack.c.l.b16 %v138
    %v508 = vunpack.c.h.b16 %v138
    %v509 = vunpack.c.l.b16 %v139
    %v510 = vunpack.c.l.b16 %v140
    %v511 = vunpack.c.h.b16 %v140
    %v512 = vunpack.c.l.b16 %v141
    %v513 = vunpack.c.l.b16 %v142
    %v514 = vunpack.c.h.b16 %v142
    %v515 = vunpack.c.l.b16 %v143
    %v516 = vunpack.c.l.b16 %v144
    %v517 = vunpack.c.h.b16 %v144
    %v518 = vunpack.c.l.b16 %v145
    %v519 = vunpack.c.l.b16 %v146
    %v520 = vunpack.c.h.b16 %v146
    %v521 = vunpack.c.l.b16 %v147
    %v522 = vunpack.c.l.b16 %v148
    %v523 = vunpack.c.h.b16 %v148
    %v524 = vunpack.c.l.b16 %v149
    %v525 = vunpack.c.l.b16 %v150
    %v526 = vunpack.c.h.b16 %v150
    %v527 = vunpack.c.l.b16 %v151
    %v528 = vunpack.c.l.b16 %v152
    %v529 = vunpack.c.h.b16 %v152
    %v530 = vunpack.c.l.b16 %v153
    %v531 = vunpack.c.l.b16 %v154
    %v532 = vunpack.c.h.b16 %v154
    %v533 = vunpack.c.l.b16 %v155
    %v534 = vunpack.c.l.b16 %v156
    %v535 = vunpack.c.h.b16 %v156
    %v536 = vunpack.c.l.b16 %v157
    %v537 = vunpack.c.l.b16 %v158
    %v538 = vunpack.c.h.b16 %v158
    %v539 = vunpack.c.l.b16 %v159
    %v540 = vpack.c.b16 %v351, %v348
    %v541 = vpack.c.b16 %v352, %v349
    %v542 = vpack.c.b16 %v353, %v350
    %v543 = vpack.c.b16 %v357, %v354
    %v544 = vpack.c.b16 %v358, %v355
    %v545 = vpack.c.b16 %v359, %v356
    %v546 = vpack.c.b16 %v363, %v360
    %v547 = vpack.c.b16 %v364, %v361
    %v548 = vpack.c.b16 %v365, %v362
    %v549 = vpack.c.b16 %v369, %v366
    %v550 = vpack.c.b16 %v370, %v367
    %v551 = vpack.c.b16 %v371, %v368
    %v552 = vpack.c.b16 %v375, %v372
    %v553 = vpack.c.b16 %v376, %v373
    %v554 = vpack.c.b16 %v377, %v374
    %v555 = vpack.c.b16 %v381, %v378
    %v556 = vpack.c.b16 %v382, %v379
    %v557 = vpack.c.b16 %v383, %v380
    %v558 = vpack.c.b16 %v387, %v384
    %v559 = vpack.c.b16 %v388, %v385
    %v560 = vpack.c.b16 %v389, %v386
    %v561 = vpack.c.b16 %v393, %v390
    %v562 = vpack.c.b16 %v394, %v391
    %v563 = vpack.c.b16 %v395, %v392
    %v564 = vpack.c.b16 %v399, %v396
    %v565 = vpack.c.b16 %v400, %v397
    %v566 = vpack.c.b16 %v401, %v398
    %v567 = vpack.c.b16 %v405, %v402
    %v568 = vpack.c.b16 %v406, %v403
    %v569 = vpack.c.b16 %v407, %v404
    %v570 = vpack.c.b16 %v411, %v408
    %v571 = vpack.c.b16 %v412, %v409
    %v572 = vpack.c.b16 %v413, %v410
    %v573 = vpack.c.b16 %v417, %v414
    %v574 = vpack.c.b16 %v418, %v415
    %v575 = vpack.c.b16 %v419, %v416
    %v576 = vpack.c.b16 %v423, %v420
    %v577 = vpack.c.b16 %v424, %v421
    %v578 = vpack.c.b16 %v425, %v422
    %v579 = vpack.c.b16 %v429, %v426
    %v580 = vpack.c.b16 %v430, %v427
    %v581 = vpack.c.b16 %v431, %v428
    %v582 = vpack.c.b16 %v435, %v432
    %v583 = vpack.c.b16 %v436, %v433
    %v584 = vpack.c.b16 %v437, %v434
    %v585 = vpack.c.b16 %v441, %v438
    %v586 = vpack.c.b16 %v442, %v439
    %v587 = vpack.c.b16 %v443, %v440
    %v588 = vpack.c.b16 %v447, %v444
    %v589 = vpack.c.b16 %v448, %v445
    %v590 = vpack.c.b16 %v449, %v446
    %v591 = vpack.c.b16 %v453, %v450
    %v592 = vpack.c.b16 %v454, %v451
    %v593 = vpack.c.b16 %v455, %v452
    %v594 = vpack.c.b16 %v459, %v456
    %v595 = vpack.c.b16 %v460, %v457
    %v596 = vpack.c.b16 %v461, %v458
    %v597 = vpack.c.b16 %v465, %v462
    %v598 = vpack.c.b16 %v466, %v463
    %v599 = vpack.c.b16 %v467, %v464
    %v600 = vpack.c.b16 %v471, %v468
    %v601 = vpack.c.b16 %v472, %v469
    %v602 = vpack.c.b16 %v473, %v470
    %v603 = vpack.c.b16 %v477, %v474
    %v604 = vpack.c.b16 %v478, %v475
    %v605 = vpack.c.b16 %v479, %v476
    %v606 = vpack.c.b16 %v483, %v480
    %v607 = vpack.c.b16 %v484, %v481
    %v608 = vpack.c.b16 %v485, %v482
    %v609 = vpack.c.b16 %v489, %v486
    %v610 = vpack.c.b16 %v490, %v487
    %v611 = vpack.c.b16 %v491, %v488
    %v612 = vpack.c.b16 %v495, %v492
    %v613 = vpack.c.b16 %v496, %v493
    %v614 = vpack.c.b16 %v497, %v494
    %v615 = vpack.c.b16 %v501, %v498
    %v616 = vpack.c.b16 %v502, %v499
    %v617 = vpack.c.b16 %v503, %v500
    %v618 = vpack.c.b16 %v507, %v504
    %v619 = vpack.c.b16 %v508, %v505
    %v620 = vpack.c.b16 %v509, %v506
    %v621 = vpack.c.b16 %v513, %v510
    %v622 = vpack.c.b16 %v514, %v511
    %v623 = vpack.c.b16 %v515, %v512
    %v624 = vpack.c.b16 %v519, %v516
    %v625 = vpack.c.b16 %v520, %v517
    %v626 = vpack.c.b16 %v521, %v518
    %v627 = vpack.c.b16 %v525, %v522
    %v628 = vpack.c.b16 %v526, %v523
    %v629 = vpack.c.b16 %v527, %v524
    %v630 = vpack.c.b16 %v531, %v528
    %v631 = vpack.c.b16 %v532, %v529
    %v632 = vpack.c.b16 %v533, %v530
    %v633 = vpack.c.b16 %v537, %v534
    %v634 = vpack.c.b16 %v538, %v535
    %v635 = vpack.c.b16 %v539, %v536
    %v780 = vunpack.c.l.b16 %v160
    %v781 = vunpack.c.h.b16 %v160
    %v782 = vunpack.c.l.b16 %v161
    %v783 = vunpack.c.h.b16 %v161
    %v784 = vunpack.c.l.b16 %v162
    %v785 = vunpack.c.h.b16 %v162
    %v786 = vunpack.c.l.b16 %v163
    %v787 = vunpack.c.h.b16 %v163
    %v788 = vunpack.c.l.b16 %v164
    %v789 = vunpack.c.h.b16 %v164
    %v790 = vunpack.c.l.b16 %v165
    %v791 = vunpack.c.h.b16 %v165
    %v792 = vunpack.c.l.b16 %v166
    %v793 = vunpack.c.h.b16 %v166
    %v794 = vunpack.c.l.b16 %v167
    %v795 = vunpack.c.h.b16 %v167
    %v796 = vunpack.c.l.b16 %v168
    %v797 = vunpack.c.h.b16 %v168
    %v798 = vunpack.c.l.b16 %v169
    %v799 = vunpack.c.h.b16 %v169
    %v800 = vunpack.c.l.b16 %v170
    %v801 = vunpack.c.h.b16 %v170
    %v802 = vunpack.c.l.b16 %v171
    %v803 = vunpack.c.h.b16 %v171
    %v804 = vunpack.c.l.b16 %v172
    %v805 = vunpack.c.h.b16 %v172
    %v806 = vunpack.c.l.b16 %v173
    %v807 = vunpack.c.h.b16 %v173
    %v808 = vunpack.c.l.b16 %v174
    %v809 = vunpack.c.h.b16 %v174
    %v810 = vunpack.c.l.b16 %v175
    %v811 = vunpack.c.h.b16 %v175
    %v812 = vunpack.c.l.b16 %v176
    %v813 = vunpack.c.h.b16 %v176
    %v814 = vunpack.c.l.b16 %v177
    %v815 = vunpack.c.h.b16 %v177
    %v816 = vunpack.c.l.b16 %v178
    %v817 = vunpack.c.h.b16 %v178
    %v818 = vunpack.c.l.b16 %v179
    %v819 = vunpack.c.h.b16 %v179
    %v820 = vunpack.c.l.b16 %v180
    %v821 = vunpack.c.h.b16 %v180
    %v822 = vunpack.c.l.b16 %v181
    %v823 = vunpack.c.h.b16 %v181
    %v824 = vunpack.c.l.b16 %v182
    %v825 = vunpack.c.h.b16 %v182
    %v826 = vunpack.c.l.b16 %v183
    %v827 = vunpack.c.h.b16 %v183
    %v828 = vunpack.c.l.b16 %v184
    %v829 = vunpack.c.h.b16 %v184
    %v830 = vunpack.c.l.b16 %v185
    %v831 = vunpack.c.h.b16 %v185
    %v832 = vunpack.c.l.b16 %v186
    %v833 = vunpack.c.h.b16 %v186
    %v834 = vunpack.c.l.b16 %v187
    %v835 = vunpack.c.h.b16 %v187
    %v836 = vunpack.c.l.b16 %v188
    %v837 = vunpack.c.h.b16 %v188
    %v838 = vunpack.c.l.b16 %v189
    %v839 = vunpack.c.h.b16 %v189
    %v840 = vunpack.c.l.b16 %v190
    %v841 = vunpack.c.h.b16 %v190
    %v842 = vunpack.c.l.b16 %v191
    %v843 = vunpack.c.h.b16 %v191
    %v844 = vunpack.c.l.b16 %v192
    %v845 = vunpack.c.h.b16 %v192
    %v846 = vunpack.c.l.b16 %v193
    %v847 = vunpack.c.h.b16 %v193
    %v848 = vunpack.c.l.b16 %v194
    %v849 = vunpack.c.h.b16 %v194
    %v850 = vunpack.c.l.b16 %v195
    %v851 = vunpack.c.h.b16 %v195
    %v852 = vunpack.c.l.b16 %v196
    %v853 = vunpack.c.h.b16 %v196
    %v854 = vunpack.c.l.b16 %v197
    %v855 = vunpack.c.h.b16 %v197
    %v856 = vunpack.c.l.b16 %v198
    %v857 = vunpack.c.h.b16 %v198
    %v858 = vunpack.c.l.b16 %v199
    %v859 = vunpack.c.h.b16 %v199
    %v860 = vunpack.c.l.b16 %v200
    %v861 = vunpack.c.h.b16 %v200
    %v862 = vunpack.c.l.b16 %v201
    %v863 = vunpack.c.h.b16 %v201
    %v864 = vunpack.c.l.b16 %v202
    %v865 = vunpack.c.h.b16 %v202
    %v866 = vunpack.c.l.b16 %v203
    %v867 = vunpack.c.h.b16 %v203
    %v868 = vunpack.c.l.b16 %v204
    %v869 = vunpack.c.h.b16 %v204
    %v870 = vunpack.c.l.b16 %v205
    %v871 = vunpack.c.h.b16 %v205
    %v872 = vunpack.c.l.b16 %v206
    %v873 = vunpack.c.h.b16 %v206
    %v874 = vunpack.c.l.b16 %v207
    %v875 = vunpack.c.h.b16 %v207
    %v876 = vpack.c.b16 %v782, %v780
    %v877 = vpack.c.b16 %v783, %v781
    %v878 = vpack.c.b16 %v786, %v784
    %v879 = vpack.c.b16 %v787, %v785
    %v880 = vpack.c.b16 %v790, %v788
    %v881 = vpack.c.b16 %v791, %v789
    %v882 = vpack.c.b16 %v794, %v792
    %v883 = vpack.c.b16 %v795, %v793
    %v884 = vpack.c.b16 %v798, %v796
    %v885 = vpack.c.b16 %v799, %v797
    %v886 = vpack.c.b16 %v802, %v800
    %v887 = vpack.c.b16 %v803, %v801
    %v888 = vpack.c.b16 %v806, %v804
    %v889 = vpack.c.b16 %v807, %v805
    %v890 = vpack.c.b16 %v810, %v808
    %v891 = vpack.c.b16 %v811, %v809
    %v892 = vpack.c.b16 %v814, %v812
    %v893 = vpack.c.b16 %v815, %v813
    %v894 = vpack.c.b16 %v818, %v816
    %v895 = vpack.c.b16 %v819, %v817
    %v896 = vpack.c.b16 %v822, %v820
    %v897 = vpack.c.b16 %v823, %v821
    %v898 = vpack.c.b16 %v826, %v824
    %v899 = vpack.c.b16 %v827, %v825
    %v900 = vpack.c.b16 %v830, %v828
    %v901 = vpack.c.b16 %v831, %v829
    %v902 = vpack.c.b16 %v834, %v832
    %v903 = vpack.c.b16 %v835, %v833
    %v904 = vpack.c.b16 %v838, %v836
    %v905 = vpack.c.b16 %v839, %v837
    %v906 = vpack.c.b16 %v842, %v840
    %v907 = vpack.c.b16 %v843, %v841
    %v908 = vpack.c.b16 %v846, %v844
    %v909 = vpack.c.b16 %v847, %v845
    %v910 = vpack.c.b16 %v850, %v848
    %v911 = vpack.c.b16 %v851, %v849
    %v912 = vpack.c.b16 %v854, %v852
    %v913 = vpack.c.b16 %v855, %v853
    %v914 = vpack.c.b16 %v858, %v856
    %v915 = vpack.c.b16 %v859, %v857
    %v916 = vpack.c.b16 %v862, %v860
    %v917 = vpack.c.b16 %v863, %v861
    %v918 = vpack.c.b16 %v866, %v864
    %v919 = vpack.c.b16 %v867, %v865
    %v920 = vpack.c.b16 %v870, %v868
    %v921 = vpack.c.b16 %v871, %v869
    %v922 = vpack.c.b16 %v874, %v872
    %v923 = vpack.c.b16 %v875, %v873
    %972 = vmatprep.subr.bf16.mxu0 %v891
    %973 = vmatpush1.bf16.msra.mxu0 %v890
    %974 = vmatprep.subr.bf16.mxu0 %v889
    %975 = vmatpush1.bf16.msra.mxu0 %v888
    %976 = vmatprep.subr.bf16.mxu0 %v887
    %977 = vmatpush1.bf16.msra.mxu0 %v886
    %978 = vmatprep.subr.bf16.mxu0 %v885
    %979 = vmatpush1.bf16.msra.mxu0 %v884
    %980 = vmatprep.subr.bf16.mxu0 %v883
    %981 = vmatpush1.bf16.msra.mxu0 %v882
    %982 = vmatprep.subr.bf16.mxu0 %v881
    %983 = vmatpush1.bf16.msra.mxu0 %v880
    %984 = vmatprep.subr.bf16.mxu0 %v879
    %985 = vmatpush1.bf16.msra.mxu0 %v878
    %986 = vmatprep.subr.bf16.mxu0 %v877
    %987 = vmatpush1.bf16.msra.mxu0 %v876
    %988 = vmatprep.subr.bf16.mxu0 %v907
    %989 = vmatpush2.bf16.msra.mxu0 %v906
    %990 = vmatprep.subr.bf16.mxu0 %v905
    %991 = vmatpush2.bf16.msra.mxu0 %v904
    %992 = vmatprep.subr.bf16.mxu0 %v903
    %993 = vmatpush2.bf16.msra.mxu0 %v902
    %994 = vmatprep.subr.bf16.mxu0 %v901
    %995 = vmatpush2.bf16.msra.mxu0 %v900
    %996 = vmatprep.subr.bf16.mxu0 %v899
    %997 = vmatpush2.bf16.msra.mxu0 %v898
    %998 = vmatprep.subr.bf16.mxu0 %v897
    %999 = vmatpush2.bf16.msra.mxu0 %v896
    %1000 = vmatprep.subr.bf16.mxu0 %v895
    %1001 = vmatpush2.bf16.msra.mxu0 %v894
    %1002 = vmatprep.subr.bf16.mxu0 %v893
    %1003 = vmatpush2.bf16.msra.mxu0 %v892
    %1004 = vmatprep.mubr.bf16.mxu0 %v541
    %1005 = vmatmul.mubr.bf16.gmra.mxu0 %v540
    %v1006 = vpop.f32.mrf.mxu0
    %v1007 = vadd.f32 %v213, %v1006
    %v1008 = vpop.f32.mrf.mxu0
    %v1009 = vadd.f32 %v217, %v1008
    %v1010 = vpop.f32.mrf.mxu0
    %v1011 = vadd.f32 %v213, %v1010
    %v1012 = vpop.f32.mrf.mxu0
    %v1013 = vadd.f32 %v217, %v1012
    %1014 = vmatprep.mubr.bf16.mxu0 %v544
    %1015 = vmatmul.mubr.bf16.gmra.mxu0 %v543
    %v1016 = vpop.f32.mrf.mxu0
    %v1017 = vadd.f32 %v213, %v1016
    %v1018 = vpop.f32.mrf.mxu0
    %v1019 = vadd.f32 %v217, %v1018
    %v1020 = vpop.f32.mrf.mxu0
    %v1021 = vadd.f32 %v213, %v1020
    %v1022 = vpop.f32.mrf.mxu0
    %v1023 = vadd.f32 %v217, %v1022
    %1024 = vmatprep.mubr.bf16.mxu0 %v547
    %1025 = vmatmul.mubr.bf16.gmra.mxu0 %v546
    %v1026 = vpop.f32.mrf.mxu0
    %v1027 = vadd.f32 %v213, %v1026
    %v1028 = vpop.f32.mrf.mxu0
    %v1029 = vadd.f32 %v217, %v1028
    %v1030 = vpop.f32.mrf.mxu0
    %v1031 = vadd.f32 %v213, %v1030
    %v1032 = vpop.f32.mrf.mxu0
    %v1033 = vadd.f32 %v217, %v1032
    %1034 = vmatprep.mubr.bf16.mxu0 %v550
    %1035 = vmatmul.mubr.bf16.gmra.mxu0 %v549
    %v1036 = vpop.f32.mrf.mxu0
    %v1037 = vadd.f32 %v213, %v1036
    %v1038 = vpop.f32.mrf.mxu0
    %v1039 = vadd.f32 %v217, %v1038
    %v1040 = vpop.f32.mrf.mxu0
    %v1041 = vadd.f32 %v213, %v1040
    %v1042 = vpop.f32.mrf.mxu0
    %v1043 = vadd.f32 %v217, %v1042
    %1044 = vmatprep.mubr.bf16.mxu0 %v553
    %1045 = vmatmul.mubr.bf16.gmra.mxu0 %v552
    %v1046 = vpop.f32.mrf.mxu0
    %v1047 = vadd.f32 %v213, %v1046
    %v1048 = vpop.f32.mrf.mxu0
    %v1049 = vadd.f32 %v217, %v1048
    %v1050 = vpop.f32.mrf.mxu0
    %v1051 = vadd.f32 %v213, %v1050
    %v1052 = vpop.f32.mrf.mxu0
    %v1053 = vadd.f32 %v217, %v1052
    %1054 = vmatprep.mubr.bf16.mxu0 %v556
    %1055 = vmatmul.mubr.bf16.gmra.mxu0 %v555
    %v1056 = vpop.f32.mrf.mxu0
    %v1057 = vadd.f32 %v213, %v1056
    %v1058 = vpop.f32.mrf.mxu0
    %v1059 = vadd.f32 %v217, %v1058
    %v1060 = vpop.f32.mrf.mxu0
    %v1061 = vadd.f32 %v213, %v1060
    %v1062 = vpop.f32.mrf.mxu0
    %v1063 = vadd.f32 %v217, %v1062
    %1064 = vmatprep.mubr.bf16.mxu0 %v559
    %1065 = vmatmul.mubr.bf16.gmra.mxu0 %v558
    %v1066 = vpop.f32.mrf.mxu0
    %v1067 = vadd.f32 %v213, %v1066
    %v1068 = vpop.f32.mrf.mxu0
    %v1069 = vadd.f32 %v217, %v1068
    %v1070 = vpop.f32.mrf.mxu0
    %v1071 = vadd.f32 %v213, %v1070
    %v1072 = vpop.f32.mrf.mxu0
    %v1073 = vadd.f32 %v217, %v1072
    %1074 = vmatprep.mubr.bf16.mxu0 %v562
    %1075 = vmatmul.mubr.bf16.gmra.mxu0 %v561
    %v1076 = vpop.f32.mrf.mxu0
    %v1077 = vadd.f32 %v213, %v1076
    %v1078 = vpop.f32.mrf.mxu0
    %v1079 = vadd.f32 %v217, %v1078
    %v1080 = vpop.f32.mrf.mxu0
    %v1081 = vadd.f32 %v213, %v1080
    %v1082 = vpop.f32.mrf.mxu0
    %v1083 = vadd.f32 %v217, %v1082
    %1084 = vmatprep.mubr.bf16.mxu0 %v565
    %1085 = vmatmul.mubr.bf16.gmra.mxu0 %v564
    %v1086 = vpop.f32.mrf.mxu0
    %v1087 = vadd.f32 %v213, %v1086
    %v1088 = vpop.f32.mrf.mxu0
    %v1089 = vadd.f32 %v217, %v1088
    %v1090 = vpop.f32.mrf.mxu0
    %v1091 = vadd.f32 %v213, %v1090
    %v1092 = vpop.f32.mrf.mxu0
    %v1093 = vadd.f32 %v217, %v1092
    %1094 = vmatprep.mubr.bf16.mxu0 %v568
    %1095 = vmatmul.mubr.bf16.gmra.mxu0 %v567
    %v1096 = vpop.f32.mrf.mxu0
    %v1097 = vadd.f32 %v213, %v1096
    %v1098 = vpop.f32.mrf.mxu0
    %v1099 = vadd.f32 %v217, %v1098
    %v1100 = vpop.f32.mrf.mxu0
    %v1101 = vadd.f32 %v213, %v1100
    %v1102 = vpop.f32.mrf.mxu0
    %v1103 = vadd.f32 %v217, %v1102
    %1104 = vmatprep.mubr.bf16.mxu0 %v571
    %1105 = vmatmul.mubr.bf16.gmra.mxu0 %v570
    %v1106 = vpop.f32.mrf.mxu0
    %v1107 = vadd.f32 %v213, %v1106
    %v1108 = vpop.f32.mrf.mxu0
    %v1109 = vadd.f32 %v217, %v1108
    %v1110 = vpop.f32.mrf.mxu0
    %v1111 = vadd.f32 %v213, %v1110
    %v1112 = vpop.f32.mrf.mxu0
    %v1113 = vadd.f32 %v217, %v1112
    %1114 = vmatprep.mubr.bf16.mxu0 %v574
    %1115 = vmatmul.mubr.bf16.gmra.mxu0 %v573
    %v1116 = vpop.f32.mrf.mxu0
    %v1117 = vadd.f32 %v213, %v1116
    %v1118 = vpop.f32.mrf.mxu0
    %v1119 = vadd.f32 %v217, %v1118
    %v1120 = vpop.f32.mrf.mxu0
    %v1121 = vadd.f32 %v213, %v1120
    %v1122 = vpop.f32.mrf.mxu0
    %v1123 = vadd.f32 %v217, %v1122
    %1124 = vmatprep.mubr.bf16.mxu0 %v577
    %1125 = vmatmul.mubr.bf16.gmra.mxu0 %v576
    %v1126 = vpop.f32.mrf.mxu0
    %v1127 = vadd.f32 %v213, %v1126
    %v1128 = vpop.f32.mrf.mxu0
    %v1129 = vadd.f32 %v217, %v1128
    %v1130 = vpop.f32.mrf.mxu0
    %v1131 = vadd.f32 %v213, %v1130
    %v1132 = vpop.f32.mrf.mxu0
    %v1133 = vadd.f32 %v217, %v1132
    %1134 = vmatprep.mubr.bf16.mxu0 %v580
    %1135 = vmatmul.mubr.bf16.gmra.mxu0 %v579
    %v1136 = vpop.f32.mrf.mxu0
    %v1137 = vadd.f32 %v213, %v1136
    %v1138 = vpop.f32.mrf.mxu0
    %v1139 = vadd.f32 %v217, %v1138
    %v1140 = vpop.f32.mrf.mxu0
    %v1141 = vadd.f32 %v213, %v1140
    %v1142 = vpop.f32.mrf.mxu0
    %v1143 = vadd.f32 %v217, %v1142
    %1144 = vmatprep.mubr.bf16.mxu0 %v583
    %1145 = vmatmul.mubr.bf16.gmra.mxu0 %v582
    %v1146 = vpop.f32.mrf.mxu0
    %v1147 = vadd.f32 %v213, %v1146
    %v1148 = vpop.f32.mrf.mxu0
    %v1149 = vadd.f32 %v217, %v1148
    %v1150 = vpop.f32.mrf.mxu0
    %v1151 = vadd.f32 %v213, %v1150
    %v1152 = vpop.f32.mrf.mxu0
    %v1153 = vadd.f32 %v217, %v1152
    %1154 = vmatprep.mubr.bf16.mxu0 %v586
    %1155 = vmatmul.mubr.bf16.gmra.mxu0 %v585
    %v1156 = vpop.f32.mrf.mxu0
    %v1157 = vadd.f32 %v213, %v1156
    %v1158 = vpop.f32.mrf.mxu0
    %v1159 = vadd.f32 %v217, %v1158
    %v1160 = vpop.f32.mrf.mxu0
    %v1161 = vadd.f32 %v213, %v1160
    %v1162 = vpop.f32.mrf.mxu0
    %v1163 = vadd.f32 %v217, %v1162
    %1164 = vmatprep.mubr.bf16.mxu0 %v589
    %1165 = vmatmul.mubr.bf16.gmra.mxu0 %v588
    %v1166 = vpop.f32.mrf.mxu0
    %v1167 = vadd.f32 %v213, %v1166
    %v1168 = vpop.f32.mrf.mxu0
    %v1169 = vadd.f32 %v217, %v1168
    %v1170 = vpop.f32.mrf.mxu0
    %v1171 = vadd.f32 %v213, %v1170
    %v1172 = vpop.f32.mrf.mxu0
    %v1173 = vadd.f32 %v217, %v1172
    %1174 = vmatprep.mubr.bf16.mxu0 %v592
    %1175 = vmatmul.mubr.bf16.gmra.mxu0 %v591
    %v1176 = vpop.f32.mrf.mxu0
    %v1177 = vadd.f32 %v213, %v1176
    %v1178 = vpop.f32.mrf.mxu0
    %v1179 = vadd.f32 %v217, %v1178
    %v1180 = vpop.f32.mrf.mxu0
    %v1181 = vadd.f32 %v213, %v1180
    %v1182 = vpop.f32.mrf.mxu0
    %v1183 = vadd.f32 %v217, %v1182
    %1184 = vmatprep.mubr.bf16.mxu0 %v595
    %1185 = vmatmul.mubr.bf16.gmra.mxu0 %v594
    %v1186 = vpop.f32.mrf.mxu0
    %v1187 = vadd.f32 %v213, %v1186
    %v1188 = vpop.f32.mrf.mxu0
    %v1189 = vadd.f32 %v217, %v1188
    %v1190 = vpop.f32.mrf.mxu0
    %v1191 = vadd.f32 %v213, %v1190
    %v1192 = vpop.f32.mrf.mxu0
    %v1193 = vadd.f32 %v217, %v1192
    %1194 = vmatprep.mubr.bf16.mxu0 %v598
    %1195 = vmatmul.mubr.bf16.gmra.mxu0 %v597
    %v1196 = vpop.f32.mrf.mxu0
    %v1197 = vadd.f32 %v213, %v1196
    %v1198 = vpop.f32.mrf.mxu0
    %v1199 = vadd.f32 %v217, %v1198
    %v1200 = vpop.f32.mrf.mxu0
    %v1201 = vadd.f32 %v213, %v1200
    %v1202 = vpop.f32.mrf.mxu0
    %v1203 = vadd.f32 %v217, %v1202
    %1204 = vmatprep.mubr.bf16.mxu0 %v601
    %1205 = vmatmul.mubr.bf16.gmra.mxu0 %v600
    %v1206 = vpop.f32.mrf.mxu0
    %v1207 = vadd.f32 %v213, %v1206
    %v1208 = vpop.f32.mrf.mxu0
    %v1209 = vadd.f32 %v217, %v1208
    %v1210 = vpop.f32.mrf.mxu0
    %v1211 = vadd.f32 %v213, %v1210
    %v1212 = vpop.f32.mrf.mxu0
    %v1213 = vadd.f32 %v217, %v1212
    %1214 = vmatprep.mubr.bf16.mxu0 %v604
    %1215 = vmatmul.mubr.bf16.gmra.mxu0 %v603
    %v1216 = vpop.f32.mrf.mxu0
    %v1217 = vadd.f32 %v213, %v1216
    %v1218 = vpop.f32.mrf.mxu0
    %v1219 = vadd.f32 %v217, %v1218
    %v1220 = vpop.f32.mrf.mxu0
    %v1221 = vadd.f32 %v213, %v1220
    %v1222 = vpop.f32.mrf.mxu0
    %v1223 = vadd.f32 %v217, %v1222
    %1224 = vmatprep.mubr.bf16.mxu0 %v607
    %1225 = vmatmul.mubr.bf16.gmra.mxu0 %v606
    %v1226 = vpop.f32.mrf.mxu0
    %v1227 = vadd.f32 %v213, %v1226
    %v1228 = vpop.f32.mrf.mxu0
    %v1229 = vadd.f32 %v217, %v1228
    %v1230 = vpop.f32.mrf.mxu0
    %v1231 = vadd.f32 %v213, %v1230
    %v1232 = vpop.f32.mrf.mxu0
    %v1233 = vadd.f32 %v217, %v1232
    %1234 = vmatprep.mubr.bf16.mxu0 %v610
    %1235 = vmatmul.mubr.bf16.gmra.mxu0 %v609
    %v1236 = vpop.f32.mrf.mxu0
    %v1237 = vadd.f32 %v213, %v1236
    %v1238 = vpop.f32.mrf.mxu0
    %v1239 = vadd.f32 %v217, %v1238
    %v1240 = vpop.f32.mrf.mxu0
    %v1241 = vadd.f32 %v213, %v1240
    %v1242 = vpop.f32.mrf.mxu0
    %v1243 = vadd.f32 %v217, %v1242
    %1244 = vmatprep.mubr.bf16.mxu0 %v613
    %1245 = vmatmul.mubr.bf16.gmra.mxu0 %v612
    %v1246 = vpop.f32.mrf.mxu0
    %v1247 = vadd.f32 %v213, %v1246
    %v1248 = vpop.f32.mrf.mxu0
    %v1249 = vadd.f32 %v217, %v1248
    %v1250 = vpop.f32.mrf.mxu0
    %v1251 = vadd.f32 %v213, %v1250
    %v1252 = vpop.f32.mrf.mxu0
    %v1253 = vadd.f32 %v217, %v1252
    %1254 = vmatprep.mubr.bf16.mxu0 %v616
    %1255 = vmatmul.mubr.bf16.gmra.mxu0 %v615
    %v1256 = vpop.f32.mrf.mxu0
    %v1257 = vadd.f32 %v213, %v1256
    %v1258 = vpop.f32.mrf.mxu0
    %v1259 = vadd.f32 %v217, %v1258
    %v1260 = vpop.f32.mrf.mxu0
    %v1261 = vadd.f32 %v213, %v1260
    %v1262 = vpop.f32.mrf.mxu0
    %v1263 = vadd.f32 %v217, %v1262
    %1264 = vmatprep.mubr.bf16.mxu0 %v619
    %1265 = vmatmul.mubr.bf16.gmra.mxu0 %v618
    %v1266 = vpop.f32.mrf.mxu0
    %v1267 = vadd.f32 %v213, %v1266
    %v1268 = vpop.f32.mrf.mxu0
    %v1269 = vadd.f32 %v217, %v1268
    %v1270 = vpop.f32.mrf.mxu0
    %v1271 = vadd.f32 %v213, %v1270
    %v1272 = vpop.f32.mrf.mxu0
    %v1273 = vadd.f32 %v217, %v1272
    %1274 = vmatprep.mubr.bf16.mxu0 %v622
    %1275 = vmatmul.mubr.bf16.gmra.mxu0 %v621
    %v1276 = vpop.f32.mrf.mxu0
    %v1277 = vadd.f32 %v213, %v1276
    %v1278 = vpop.f32.mrf.mxu0
    %v1279 = vadd.f32 %v217, %v1278
    %v1280 = vpop.f32.mrf.mxu0
    %v1281 = vadd.f32 %v213, %v1280
    %v1282 = vpop.f32.mrf.mxu0
    %v1283 = vadd.f32 %v217, %v1282
    %1284 = vmatprep.mubr.bf16.mxu0 %v625
    %1285 = vmatmul.mubr.bf16.gmra.mxu0 %v624
    %v1286 = vpop.f32.mrf.mxu0
    %v1287 = vadd.f32 %v213, %v1286
    %v1288 = vpop.f32.mrf.mxu0
    %v1289 = vadd.f32 %v217, %v1288
    %v1290 = vpop.f32.mrf.mxu0
    %v1291 = vadd.f32 %v213, %v1290
    %v1292 = vpop.f32.mrf.mxu0
    %v1293 = vadd.f32 %v217, %v1292
    %1294 = vmatprep.mubr.bf16.mxu0 %v628
    %1295 = vmatmul.mubr.bf16.gmra.mxu0 %v627
    %v1296 = vpop.f32.mrf.mxu0
    %v1297 = vadd.f32 %v213, %v1296
    %v1298 = vpop.f32.mrf.mxu0
    %v1299 = vadd.f32 %v217, %v1298
    %v1300 = vpop.f32.mrf.mxu0
    %v1301 = vadd.f32 %v213, %v1300
    %v1302 = vpop.f32.mrf.mxu0
    %v1303 = vadd.f32 %v217, %v1302
    %1304 = vmatprep.mubr.bf16.mxu0 %v631
    %1305 = vmatmul.mubr.bf16.gmra.mxu0 %v630
    %v1306 = vpop.f32.mrf.mxu0
    %v1307 = vadd.f32 %v213, %v1306
    %v1308 = vpop.f32.mrf.mxu0
    %v1309 = vadd.f32 %v217, %v1308
    %v1310 = vpop.f32.mrf.mxu0
    %v1311 = vadd.f32 %v213, %v1310
    %v1312 = vpop.f32.mrf.mxu0
    %v1313 = vadd.f32 %v217, %v1312
    %1314 = vmatprep.mubr.bf16.mxu0 %v634
    %1315 = vmatmul.mubr.bf16.gmra.mxu0 %v633
    %v1316 = vpop.f32.mrf.mxu0
    %v1317 = vadd.f32 %v213, %v1316
    %v1318 = vpop.f32.mrf.mxu0
    %v1319 = vadd.f32 %v217, %v1318
    %v1320 = vpop.f32.mrf.mxu0
    %v1321 = vadd.f32 %v213, %v1320
    %v1322 = vpop.f32.mrf.mxu0
    %v1323 = vadd.f32 %v217, %v1322
    %1324 = vdwg.mxu0
    %1325 = vmatprep.subr.bf16.mxu0 %v923
    %1326 = vmatpush1.bf16.msra.mxu0 %v922
    %1327 = vmatprep.subr.bf16.mxu0 %v921
    %1328 = vmatpush1.bf16.msra.mxu0 %v920
    %1329 = vmatprep.subr.bf16.mxu0 %v919
    %1330 = vmatpush1.bf16.msra.mxu0 %v918
    %1331 = vmatprep.subr.bf16.mxu0 %v917
    %1332 = vmatpush1.bf16.msra.mxu0 %v916
    %1333 = vmatprep.subr.bf16.mxu0 %v915
    %1334 = vmatpush1.bf16.msra.mxu0 %v914
    %1335 = vmatprep.subr.bf16.mxu0 %v913
    %1336 = vmatpush1.bf16.msra.mxu0 %v912
    %1337 = vmatprep.subr.bf16.mxu0 %v911
    %1338 = vmatpush1.bf16.msra.mxu0 %v910
    %1339 = vmatprep.subr.bf16.mxu0 %v909
    %1340 = vmatpush1.bf16.msra.mxu0 %v908
    %1341 = vmatprep.subr.bf16.mxu0 0
    %1342 = vmatpush2.bf16.msra.mxu0 0
    %1343 = vmatprep.subr.bf16.mxu0 0
    %1344 = vmatpush2.bf16.msra.mxu0 0
    %1345 = vmatprep.subr.bf16.mxu0 0
    %1346 = vmatpush2.bf16.msra.mxu0 0
    %1347 = vmatprep.subr.bf16.mxu0 0
    %1348 = vmatpush2.bf16.msra.mxu0 0
    %1349 = vmatprep.subr.bf16.mxu0 0
    %1350 = vmatpush2.bf16.msra.mxu0 0
    %1351 = vmatprep.subr.bf16.mxu0 0
    %1352 = vmatpush2.bf16.msra.mxu0 0
    %1353 = vmatprep.subr.bf16.mxu0 0
    %1354 = vmatpush2.bf16.msra.mxu0 0
    %1355 = vmatprep.subr.bf16.mxu0 0
    %1356 = vmatpush2.bf16.msra.mxu0 0
    %1357 = vmatprep.mubr.bf16.mxu0 0
    %1358 = vmatmul.mubr.bf16.gmra.mxu0 %v542
    %v1359 = vpop.f32.mrf.mxu0
    %v1360 = vadd.f32 %v1007, %v1359
    %v1361 = vpop.f32.mrf.mxu0
    %v1362 = vadd.f32 %v1009, %v1361
    %v1363 = vpop.f32.mrf.mxu0
    %v1364 = vadd.f32 %v1011, %v1363
    %v1365 = vpop.f32.mrf.mxu0
    %v1366 = vadd.f32 %v1013, %v1365
    %1367 = vmatprep.mubr.bf16.mxu0 0
    %1368 = vmatmul.mubr.bf16.gmra.mxu0 %v545
    %v1369 = vpop.f32.mrf.mxu0
    %v1370 = vadd.f32 %v1017, %v1369
    %v1371 = vpop.f32.mrf.mxu0
    %v1372 = vadd.f32 %v1019, %v1371
    %v1373 = vpop.f32.mrf.mxu0
    %v1374 = vadd.f32 %v1021, %v1373
    %v1375 = vpop.f32.mrf.mxu0
    %v1376 = vadd.f32 %v1023, %v1375
    %1377 = vmatprep.mubr.bf16.mxu0 0
    %1378 = vmatmul.mubr.bf16.gmra.mxu0 %v548
    %v1379 = vpop.f32.mrf.mxu0
    %v1380 = vadd.f32 %v1027, %v1379
    %v1381 = vpop.f32.mrf.mxu0
    %v1382 = vadd.f32 %v1029, %v1381
    %v1383 = vpop.f32.mrf.mxu0
    %v1384 = vadd.f32 %v1031, %v1383
    %v1385 = vpop.f32.mrf.mxu0
    %v1386 = vadd.f32 %v1033, %v1385
    %1387 = vmatprep.mubr.bf16.mxu0 0
    %1388 = vmatmul.mubr.bf16.gmra.mxu0 %v551
    %v1389 = vpop.f32.mrf.mxu0
    %v1390 = vadd.f32 %v1037, %v1389
    %v1391 = vpop.f32.mrf.mxu0
    %v1392 = vadd.f32 %v1039, %v1391
    %v1393 = vpop.f32.mrf.mxu0
    %v1394 = vadd.f32 %v1041, %v1393
    %v1395 = vpop.f32.mrf.mxu0
    %v1396 = vadd.f32 %v1043, %v1395
    %1397 = vmatprep.mubr.bf16.mxu0 0
    %1398 = vmatmul.mubr.bf16.gmra.mxu0 %v554
    %v1399 = vpop.f32.mrf.mxu0
    %v1400 = vadd.f32 %v1047, %v1399
    %v1401 = vpop.f32.mrf.mxu0
    %v1402 = vadd.f32 %v1049, %v1401
    %v1403 = vpop.f32.mrf.mxu0
    %v1404 = vadd.f32 %v1051, %v1403
    %v1405 = vpop.f32.mrf.mxu0
    %v1406 = vadd.f32 %v1053, %v1405
    %1407 = vmatprep.mubr.bf16.mxu0 0
    %1408 = vmatmul.mubr.bf16.gmra.mxu0 %v557
    %v1409 = vpop.f32.mrf.mxu0
    %v1410 = vadd.f32 %v1057, %v1409
    %v1411 = vpop.f32.mrf.mxu0
    %v1412 = vadd.f32 %v1059, %v1411
    %v1413 = vpop.f32.mrf.mxu0
    %v1414 = vadd.f32 %v1061, %v1413
    %v1415 = vpop.f32.mrf.mxu0
    %v1416 = vadd.f32 %v1063, %v1415
    %1417 = vmatprep.mubr.bf16.mxu0 0
    %1418 = vmatmul.mubr.bf16.gmra.mxu0 %v560
    %v1419 = vpop.f32.mrf.mxu0
    %v1420 = vadd.f32 %v1067, %v1419
    %v1421 = vpop.f32.mrf.mxu0
    %v1422 = vadd.f32 %v1069, %v1421
    %v1423 = vpop.f32.mrf.mxu0
    %v1424 = vadd.f32 %v1071, %v1423
    %v1425 = vpop.f32.mrf.mxu0
    %v1426 = vadd.f32 %v1073, %v1425
    %1427 = vmatprep.mubr.bf16.mxu0 0
    %1428 = vmatmul.mubr.bf16.gmra.mxu0 %v563
    %v1429 = vpop.f32.mrf.mxu0
    %v1430 = vadd.f32 %v1077, %v1429
    %v1431 = vpop.f32.mrf.mxu0
    %v1432 = vadd.f32 %v1079, %v1431
    %v1433 = vpop.f32.mrf.mxu0
    %v1434 = vadd.f32 %v1081, %v1433
    %v1435 = vpop.f32.mrf.mxu0
    %v1436 = vadd.f32 %v1083, %v1435
    %1437 = vmatprep.mubr.bf16.mxu0 0
    %1438 = vmatmul.mubr.bf16.gmra.mxu0 %v566
    %v1439 = vpop.f32.mrf.mxu0
    %v1440 = vadd.f32 %v1087, %v1439
    %v1441 = vpop.f32.mrf.mxu0
    %v1442 = vadd.f32 %v1089, %v1441
    %v1443 = vpop.f32.mrf.mxu0
    %v1444 = vadd.f32 %v1091, %v1443
    %v1445 = vpop.f32.mrf.mxu0
    %v1446 = vadd.f32 %v1093, %v1445
    %1447 = vmatprep.mubr.bf16.mxu0 0
    %1448 = vmatmul.mubr.bf16.gmra.mxu0 %v569
    %v1449 = vpop.f32.mrf.mxu0
    %v1450 = vadd.f32 %v1097, %v1449
    %v1451 = vpop.f32.mrf.mxu0
    %v1452 = vadd.f32 %v1099, %v1451
    %v1453 = vpop.f32.mrf.mxu0
    %v1454 = vadd.f32 %v1101, %v1453
    %v1455 = vpop.f32.mrf.mxu0
    %v1456 = vadd.f32 %v1103, %v1455
    %1457 = vmatprep.mubr.bf16.mxu0 0
    %1458 = vmatmul.mubr.bf16.gmra.mxu0 %v572
    %v1459 = vpop.f32.mrf.mxu0
    %v1460 = vadd.f32 %v1107, %v1459
    %v1461 = vpop.f32.mrf.mxu0
    %v1462 = vadd.f32 %v1109, %v1461
    %v1463 = vpop.f32.mrf.mxu0
    %v1464 = vadd.f32 %v1111, %v1463
    %v1465 = vpop.f32.mrf.mxu0
    %v1466 = vadd.f32 %v1113, %v1465
    %1467 = vmatprep.mubr.bf16.mxu0 0
    %1468 = vmatmul.mubr.bf16.gmra.mxu0 %v575
    %v1469 = vpop.f32.mrf.mxu0
    %v1470 = vadd.f32 %v1117, %v1469
    %v1471 = vpop.f32.mrf.mxu0
    %v1472 = vadd.f32 %v1119, %v1471
    %v1473 = vpop.f32.mrf.mxu0
    %v1474 = vadd.f32 %v1121, %v1473
    %v1475 = vpop.f32.mrf.mxu0
    %v1476 = vadd.f32 %v1123, %v1475
    %1477 = vmatprep.mubr.bf16.mxu0 0
    %1478 = vmatmul.mubr.bf16.gmra.mxu0 %v578
    %v1479 = vpop.f32.mrf.mxu0
    %v1480 = vadd.f32 %v1127, %v1479
    %v1481 = vpop.f32.mrf.mxu0
    %v1482 = vadd.f32 %v1129, %v1481
    %v1483 = vpop.f32.mrf.mxu0
    %v1484 = vadd.f32 %v1131, %v1483
    %v1485 = vpop.f32.mrf.mxu0
    %v1486 = vadd.f32 %v1133, %v1485
    %1487 = vmatprep.mubr.bf16.mxu0 0
    %1488 = vmatmul.mubr.bf16.gmra.mxu0 %v581
    %v1489 = vpop.f32.mrf.mxu0
    %v1490 = vadd.f32 %v1137, %v1489
    %v1491 = vpop.f32.mrf.mxu0
    %v1492 = vadd.f32 %v1139, %v1491
    %v1493 = vpop.f32.mrf.mxu0
    %v1494 = vadd.f32 %v1141, %v1493
    %v1495 = vpop.f32.mrf.mxu0
    %v1496 = vadd.f32 %v1143, %v1495
    %1497 = vmatprep.mubr.bf16.mxu0 0
    %1498 = vmatmul.mubr.bf16.gmra.mxu0 %v584
    %v1499 = vpop.f32.mrf.mxu0
    %v1500 = vadd.f32 %v1147, %v1499
    %v1501 = vpop.f32.mrf.mxu0
    %v1502 = vadd.f32 %v1149, %v1501
    %v1503 = vpop.f32.mrf.mxu0
    %v1504 = vadd.f32 %v1151, %v1503
    %v1505 = vpop.f32.mrf.mxu0
    %v1506 = vadd.f32 %v1153, %v1505
    %1507 = vmatprep.mubr.bf16.mxu0 0
    %1508 = vmatmul.mubr.bf16.gmra.mxu0 %v587
    %v1509 = vpop.f32.mrf.mxu0
    %v1510 = vadd.f32 %v1157, %v1509
    %v1511 = vpop.f32.mrf.mxu0
    %v1512 = vadd.f32 %v1159, %v1511
    %v1513 = vpop.f32.mrf.mxu0
    %v1514 = vadd.f32 %v1161, %v1513
    %v1515 = vpop.f32.mrf.mxu0
    %v1516 = vadd.f32 %v1163, %v1515
    %1517 = vmatprep.mubr.bf16.mxu0 0
    %1518 = vmatmul.mubr.bf16.gmra.mxu0 %v590
    %v1519 = vpop.f32.mrf.mxu0
    %v1520 = vadd.f32 %v1167, %v1519
    %v1521 = vpop.f32.mrf.mxu0
    %v1522 = vadd.f32 %v1169, %v1521
    %v1523 = vpop.f32.mrf.mxu0
    %v1524 = vadd.f32 %v1171, %v1523
    %v1525 = vpop.f32.mrf.mxu0
    %v1526 = vadd.f32 %v1173, %v1525
    %1527 = vmatprep.mubr.bf16.mxu0 0
    %1528 = vmatmul.mubr.bf16.gmra.mxu0 %v593
    %v1529 = vpop.f32.mrf.mxu0
    %v1530 = vadd.f32 %v1177, %v1529
    %v1531 = vpop.f32.mrf.mxu0
    %v1532 = vadd.f32 %v1179, %v1531
    %v1533 = vpop.f32.mrf.mxu0
    %v1534 = vadd.f32 %v1181, %v1533
    %v1535 = vpop.f32.mrf.mxu0
    %v1536 = vadd.f32 %v1183, %v1535
    %1537 = vmatprep.mubr.bf16.mxu0 0
    %1538 = vmatmul.mubr.bf16.gmra.mxu0 %v596
    %v1539 = vpop.f32.mrf.mxu0
    %v1540 = vadd.f32 %v1187, %v1539
    %v1541 = vpop.f32.mrf.mxu0
    %v1542 = vadd.f32 %v1189, %v1541
    %v1543 = vpop.f32.mrf.mxu0
    %v1544 = vadd.f32 %v1191, %v1543
    %v1545 = vpop.f32.mrf.mxu0
    %v1546 = vadd.f32 %v1193, %v1545
    %1547 = vmatprep.mubr.bf16.mxu0 0
    %1548 = vmatmul.mubr.bf16.gmra.mxu0 %v599
    %v1549 = vpop.f32.mrf.mxu0
    %v1550 = vadd.f32 %v1197, %v1549
    %v1551 = vpop.f32.mrf.mxu0
    %v1552 = vadd.f32 %v1199, %v1551
    %v1553 = vpop.f32.mrf.mxu0
    %v1554 = vadd.f32 %v1201, %v1553
    %v1555 = vpop.f32.mrf.mxu0
    %v1556 = vadd.f32 %v1203, %v1555
    %1557 = vmatprep.mubr.bf16.mxu0 0
    %1558 = vmatmul.mubr.bf16.gmra.mxu0 %v602
    %v1559 = vpop.f32.mrf.mxu0
    %v1560 = vadd.f32 %v1207, %v1559
    %v1561 = vpop.f32.mrf.mxu0
    %v1562 = vadd.f32 %v1209, %v1561
    %v1563 = vpop.f32.mrf.mxu0
    %v1564 = vadd.f32 %v1211, %v1563
    %v1565 = vpop.f32.mrf.mxu0
    %v1566 = vadd.f32 %v1213, %v1565
    %1567 = vmatprep.mubr.bf16.mxu0 0
    %1568 = vmatmul.mubr.bf16.gmra.mxu0 %v605
    %v1569 = vpop.f32.mrf.mxu0
    %v1570 = vadd.f32 %v1217, %v1569
    %v1571 = vpop.f32.mrf.mxu0
    %v1572 = vadd.f32 %v1219, %v1571
    %v1573 = vpop.f32.mrf.mxu0
    %v1574 = vadd.f32 %v1221, %v1573
    %v1575 = vpop.f32.mrf.mxu0
    %v1576 = vadd.f32 %v1223, %v1575
    %1577 = vmatprep.mubr.bf16.mxu0 0
    %1578 = vmatmul.mubr.bf16.gmra.mxu0 %v608
    %v1579 = vpop.f32.mrf.mxu0
    %v1580 = vadd.f32 %v1227, %v1579
    %v1581 = vpop.f32.mrf.mxu0
    %v1582 = vadd.f32 %v1229, %v1581
    %v1583 = vpop.f32.mrf.mxu0
    %v1584 = vadd.f32 %v1231, %v1583
    %v1585 = vpop.f32.mrf.mxu0
    %v1586 = vadd.f32 %v1233, %v1585
    %1587 = vmatprep.mubr.bf16.mxu0 0
    %1588 = vmatmul.mubr.bf16.gmra.mxu0 %v611
    %v1589 = vpop.f32.mrf.mxu0
    %v1590 = vadd.f32 %v1237, %v1589
    %v1591 = vpop.f32.mrf.mxu0
    %v1592 = vadd.f32 %v1239, %v1591
    %v1593 = vpop.f32.mrf.mxu0
    %v1594 = vadd.f32 %v1241, %v1593
    %v1595 = vpop.f32.mrf.mxu0
    %v1596 = vadd.f32 %v1243, %v1595
    %1597 = vmatprep.mubr.bf16.mxu0 0
    %1598 = vmatmul.mubr.bf16.gmra.mxu0 %v614
    %v1599 = vpop.f32.mrf.mxu0
    %v1600 = vadd.f32 %v1247, %v1599
    %v1601 = vpop.f32.mrf.mxu0
    %v1602 = vadd.f32 %v1249, %v1601
    %v1603 = vpop.f32.mrf.mxu0
    %v1604 = vadd.f32 %v1251, %v1603
    %v1605 = vpop.f32.mrf.mxu0
    %v1606 = vadd.f32 %v1253, %v1605
    %1607 = vmatprep.mubr.bf16.mxu0 0
    %1608 = vmatmul.mubr.bf16.gmra.mxu0 %v617
    %v1609 = vpop.f32.mrf.mxu0
    %v1610 = vadd.f32 %v1257, %v1609
    %v1611 = vpop.f32.mrf.mxu0
    %v1612 = vadd.f32 %v1259, %v1611
    %v1613 = vpop.f32.mrf.mxu0
    %v1614 = vadd.f32 %v1261, %v1613
    %v1615 = vpop.f32.mrf.mxu0
    %v1616 = vadd.f32 %v1263, %v1615
    %1617 = vmatprep.mubr.bf16.mxu0 0
    %1618 = vmatmul.mubr.bf16.gmra.mxu0 %v620
    %v1619 = vpop.f32.mrf.mxu0
    %v1620 = vadd.f32 %v1267, %v1619
    %v1621 = vpop.f32.mrf.mxu0
    %v1622 = vadd.f32 %v1269, %v1621
    %v1623 = vpop.f32.mrf.mxu0
    %v1624 = vadd.f32 %v1271, %v1623
    %v1625 = vpop.f32.mrf.mxu0
    %v1626 = vadd.f32 %v1273, %v1625
    %1627 = vmatprep.mubr.bf16.mxu0 0
    %1628 = vmatmul.mubr.bf16.gmra.mxu0 %v623
    %v1629 = vpop.f32.mrf.mxu0
    %v1630 = vadd.f32 %v1277, %v1629
    %v1631 = vpop.f32.mrf.mxu0
    %v1632 = vadd.f32 %v1279, %v1631
    %v1633 = vpop.f32.mrf.mxu0
    %v1634 = vadd.f32 %v1281, %v1633
    %v1635 = vpop.f32.mrf.mxu0
    %v1636 = vadd.f32 %v1283, %v1635
    %1637 = vmatprep.mubr.bf16.mxu0 0
    %1638 = vmatmul.mubr.bf16.gmra.mxu0 %v626
    %v1639 = vpop.f32.mrf.mxu0
    %v1640 = vadd.f32 %v1287, %v1639
    %v1641 = vpop.f32.mrf.mxu0
    %v1642 = vadd.f32 %v1289, %v1641
    %v1643 = vpop.f32.mrf.mxu0
    %v1644 = vadd.f32 %v1291, %v1643
    %v1645 = vpop.f32.mrf.mxu0
    %v1646 = vadd.f32 %v1293, %v1645
    %1647 = vmatprep.mubr.bf16.mxu0 0
    %1648 = vmatmul.mubr.bf16.gmra.mxu0 %v629
    %v1649 = vpop.f32.mrf.mxu0
    %v1650 = vadd.f32 %v1297, %v1649
    %v1651 = vpop.f32.mrf.mxu0
    %v1652 = vadd.f32 %v1299, %v1651
    %v1653 = vpop.f32.mrf.mxu0
    %v1654 = vadd.f32 %v1301, %v1653
    %v1655 = vpop.f32.mrf.mxu0
    %v1656 = vadd.f32 %v1303, %v1655
    %1657 = vmatprep.mubr.bf16.mxu0 0
    %1658 = vmatmul.mubr.bf16.gmra.mxu0 %v632
    %v1659 = vpop.f32.mrf.mxu0
    %v1660 = vadd.f32 %v1307, %v1659
    %v1661 = vpop.f32.mrf.mxu0
    %v1662 = vadd.f32 %v1309, %v1661
    %v1663 = vpop.f32.mrf.mxu0
    %v1664 = vadd.f32 %v1311, %v1663
    %v1665 = vpop.f32.mrf.mxu0
    %v1666 = vadd.f32 %v1313, %v1665
    %1667 = vmatprep.mubr.bf16.mxu0 0
    %1668 = vmatmul.mubr.bf16.gmra.mxu0 %v635
    %v1669 = vpop.f32.mrf.mxu0
    %v1670 = vadd.f32 %v1317, %v1669
    %v1671 = vpop.f32.mrf.mxu0
    %v1672 = vadd.f32 %v1319, %v1671
    %v1673 = vpop.f32.mrf.mxu0
    %v1674 = vadd.f32 %v1321, %v1673
    %v1675 = vpop.f32.mrf.mxu0
    %v1676 = vadd.f32 %v1323, %v1675
    %1677 = vdwg.mxu0
    %v1678 = vmul.f32 %v1360, 0.05103104
    %v1679 = vmul.f32 %v1364, 0.05103104
    %v1680 = vmul.f32 %v1370, 0.05103104
    %v1681 = vmul.f32 %v1374, 0.05103104
    %v1682 = vmul.f32 %v1380, 0.05103104
    %v1683 = vmul.f32 %v1384, 0.05103104
    %v1684 = vmul.f32 %v1390, 0.05103104
    %v1685 = vmul.f32 %v1394, 0.05103104
    %v1686 = vmul.f32 %v1400, 0.05103104
    %v1687 = vmul.f32 %v1404, 0.05103104
    %v1688 = vmul.f32 %v1410, 0.05103104
    %v1689 = vmul.f32 %v1414, 0.05103104
    %v1690 = vmul.f32 %v1420, 0.05103104
    %v1691 = vmul.f32 %v1424, 0.05103104
    %v1692 = vmul.f32 %v1430, 0.05103104
    %v1693 = vmul.f32 %v1434, 0.05103104
    %v1694 = vmul.f32 %v1440, 0.05103104
    %v1695 = vmul.f32 %v1444, 0.05103104
    %v1696 = vmul.f32 %v1450, 0.05103104
    %v1697 = vmul.f32 %v1454, 0.05103104
    %v1698 = vmul.f32 %v1460, 0.05103104
    %v1699 = vmul.f32 %v1464, 0.05103104
    %v1700 = vmul.f32 %v1470, 0.05103104
    %v1701 = vmul.f32 %v1474, 0.05103104
    %v1702 = vmul.f32 %v1480, 0.05103104
    %v1703 = vmul.f32 %v1484, 0.05103104
    %v1704 = vmul.f32 %v1490, 0.05103104
    %v1705 = vmul.f32 %v1494, 0.05103104
    %v1706 = vmul.f32 %v1500, 0.05103104
    %v1707 = vmul.f32 %v1504, 0.05103104
    %v1708 = vmul.f32 %v1510, 0.05103104
    %v1709 = vmul.f32 %v1514, 0.05103104
    %v1710 = vmul.f32 %v1520, 0.05103104
    %v1711 = vmul.f32 %v1524, 0.05103104
    %v1712 = vmul.f32 %v1530, 0.05103104
    %v1713 = vmul.f32 %v1534, 0.05103104
    %v1714 = vmul.f32 %v1540, 0.05103104
    %v1715 = vmul.f32 %v1544, 0.05103104
    %v1716 = vmul.f32 %v1550, 0.05103104
    %v1717 = vmul.f32 %v1554, 0.05103104
    %v1718 = vmul.f32 %v1560, 0.05103104
    %v1719 = vmul.f32 %v1564, 0.05103104
    %v1720 = vmul.f32 %v1570, 0.05103104
    %v1721 = vmul.f32 %v1574, 0.05103104
    %v1722 = vmul.f32 %v1580, 0.05103104
    %v1723 = vmul.f32 %v1584, 0.05103104
    %v1724 = vmul.f32 %v1590, 0.05103104
    %v1725 = vmul.f32 %v1594, 0.05103104
    %v1726 = vmul.f32 %v1600, 0.05103104
    %v1727 = vmul.f32 %v1604, 0.05103104
    %v1728 = vmul.f32 %v1610, 0.05103104
    %v1729 = vmul.f32 %v1614, 0.05103104
    %v1730 = vmul.f32 %v1620, 0.05103104
    %v1731 = vmul.f32 %v1624, 0.05103104
    %v1732 = vmul.f32 %v1630, 0.05103104
    %v1733 = vmul.f32 %v1634, 0.05103104
    %v1734 = vmul.f32 %v1640, 0.05103104
    %v1735 = vmul.f32 %v1644, 0.05103104
    %v1736 = vmul.f32 %v1650, 0.05103104
    %v1737 = vmul.f32 %v1654, 0.05103104
    %v1738 = vmul.f32 %v1660, 0.05103104
    %v1739 = vmul.f32 %v1664, 0.05103104
    %v1740 = vmul.f32 %v1670, 0.05103104
    %v1741 = vmul.f32 %v1674, 0.05103104
    %v1742 = vpack.c.bf16 %v1679, %v1678
    %v1743 = vpack.c.bf16 %v1681, %v1680
    %v1744 = vpack.c.bf16 %v1683, %v1682
    %v1745 = vpack.c.bf16 %v1685, %v1684
    %v1746 = vpack.c.bf16 %v1687, %v1686
    %v1747 = vpack.c.bf16 %v1689, %v1688
    %v1748 = vpack.c.bf16 %v1691, %v1690
    %v1749 = vpack.c.bf16 %v1693, %v1692
    %v1750 = vpack.c.bf16 %v1695, %v1694
    %v1751 = vpack.c.bf16 %v1697, %v1696
    %v1752 = vpack.c.bf16 %v1699, %v1698
    %v1753 = vpack.c.bf16 %v1701, %v1700
    %v1754 = vpack.c.bf16 %v1703, %v1702
    %v1755 = vpack.c.bf16 %v1705, %v1704
    %v1756 = vpack.c.bf16 %v1707, %v1706
    %v1757 = vpack.c.bf16 %v1709, %v1708
    %v1758 = vpack.c.bf16 %v1711, %v1710
    %v1759 = vpack.c.bf16 %v1713, %v1712
    %v1760 = vpack.c.bf16 %v1715, %v1714
    %v1761 = vpack.c.bf16 %v1717, %v1716
    %v1762 = vpack.c.bf16 %v1719, %v1718
    %v1763 = vpack.c.bf16 %v1721, %v1720
    %v1764 = vpack.c.bf16 %v1723, %v1722
    %v1765 = vpack.c.bf16 %v1725, %v1724
    %v1766 = vpack.c.bf16 %v1727, %v1726
    %v1767 = vpack.c.bf16 %v1729, %v1728
    %v1768 = vpack.c.bf16 %v1731, %v1730
    %v1769 = vpack.c.bf16 %v1733, %v1732
    %v1770 = vpack.c.bf16 %v1735, %v1734
    %v1771 = vpack.c.bf16 %v1737, %v1736
    %v1772 = vpack.c.bf16 %v1739, %v1738
    %v1773 = vpack.c.bf16 %v1741, %v1740
    %v1774 = vpack.c.bf16 %v1364, %v1360
    %v1775 = vpack.c.bf16 %v1374, %v1370
    %v1776 = vpack.c.bf16 %v1384, %v1380
    %v1777 = vpack.c.bf16 %v1394, %v1390
    %v1778 = vpack.c.bf16 %v1404, %v1400
    %v1779 = vpack.c.bf16 %v1414, %v1410
    %v1780 = vpack.c.bf16 %v1424, %v1420
    %v1781 = vpack.c.bf16 %v1434, %v1430
    %v1782 = vpack.c.bf16 %v1444, %v1440
    %v1783 = vpack.c.bf16 %v1454, %v1450
    %v1784 = vpack.c.bf16 %v1464, %v1460
    %v1785 = vpack.c.bf16 %v1474, %v1470
    %v1786 = vpack.c.bf16 %v1484, %v1480
    %v1787 = vpack.c.bf16 %v1494, %v1490
    %v1788 = vpack.c.bf16 %v1504, %v1500
    %v1789 = vpack.c.bf16 %v1514, %v1510
    %v1790 = vpack.c.bf16 %v1524, %v1520
    %v1791 = vpack.c.bf16 %v1534, %v1530
    %v1792 = vpack.c.bf16 %v1544, %v1540
    %v1793 = vpack.c.bf16 %v1554, %v1550
    %v1794 = vpack.c.bf16 %v1564, %v1560
    %v1795 = vpack.c.bf16 %v1574, %v1570
    %v1796 = vpack.c.bf16 %v1584, %v1580
    %v1797 = vpack.c.bf16 %v1594, %v1590
    %v1798 = vpack.c.bf16 %v1604, %v1600
    %v1799 = vpack.c.bf16 %v1614, %v1610
    %v1800 = vpack.c.bf16 %v1624, %v1620
    %v1801 = vpack.c.bf16 %v1634, %v1630
    %v1802 = vpack.c.bf16 %v1644, %v1640
    %v1803 = vpack.c.bf16 %v1654, %v1650
    %v1804 = vpack.c.bf16 %v1664, %v1660
    %v1805 = vpack.c.bf16 %v1674, %v1670
    %v1806 = vpack.c.bf16 %v1366, %v1362
    %v1807 = vpack.c.bf16 %v1376, %v1372
    %v1808 = vpack.c.bf16 %v1386, %v1382
    %v1809 = vpack.c.bf16 %v1396, %v1392
    %v1810 = vpack.c.bf16 %v1406, %v1402
    %v1811 = vpack.c.bf16 %v1416, %v1412
    %v1812 = vpack.c.bf16 %v1426, %v1422
    %v1813 = vpack.c.bf16 %v1436, %v1432
    %v1814 = vpack.c.bf16 %v1446, %v1442
    %v1815 = vpack.c.bf16 %v1456, %v1452
    %v1816 = vpack.c.bf16 %v1466, %v1462
    %v1817 = vpack.c.bf16 %v1476, %v1472
    %v1818 = vpack.c.bf16 %v1486, %v1482
    %v1819 = vpack.c.bf16 %v1496, %v1492
    %v1820 = vpack.c.bf16 %v1506, %v1502
    %v1821 = vpack.c.bf16 %v1516, %v1512
    %v1822 = vpack.c.bf16 %v1526, %v1522
    %v1823 = vpack.c.bf16 %v1536, %v1532
    %v1824 = vpack.c.bf16 %v1546, %v1542
    %v1825 = vpack.c.bf16 %v1556, %v1552
    %v1826 = vpack.c.bf16 %v1566, %v1562
    %v1827 = vpack.c.bf16 %v1576, %v1572
    %v1828 = vpack.c.bf16 %v1586, %v1582
    %v1829 = vpack.c.bf16 %v1596, %v1592
    %v1830 = vpack.c.bf16 %v1606, %v1602
    %v1831 = vpack.c.bf16 %v1616, %v1612
    %v1832 = vpack.c.bf16 %v1626, %v1622
    %v1833 = vpack.c.bf16 %v1636, %v1632
    %v1834 = vpack.c.bf16 %v1646, %v1642
    %v1835 = vpack.c.bf16 %v1656, %v1652
    %v1836 = vpack.c.bf16 %v1666, %v1662
    %v1837 = vpack.c.bf16 %v1676, %v1672
    %v1838 = vld [vmem:[%s3] sm:$0xff]
    %v1839 = vld [vmem:[%s3 + $0x8] sm:$0xff]
    %v1840 = vld [vmem:[%s3 + $0x10] sm:$0xff]
    %v1841 = vld [vmem:[%s3 + $0x18] sm:$0xff]
    %v1842 = vld [vmem:[%s3 + $0x20] sm:$0xff]
    %v1843 = vld [vmem:[%s3 + $0x28] sm:$0xff]
    %v1844 = vld [vmem:[%s3 + $0x30] sm:$0xff]
    %v1845 = vld [vmem:[%s3 + $0x38] sm:$0xff]
    %v1846 = vld [vmem:[%s3 + $0x40] sm:$0xff]
    %v1847 = vld [vmem:[%s3 + $0x48] sm:$0xff]
    %v1848 = vld [vmem:[%s3 + $0x50] sm:$0xff]
    %v1849 = vld [vmem:[%s3 + $0x58] sm:$0xff]
    %v1850 = vld [vmem:[%s3 + $0x60] sm:$0xff]
    %v1851 = vld [vmem:[%s3 + $0x68] sm:$0xff]
    %v1852 = vld [vmem:[%s3 + $0x70] sm:$0xff]
    %v1853 = vld [vmem:[%s3 + $0x78] sm:$0xff]
    %1862 = vrot.lane.b32.xlu0 %v1774, 64
    %v1863 = vpop.permute.xlu0 %1862
    %1864 = vrot.lane.b32.xlu0 %v1775, 64
    %v1865 = vpop.permute.xlu0 %1864
    %1866 = vrot.lane.b32.xlu0 %v1776, 64
    %v1867 = vpop.permute.xlu0 %1866
    %1868 = vrot.lane.b32.xlu0 %v1777, 64
    %v1869 = vpop.permute.xlu0 %1868
    %1870 = vrot.lane.b32.xlu0 %v1778, 64
    %v1871 = vpop.permute.xlu0 %1870
    %1872 = vrot.lane.b32.xlu0 %v1779, 64
    %v1873 = vpop.permute.xlu0 %1872
    %1874 = vrot.lane.b32.xlu0 %v1780, 64
    %v1875 = vpop.permute.xlu0 %1874
    %1876 = vrot.lane.b32.xlu0 %v1781, 64
    %v1877 = vpop.permute.xlu0 %1876
    %vm1878 = vcmask 523264
    %v1880 = vsel %vm1878, %v1742, 0
    %v1883 = vsel %vm1878, %v1743, 0
    %v1886 = vsel %vm1878, %v1744, 0
    %v1889 = vsel %vm1878, %v1745, 0
    %v1892 = vsel %vm1878, %v1746, 0
    %v1895 = vsel %vm1878, %v1747, 0
    %v1898 = vsel %vm1878, %v1748, 0
    %v1901 = vsel %vm1878, %v1749, 0
    %v1904 = vsel %vm1878, %v1863, 0
    %v1907 = vsel %vm1878, %v1865, 0
    %v1910 = vsel %vm1878, %v1867, 0
    %v1913 = vsel %vm1878, %v1869, 0
    %v1916 = vsel %vm1878, %v1871, 0
    %v1919 = vsel %vm1878, %v1873, 0
    %v1922 = vsel %vm1878, %v1875, 0
    %v1925 = vsel %vm1878, %v1877, 0
    %1927 = vmatprep.subr.bf16.mxu0 0
    %1928 = vmatpush1.bf16.xpose.msra.mxu0 %v1925
    %1929 = vmatprep.subr.bf16.mxu0 0
    %1930 = vmatpush1.bf16.xpose.msra.mxu0 %v1922
    %1931 = vmatprep.subr.bf16.mxu0 0
    %1932 = vmatpush1.bf16.xpose.msra.mxu0 %v1919
    %1933 = vmatprep.subr.bf16.mxu0 0
    %1934 = vmatpush1.bf16.xpose.msra.mxu0 %v1916
    %1935 = vmatprep.subr.bf16.mxu0 0
    %1936 = vmatpush1.bf16.xpose.msra.mxu0 %v1913
    %1937 = vmatprep.subr.bf16.mxu0 0
    %1938 = vmatpush1.bf16.xpose.msra.mxu0 %v1910
    %1939 = vmatprep.subr.bf16.mxu0 0
    %1940 = vmatpush1.bf16.xpose.msra.mxu0 %v1907
    %1941 = vmatprep.subr.bf16.mxu0 0
    %1942 = vmatpush1.bf16.xpose.msra.mxu0 %v1904
    %1943 = vmatprep.subr.bf16.mxu0 0
    %1944 = vmatpush2.bf16.xpose.msra.mxu0 0
    %1945 = vmatprep.subr.bf16.mxu0 0
    %1946 = vmatpush2.bf16.xpose.msra.mxu0 0
    %1947 = vmatprep.subr.bf16.mxu0 0
    %1948 = vmatpush2.bf16.xpose.msra.mxu0 0
    %1949 = vmatprep.subr.bf16.mxu0 0
    %1950 = vmatpush2.bf16.xpose.msra.mxu0 0
    %1951 = vmatprep.subr.bf16.mxu0 0
    %1952 = vmatpush2.bf16.xpose.msra.mxu0 0
    %1953 = vmatprep.subr.bf16.mxu0 0
    %1954 = vmatpush2.bf16.xpose.msra.mxu0 0
    %1955 = vmatprep.subr.bf16.mxu0 0
    %1956 = vmatpush2.bf16.xpose.msra.mxu0 0
    %1957 = vmatprep.subr.bf16.mxu0 0
    %1958 = vmatpush2.bf16.xpose.msra.mxu0 0
    %1959 = vmatprep.mubr.bf16.mxu0 0
    %1960 = vmatmul.mubr.bf16.gmra.mxu0 %v1880
    %v1961 = vpop.f32.mrf.mxu0
    %v1962 = vadd.f32 %v1838, %v1961
    %v1963 = vpop.f32.mrf.mxu0
    %v1964 = vpop.f32.mrf.mxu0
    %v1965 = vadd.f32 %v1839, %v1964
    %v1966 = vpop.f32.mrf.mxu0
    %1967 = vmatprep.mubr.bf16.mxu0 0
    %1968 = vmatmul.mubr.bf16.gmra.mxu0 %v1883
    %v1969 = vpop.f32.mrf.mxu0
    %v1970 = vadd.f32 %v1840, %v1969
    %v1971 = vpop.f32.mrf.mxu0
    %v1972 = vpop.f32.mrf.mxu0
    %v1973 = vadd.f32 %v1841, %v1972
    %v1974 = vpop.f32.mrf.mxu0
    %1975 = vmatprep.mubr.bf16.mxu0 0
    %1976 = vmatmul.mubr.bf16.gmra.mxu0 %v1886
    %v1977 = vpop.f32.mrf.mxu0
    %v1978 = vadd.f32 %v1842, %v1977
    %v1979 = vpop.f32.mrf.mxu0
    %v1980 = vpop.f32.mrf.mxu0
    %v1981 = vadd.f32 %v1843, %v1980
    %v1982 = vpop.f32.mrf.mxu0
    %1983 = vmatprep.mubr.bf16.mxu0 0
    %1984 = vmatmul.mubr.bf16.gmra.mxu0 %v1889
    %v1985 = vpop.f32.mrf.mxu0
    %v1986 = vadd.f32 %v1844, %v1985
    %v1987 = vpop.f32.mrf.mxu0
    %v1988 = vpop.f32.mrf.mxu0
    %v1989 = vadd.f32 %v1845, %v1988
    %v1990 = vpop.f32.mrf.mxu0
    %1991 = vmatprep.mubr.bf16.mxu0 0
    %1992 = vmatmul.mubr.bf16.gmra.mxu0 %v1892
    %v1993 = vpop.f32.mrf.mxu0
    %v1994 = vadd.f32 %v1846, %v1993
    %v1995 = vpop.f32.mrf.mxu0
    %v1996 = vpop.f32.mrf.mxu0
    %v1997 = vadd.f32 %v1847, %v1996
    %v1998 = vpop.f32.mrf.mxu0
    %1999 = vmatprep.mubr.bf16.mxu0 0
    %2000 = vmatmul.mubr.bf16.gmra.mxu0 %v1895
    %v2001 = vpop.f32.mrf.mxu0
    %v2002 = vadd.f32 %v1848, %v2001
    %v2003 = vpop.f32.mrf.mxu0
    %v2004 = vpop.f32.mrf.mxu0
    %v2005 = vadd.f32 %v1849, %v2004
    %v2006 = vpop.f32.mrf.mxu0
    %2007 = vmatprep.mubr.bf16.mxu0 0
    %2008 = vmatmul.mubr.bf16.gmra.mxu0 %v1898
    %v2009 = vpop.f32.mrf.mxu0
    %v2010 = vadd.f32 %v1850, %v2009
    %v2011 = vpop.f32.mrf.mxu0
    %v2012 = vpop.f32.mrf.mxu0
    %v2013 = vadd.f32 %v1851, %v2012
    %v2014 = vpop.f32.mrf.mxu0
    %2015 = vmatprep.mubr.bf16.mxu0 0
    %2016 = vmatmul.mubr.bf16.gmra.mxu0 %v1901
    %v2017 = vpop.f32.mrf.mxu0
    %v2018 = vadd.f32 %v1852, %v2017
    %v2019 = vpop.f32.mrf.mxu0
    %v2020 = vpop.f32.mrf.mxu0
    %v2021 = vadd.f32 %v1853, %v2020
    %v2022 = vpop.f32.mrf.mxu0
    %2023 = vdwg.mxu0
    %2032 = vrot.lane.b32.xlu0 %v1782, 64
    %v2033 = vpop.permute.xlu0 %2032
    %2034 = vrot.lane.b32.xlu0 %v1783, 64
    %v2035 = vpop.permute.xlu0 %2034
    %2036 = vrot.lane.b32.xlu0 %v1784, 64
    %v2037 = vpop.permute.xlu0 %2036
    %2038 = vrot.lane.b32.xlu0 %v1785, 64
    %v2039 = vpop.permute.xlu0 %2038
    %2040 = vrot.lane.b32.xlu0 %v1786, 64
    %v2041 = vpop.permute.xlu0 %2040
    %2042 = vrot.lane.b32.xlu0 %v1787, 64
    %v2043 = vpop.permute.xlu0 %2042
    %2044 = vrot.lane.b32.xlu0 %v1788, 64
    %v2045 = vpop.permute.xlu0 %2044
    %2046 = vrot.lane.b32.xlu0 %v1789, 64
    %v2047 = vpop.permute.xlu0 %2046
    %v2049 = vsel %vm1878, %v1750, 0
    %v2052 = vsel %vm1878, %v1751, 0
    %v2055 = vsel %vm1878, %v1752, 0
    %v2058 = vsel %vm1878, %v1753, 0
    %v2061 = vsel %vm1878, %v1754, 0
    %v2064 = vsel %vm1878, %v1755, 0
    %v2067 = vsel %vm1878, %v1756, 0
    %v2070 = vsel %vm1878, %v1757, 0
    %v2073 = vsel %vm1878, %v2033, 0
    %v2076 = vsel %vm1878, %v2035, 0
    %v2079 = vsel %vm1878, %v2037, 0
    %v2082 = vsel %vm1878, %v2039, 0
    %v2085 = vsel %vm1878, %v2041, 0
    %v2088 = vsel %vm1878, %v2043, 0
    %v2091 = vsel %vm1878, %v2045, 0
    %v2094 = vsel %vm1878, %v2047, 0
    %2096 = vmatprep.subr.bf16.mxu0 0
    %2097 = vmatpush1.bf16.xpose.msra.mxu0 %v2094
    %2098 = vmatprep.subr.bf16.mxu0 0
    %2099 = vmatpush1.bf16.xpose.msra.mxu0 %v2091
    %2100 = vmatprep.subr.bf16.mxu0 0
    %2101 = vmatpush1.bf16.xpose.msra.mxu0 %v2088
    %2102 = vmatprep.subr.bf16.mxu0 0
    %2103 = vmatpush1.bf16.xpose.msra.mxu0 %v2085
    %2104 = vmatprep.subr.bf16.mxu0 0
    %2105 = vmatpush1.bf16.xpose.msra.mxu0 %v2082
    %2106 = vmatprep.subr.bf16.mxu0 0
    %2107 = vmatpush1.bf16.xpose.msra.mxu0 %v2079
    %2108 = vmatprep.subr.bf16.mxu0 0
    %2109 = vmatpush1.bf16.xpose.msra.mxu0 %v2076
    %2110 = vmatprep.subr.bf16.mxu0 0
    %2111 = vmatpush1.bf16.xpose.msra.mxu0 %v2073
    %2112 = vmatprep.subr.bf16.mxu0 0
    %2113 = vmatpush2.bf16.xpose.msra.mxu0 0
    %2114 = vmatprep.subr.bf16.mxu0 0
    %2115 = vmatpush2.bf16.xpose.msra.mxu0 0
    %2116 = vmatprep.subr.bf16.mxu0 0
    %2117 = vmatpush2.bf16.xpose.msra.mxu0 0
    %2118 = vmatprep.subr.bf16.mxu0 0
    %2119 = vmatpush2.bf16.xpose.msra.mxu0 0
    %2120 = vmatprep.subr.bf16.mxu0 0
    %2121 = vmatpush2.bf16.xpose.msra.mxu0 0
    %2122 = vmatprep.subr.bf16.mxu0 0
    %2123 = vmatpush2.bf16.xpose.msra.mxu0 0
    %2124 = vmatprep.subr.bf16.mxu0 0
    %2125 = vmatpush2.bf16.xpose.msra.mxu0 0
    %2126 = vmatprep.subr.bf16.mxu0 0
    %2127 = vmatpush2.bf16.xpose.msra.mxu0 0
    %2128 = vmatprep.mubr.bf16.mxu0 0
    %2129 = vmatmul.mubr.bf16.gmra.mxu0 %v2049
    %v2130 = vpop.f32.mrf.mxu0
    %v2131 = vadd.f32 %v1838, %v2130
    %v2132 = vpop.f32.mrf.mxu0
    %v2133 = vpop.f32.mrf.mxu0
    %v2134 = vadd.f32 %v1839, %v2133
    %v2135 = vpop.f32.mrf.mxu0
    %2136 = vmatprep.mubr.bf16.mxu0 0
    %2137 = vmatmul.mubr.bf16.gmra.mxu0 %v2052
    %v2138 = vpop.f32.mrf.mxu0
    %v2139 = vadd.f32 %v1840, %v2138
    %v2140 = vpop.f32.mrf.mxu0
    %v2141 = vpop.f32.mrf.mxu0
    %v2142 = vadd.f32 %v1841, %v2141
    %v2143 = vpop.f32.mrf.mxu0
    %2144 = vmatprep.mubr.bf16.mxu0 0
    %2145 = vmatmul.mubr.bf16.gmra.mxu0 %v2055
    %v2146 = vpop.f32.mrf.mxu0
    %v2147 = vadd.f32 %v1842, %v2146
    %v2148 = vpop.f32.mrf.mxu0
    %v2149 = vpop.f32.mrf.mxu0
    %v2150 = vadd.f32 %v1843, %v2149
    %v2151 = vpop.f32.mrf.mxu0
    %2152 = vmatprep.mubr.bf16.mxu0 0
    %2153 = vmatmul.mubr.bf16.gmra.mxu0 %v2058
    %v2154 = vpop.f32.mrf.mxu0
    %v2155 = vadd.f32 %v1844, %v2154
    %v2156 = vpop.f32.mrf.mxu0
    %v2157 = vpop.f32.mrf.mxu0
    %v2158 = vadd.f32 %v1845, %v2157
    %v2159 = vpop.f32.mrf.mxu0
    %2160 = vmatprep.mubr.bf16.mxu0 0
    %2161 = vmatmul.mubr.bf16.gmra.mxu0 %v2061
    %v2162 = vpop.f32.mrf.mxu0
    %v2163 = vadd.f32 %v1846, %v2162
    %v2164 = vpop.f32.mrf.mxu0
    %v2165 = vpop.f32.mrf.mxu0
    %v2166 = vadd.f32 %v1847, %v2165
    %v2167 = vpop.f32.mrf.mxu0
    %2168 = vmatprep.mubr.bf16.mxu0 0
    %2169 = vmatmul.mubr.bf16.gmra.mxu0 %v2064
    %v2170 = vpop.f32.mrf.mxu0
    %v2171 = vadd.f32 %v1848, %v2170
    %v2172 = vpop.f32.mrf.mxu0
    %v2173 = vpop.f32.mrf.mxu0
    %v2174 = vadd.f32 %v1849, %v2173
    %v2175 = vpop.f32.mrf.mxu0
    %2176 = vmatprep.mubr.bf16.mxu0 0
    %2177 = vmatmul.mubr.bf16.gmra.mxu0 %v2067
    %v2178 = vpop.f32.mrf.mxu0
    %v2179 = vadd.f32 %v1850, %v2178
    %v2180 = vpop.f32.mrf.mxu0
    %v2181 = vpop.f32.mrf.mxu0
    %v2182 = vadd.f32 %v1851, %v2181
    %v2183 = vpop.f32.mrf.mxu0
    %2184 = vmatprep.mubr.bf16.mxu0 0
    %2185 = vmatmul.mubr.bf16.gmra.mxu0 %v2070
    %v2186 = vpop.f32.mrf.mxu0
    %v2187 = vadd.f32 %v1852, %v2186
    %v2188 = vpop.f32.mrf.mxu0
    %v2189 = vpop.f32.mrf.mxu0
    %v2190 = vadd.f32 %v1853, %v2189
    %v2191 = vpop.f32.mrf.mxu0
    %2192 = vdwg.mxu0
    %2201 = vrot.lane.b32.xlu0 %v1790, 64
    %v2202 = vpop.permute.xlu0 %2201
    %2203 = vrot.lane.b32.xlu0 %v1791, 64
    %v2204 = vpop.permute.xlu0 %2203
    %2205 = vrot.lane.b32.xlu0 %v1792, 64
    %v2206 = vpop.permute.xlu0 %2205
    %2207 = vrot.lane.b32.xlu0 %v1793, 64
    %v2208 = vpop.permute.xlu0 %2207
    %2209 = vrot.lane.b32.xlu0 %v1794, 64
    %v2210 = vpop.permute.xlu0 %2209
    %2211 = vrot.lane.b32.xlu0 %v1795, 64
    %v2212 = vpop.permute.xlu0 %2211
    %2213 = vrot.lane.b32.xlu0 %v1796, 64
    %v2214 = vpop.permute.xlu0 %2213
    %2215 = vrot.lane.b32.xlu0 %v1797, 64
    %v2216 = vpop.permute.xlu0 %2215
    %v2218 = vsel %vm1878, %v1758, 0
    %v2221 = vsel %vm1878, %v1759, 0
    %v2224 = vsel %vm1878, %v1760, 0
    %v2227 = vsel %vm1878, %v1761, 0
    %v2230 = vsel %vm1878, %v1762, 0
    %v2233 = vsel %vm1878, %v1763, 0
    %v2236 = vsel %vm1878, %v1764, 0
    %v2239 = vsel %vm1878, %v1765, 0
    %v2242 = vsel %vm1878, %v2202, 0
    %v2245 = vsel %vm1878, %v2204, 0
    %v2248 = vsel %vm1878, %v2206, 0
    %v2251 = vsel %vm1878, %v2208, 0
    %v2254 = vsel %vm1878, %v2210, 0
    %v2257 = vsel %vm1878, %v2212, 0
    %v2260 = vsel %vm1878, %v2214, 0
    %v2263 = vsel %vm1878, %v2216, 0
    %2265 = vmatprep.subr.bf16.mxu0 0
    %2266 = vmatpush1.bf16.xpose.msra.mxu0 %v2263
    %2267 = vmatprep.subr.bf16.mxu0 0
    %2268 = vmatpush1.bf16.xpose.msra.mxu0 %v2260
    %2269 = vmatprep.subr.bf16.mxu0 0
    %2270 = vmatpush1.bf16.xpose.msra.mxu0 %v2257
    %2271 = vmatprep.subr.bf16.mxu0 0
    %2272 = vmatpush1.bf16.xpose.msra.mxu0 %v2254
    %2273 = vmatprep.subr.bf16.mxu0 0
    %2274 = vmatpush1.bf16.xpose.msra.mxu0 %v2251
    %2275 = vmatprep.subr.bf16.mxu0 0
    %2276 = vmatpush1.bf16.xpose.msra.mxu0 %v2248
    %2277 = vmatprep.subr.bf16.mxu0 0
    %2278 = vmatpush1.bf16.xpose.msra.mxu0 %v2245
    %2279 = vmatprep.subr.bf16.mxu0 0
    %2280 = vmatpush1.bf16.xpose.msra.mxu0 %v2242
    %2281 = vmatprep.subr.bf16.mxu0 0
    %2282 = vmatpush2.bf16.xpose.msra.mxu0 0
    %2283 = vmatprep.subr.bf16.mxu0 0
    %2284 = vmatpush2.bf16.xpose.msra.mxu0 0
    %2285 = vmatprep.subr.bf16.mxu0 0
    %2286 = vmatpush2.bf16.xpose.msra.mxu0 0
    %2287 = vmatprep.subr.bf16.mxu0 0
    %2288 = vmatpush2.bf16.xpose.msra.mxu0 0
    %2289 = vmatprep.subr.bf16.mxu0 0
    %2290 = vmatpush2.bf16.xpose.msra.mxu0 0
    %2291 = vmatprep.subr.bf16.mxu0 0
    %2292 = vmatpush2.bf16.xpose.msra.mxu0 0
    %2293 = vmatprep.subr.bf16.mxu0 0
    %2294 = vmatpush2.bf16.xpose.msra.mxu0 0
    %2295 = vmatprep.subr.bf16.mxu0 0
    %2296 = vmatpush2.bf16.xpose.msra.mxu0 0
    %2297 = vmatprep.mubr.bf16.mxu0 0
    %2298 = vmatmul.mubr.bf16.gmra.mxu0 %v2218
    %v2299 = vpop.f32.mrf.mxu0
    %v2300 = vadd.f32 %v1838, %v2299
    %v2301 = vpop.f32.mrf.mxu0
    %v2302 = vpop.f32.mrf.mxu0
    %v2303 = vadd.f32 %v1839, %v2302
    %v2304 = vpop.f32.mrf.mxu0
    %2305 = vmatprep.mubr.bf16.mxu0 0
    %2306 = vmatmul.mubr.bf16.gmra.mxu0 %v2221
    %v2307 = vpop.f32.mrf.mxu0
    %v2308 = vadd.f32 %v1840, %v2307
    %v2309 = vpop.f32.mrf.mxu0
    %v2310 = vpop.f32.mrf.mxu0
    %v2311 = vadd.f32 %v1841, %v2310
    %v2312 = vpop.f32.mrf.mxu0
    %2313 = vmatprep.mubr.bf16.mxu0 0
    %2314 = vmatmul.mubr.bf16.gmra.mxu0 %v2224
    %v2315 = vpop.f32.mrf.mxu0
    %v2316 = vadd.f32 %v1842, %v2315
    %v2317 = vpop.f32.mrf.mxu0
    %v2318 = vpop.f32.mrf.mxu0
    %v2319 = vadd.f32 %v1843, %v2318
    %v2320 = vpop.f32.mrf.mxu0
    %2321 = vmatprep.mubr.bf16.mxu0 0
    %2322 = vmatmul.mubr.bf16.gmra.mxu0 %v2227
    %v2323 = vpop.f32.mrf.mxu0
    %v2324 = vadd.f32 %v1844, %v2323
    %v2325 = vpop.f32.mrf.mxu0
    %v2326 = vpop.f32.mrf.mxu0
    %v2327 = vadd.f32 %v1845, %v2326
    %v2328 = vpop.f32.mrf.mxu0
    %2329 = vmatprep.mubr.bf16.mxu0 0
    %2330 = vmatmul.mubr.bf16.gmra.mxu0 %v2230
    %v2331 = vpop.f32.mrf.mxu0
    %v2332 = vadd.f32 %v1846, %v2331
    %v2333 = vpop.f32.mrf.mxu0
    %v2334 = vpop.f32.mrf.mxu0
    %v2335 = vadd.f32 %v1847, %v2334
    %v2336 = vpop.f32.mrf.mxu0
    %2337 = vmatprep.mubr.bf16.mxu0 0
    %2338 = vmatmul.mubr.bf16.gmra.mxu0 %v2233
    %v2339 = vpop.f32.mrf.mxu0
    %v2340 = vadd.f32 %v1848, %v2339
    %v2341 = vpop.f32.mrf.mxu0
    %v2342 = vpop.f32.mrf.mxu0
    %v2343 = vadd.f32 %v1849, %v2342
    %v2344 = vpop.f32.mrf.mxu0
    %2345 = vmatprep.mubr.bf16.mxu0 0
    %2346 = vmatmul.mubr.bf16.gmra.mxu0 %v2236
    %v2347 = vpop.f32.mrf.mxu0
    %v2348 = vadd.f32 %v1850, %v2347
    %v2349 = vpop.f32.mrf.mxu0
    %v2350 = vpop.f32.mrf.mxu0
    %v2351 = vadd.f32 %v1851, %v2350
    %v2352 = vpop.f32.mrf.mxu0
    %2353 = vmatprep.mubr.bf16.mxu0 0
    %2354 = vmatmul.mubr.bf16.gmra.mxu0 %v2239
    %v2355 = vpop.f32.mrf.mxu0
    %v2356 = vadd.f32 %v1852, %v2355
    %v2357 = vpop.f32.mrf.mxu0
    %v2358 = vpop.f32.mrf.mxu0
    %v2359 = vadd.f32 %v1853, %v2358
    %v2360 = vpop.f32.mrf.mxu0
    %2361 = vdwg.mxu0
    %2370 = vrot.lane.b32.xlu0 %v1798, 64
    %v2371 = vpop.permute.xlu0 %2370
    %2372 = vrot.lane.b32.xlu0 %v1799, 64
    %v2373 = vpop.permute.xlu0 %2372
    %2374 = vrot.lane.b32.xlu0 %v1800, 64
    %v2375 = vpop.permute.xlu0 %2374
    %2376 = vrot.lane.b32.xlu0 %v1801, 64
    %v2377 = vpop.permute.xlu0 %2376
    %2378 = vrot.lane.b32.xlu0 %v1802, 64
    %v2379 = vpop.permute.xlu0 %2378
    %2380 = vrot.lane.b32.xlu0 %v1803, 64
    %v2381 = vpop.permute.xlu0 %2380
    %2382 = vrot.lane.b32.xlu0 %v1804, 64
    %v2383 = vpop.permute.xlu0 %2382
    %2384 = vrot.lane.b32.xlu0 %v1805, 64
    %v2385 = vpop.permute.xlu0 %2384
    %v2387 = vsel %vm1878, %v1766, 0
    %v2390 = vsel %vm1878, %v1767, 0
    %v2393 = vsel %vm1878, %v1768, 0
    %v2396 = vsel %vm1878, %v1769, 0
    %v2399 = vsel %vm1878, %v1770, 0
    %v2402 = vsel %vm1878, %v1771, 0
    %v2405 = vsel %vm1878, %v1772, 0
    %v2408 = vsel %vm1878, %v1773, 0
    %v2411 = vsel %vm1878, %v2371, 0
    %v2414 = vsel %vm1878, %v2373, 0
    %v2417 = vsel %vm1878, %v2375, 0
    %v2420 = vsel %vm1878, %v2377, 0
    %v2423 = vsel %vm1878, %v2379, 0
    %v2426 = vsel %vm1878, %v2381, 0
    %v2429 = vsel %vm1878, %v2383, 0
    %v2432 = vsel %vm1878, %v2385, 0
    %2434 = vmatprep.subr.bf16.mxu0 0
    %2435 = vmatpush1.bf16.xpose.msra.mxu0 %v2432
    %2436 = vmatprep.subr.bf16.mxu0 0
    %2437 = vmatpush1.bf16.xpose.msra.mxu0 %v2429
    %2438 = vmatprep.subr.bf16.mxu0 0
    %2439 = vmatpush1.bf16.xpose.msra.mxu0 %v2426
    %2440 = vmatprep.subr.bf16.mxu0 0
    %2441 = vmatpush1.bf16.xpose.msra.mxu0 %v2423
    %2442 = vmatprep.subr.bf16.mxu0 0
    %2443 = vmatpush1.bf16.xpose.msra.mxu0 %v2420
    %2444 = vmatprep.subr.bf16.mxu0 0
    %2445 = vmatpush1.bf16.xpose.msra.mxu0 %v2417
    %2446 = vmatprep.subr.bf16.mxu0 0
    %2447 = vmatpush1.bf16.xpose.msra.mxu0 %v2414
    %2448 = vmatprep.subr.bf16.mxu0 0
    %2449 = vmatpush1.bf16.xpose.msra.mxu0 %v2411
    %2450 = vmatprep.subr.bf16.mxu0 0
    %2451 = vmatpush2.bf16.xpose.msra.mxu0 0
    %2452 = vmatprep.subr.bf16.mxu0 0
    %2453 = vmatpush2.bf16.xpose.msra.mxu0 0
    %2454 = vmatprep.subr.bf16.mxu0 0
    %2455 = vmatpush2.bf16.xpose.msra.mxu0 0
    %2456 = vmatprep.subr.bf16.mxu0 0
    %2457 = vmatpush2.bf16.xpose.msra.mxu0 0
    %2458 = vmatprep.subr.bf16.mxu0 0
    %2459 = vmatpush2.bf16.xpose.msra.mxu0 0
    %2460 = vmatprep.subr.bf16.mxu0 0
    %2461 = vmatpush2.bf16.xpose.msra.mxu0 0
    %2462 = vmatprep.subr.bf16.mxu0 0
    %2463 = vmatpush2.bf16.xpose.msra.mxu0 0
    %2464 = vmatprep.subr.bf16.mxu0 0
    %2465 = vmatpush2.bf16.xpose.msra.mxu0 0
    %2466 = vmatprep.mubr.bf16.mxu0 0
    %2467 = vmatmul.mubr.bf16.gmra.mxu0 %v2387
    %v2468 = vpop.f32.mrf.mxu0
    %v2469 = vadd.f32 %v1838, %v2468
    %v2470 = vpop.f32.mrf.mxu0
    %v2471 = vpop.f32.mrf.mxu0
    %v2472 = vadd.f32 %v1839, %v2471
    %v2473 = vpop.f32.mrf.mxu0
    %2474 = vmatprep.mubr.bf16.mxu0 0
    %2475 = vmatmul.mubr.bf16.gmra.mxu0 %v2390
    %v2476 = vpop.f32.mrf.mxu0
    %v2477 = vadd.f32 %v1840, %v2476
    %v2478 = vpop.f32.mrf.mxu0
    %v2479 = vpop.f32.mrf.mxu0
    %v2480 = vadd.f32 %v1841, %v2479
    %v2481 = vpop.f32.mrf.mxu0
    %2482 = vmatprep.mubr.bf16.mxu0 0
    %2483 = vmatmul.mubr.bf16.gmra.mxu0 %v2393
    %v2484 = vpop.f32.mrf.mxu0
    %v2485 = vadd.f32 %v1842, %v2484
    %v2486 = vpop.f32.mrf.mxu0
    %v2487 = vpop.f32.mrf.mxu0
    %v2488 = vadd.f32 %v1843, %v2487
    %v2489 = vpop.f32.mrf.mxu0
    %2490 = vmatprep.mubr.bf16.mxu0 0
    %2491 = vmatmul.mubr.bf16.gmra.mxu0 %v2396
    %v2492 = vpop.f32.mrf.mxu0
    %v2493 = vadd.f32 %v1844, %v2492
    %v2494 = vpop.f32.mrf.mxu0
    %v2495 = vpop.f32.mrf.mxu0
    %v2496 = vadd.f32 %v1845, %v2495
    %v2497 = vpop.f32.mrf.mxu0
    %2498 = vmatprep.mubr.bf16.mxu0 0
    %2499 = vmatmul.mubr.bf16.gmra.mxu0 %v2399
    %v2500 = vpop.f32.mrf.mxu0
    %v2501 = vadd.f32 %v1846, %v2500
    %v2502 = vpop.f32.mrf.mxu0
    %v2503 = vpop.f32.mrf.mxu0
    %v2504 = vadd.f32 %v1847, %v2503
    %v2505 = vpop.f32.mrf.mxu0
    %2506 = vmatprep.mubr.bf16.mxu0 0
    %2507 = vmatmul.mubr.bf16.gmra.mxu0 %v2402
    %v2508 = vpop.f32.mrf.mxu0
    %v2509 = vadd.f32 %v1848, %v2508
    %v2510 = vpop.f32.mrf.mxu0
    %v2511 = vpop.f32.mrf.mxu0
    %v2512 = vadd.f32 %v1849, %v2511
    %v2513 = vpop.f32.mrf.mxu0
    %2514 = vmatprep.mubr.bf16.mxu0 0
    %2515 = vmatmul.mubr.bf16.gmra.mxu0 %v2405
    %v2516 = vpop.f32.mrf.mxu0
    %v2517 = vadd.f32 %v1850, %v2516
    %v2518 = vpop.f32.mrf.mxu0
    %v2519 = vpop.f32.mrf.mxu0
    %v2520 = vadd.f32 %v1851, %v2519
    %v2521 = vpop.f32.mrf.mxu0
    %2522 = vmatprep.mubr.bf16.mxu0 0
    %2523 = vmatmul.mubr.bf16.gmra.mxu0 %v2408
    %v2524 = vpop.f32.mrf.mxu0
    %v2525 = vadd.f32 %v1852, %v2524
    %v2526 = vpop.f32.mrf.mxu0
    %v2527 = vpop.f32.mrf.mxu0
    %v2528 = vadd.f32 %v1853, %v2527
    %v2529 = vpop.f32.mrf.mxu0
    %2530 = vdwg.mxu0
    %2531 = vmax.xlane.f32.xlu0 %v1962
    %v2532 = vpop.xlane.xlu0 %2531
    %2533 = vmax.xlane.f32.xlu0 %v1965
    %v2534 = vpop.xlane.xlu0 %2533
    %2535 = vmax.xlane.f32.xlu0 %v1970
    %v2536 = vpop.xlane.xlu0 %2535
    %2537 = vmax.xlane.f32.xlu0 %v1973
    %v2538 = vpop.xlane.xlu0 %2537
    %2539 = vmax.xlane.f32.xlu0 %v1978
    %v2540 = vpop.xlane.xlu0 %2539
    %2541 = vmax.xlane.f32.xlu0 %v1981
    %v2542 = vpop.xlane.xlu0 %2541
    %2543 = vmax.xlane.f32.xlu0 %v1986
    %v2544 = vpop.xlane.xlu0 %2543
    %2545 = vmax.xlane.f32.xlu0 %v1989
    %v2546 = vpop.xlane.xlu0 %2545
    %2547 = vmax.xlane.f32.xlu0 %v1994
    %v2548 = vpop.xlane.xlu0 %2547
    %2549 = vmax.xlane.f32.xlu0 %v1997
    %v2550 = vpop.xlane.xlu0 %2549
    %2551 = vmax.xlane.f32.xlu0 %v2002
    %v2552 = vpop.xlane.xlu0 %2551
    %2553 = vmax.xlane.f32.xlu0 %v2005
    %v2554 = vpop.xlane.xlu0 %2553
    %2555 = vmax.xlane.f32.xlu0 %v2010
    %v2556 = vpop.xlane.xlu0 %2555
    %2557 = vmax.xlane.f32.xlu0 %v2013
    %v2558 = vpop.xlane.xlu0 %2557
    %2559 = vmax.xlane.f32.xlu0 %v2018
    %v2560 = vpop.xlane.xlu0 %2559
    %2561 = vmax.xlane.f32.xlu0 %v2021
    %v2562 = vpop.xlane.xlu0 %2561
    %2563 = vmax.xlane.f32.xlu0 %v2131
    %v2564 = vpop.xlane.xlu0 %2563
    %2565 = vmax.xlane.f32.xlu0 %v2134
    %v2566 = vpop.xlane.xlu0 %2565
    %2567 = vmax.xlane.f32.xlu0 %v2139
    %v2568 = vpop.xlane.xlu0 %2567
    %2569 = vmax.xlane.f32.xlu0 %v2142
    %v2570 = vpop.xlane.xlu0 %2569
    %2571 = vmax.xlane.f32.xlu0 %v2147
    %v2572 = vpop.xlane.xlu0 %2571
    %2573 = vmax.xlane.f32.xlu0 %v2150
    %v2574 = vpop.xlane.xlu0 %2573
    %2575 = vmax.xlane.f32.xlu0 %v2155
    %v2576 = vpop.xlane.xlu0 %2575
    %2577 = vmax.xlane.f32.xlu0 %v2158
    %v2578 = vpop.xlane.xlu0 %2577
    %2579 = vmax.xlane.f32.xlu0 %v2163
    %v2580 = vpop.xlane.xlu0 %2579
    %2581 = vmax.xlane.f32.xlu0 %v2166
    %v2582 = vpop.xlane.xlu0 %2581
    %2583 = vmax.xlane.f32.xlu0 %v2171
    %v2584 = vpop.xlane.xlu0 %2583
    %2585 = vmax.xlane.f32.xlu0 %v2174
    %v2586 = vpop.xlane.xlu0 %2585
    %2587 = vmax.xlane.f32.xlu0 %v2179
    %v2588 = vpop.xlane.xlu0 %2587
    %2589 = vmax.xlane.f32.xlu0 %v2182
    %v2590 = vpop.xlane.xlu0 %2589
    %2591 = vmax.xlane.f32.xlu0 %v2187
    %v2592 = vpop.xlane.xlu0 %2591
    %2593 = vmax.xlane.f32.xlu0 %v2190
    %v2594 = vpop.xlane.xlu0 %2593
    %2595 = vmax.xlane.f32.xlu0 %v2300
    %v2596 = vpop.xlane.xlu0 %2595
    %2597 = vmax.xlane.f32.xlu0 %v2303
    %v2598 = vpop.xlane.xlu0 %2597
    %2599 = vmax.xlane.f32.xlu0 %v2308
    %v2600 = vpop.xlane.xlu0 %2599
    %2601 = vmax.xlane.f32.xlu0 %v2311
    %v2602 = vpop.xlane.xlu0 %2601
    %2603 = vmax.xlane.f32.xlu0 %v2316
    %v2604 = vpop.xlane.xlu0 %2603
    %2605 = vmax.xlane.f32.xlu0 %v2319
    %v2606 = vpop.xlane.xlu0 %2605
    %2607 = vmax.xlane.f32.xlu0 %v2324
    %v2608 = vpop.xlane.xlu0 %2607
    %2609 = vmax.xlane.f32.xlu0 %v2327
    %v2610 = vpop.xlane.xlu0 %2609
    %2611 = vmax.xlane.f32.xlu0 %v2332
    %v2612 = vpop.xlane.xlu0 %2611
    %2613 = vmax.xlane.f32.xlu0 %v2335
    %v2614 = vpop.xlane.xlu0 %2613
    %2615 = vmax.xlane.f32.xlu0 %v2340
    %v2616 = vpop.xlane.xlu0 %2615
    %2617 = vmax.xlane.f32.xlu0 %v2343
    %v2618 = vpop.xlane.xlu0 %2617
    %2619 = vmax.xlane.f32.xlu0 %v2348
    %v2620 = vpop.xlane.xlu0 %2619
    %2621 = vmax.xlane.f32.xlu0 %v2351
    %v2622 = vpop.xlane.xlu0 %2621
    %2623 = vmax.xlane.f32.xlu0 %v2356
    %v2624 = vpop.xlane.xlu0 %2623
    %2625 = vmax.xlane.f32.xlu0 %v2359
    %v2626 = vpop.xlane.xlu0 %2625
    %2627 = vmax.xlane.f32.xlu0 %v2469
    %v2628 = vpop.xlane.xlu0 %2627
    %2629 = vmax.xlane.f32.xlu0 %v2472
    %v2630 = vpop.xlane.xlu0 %2629
    %2631 = vmax.xlane.f32.xlu0 %v2477
    %v2632 = vpop.xlane.xlu0 %2631
    %2633 = vmax.xlane.f32.xlu0 %v2480
    %v2634 = vpop.xlane.xlu0 %2633
    %2635 = vmax.xlane.f32.xlu0 %v2485
    %v2636 = vpop.xlane.xlu0 %2635
    %2637 = vmax.xlane.f32.xlu0 %v2488
    %v2638 = vpop.xlane.xlu0 %2637
    %2639 = vmax.xlane.f32.xlu0 %v2493
    %v2640 = vpop.xlane.xlu0 %2639
    %2641 = vmax.xlane.f32.xlu0 %v2496
    %v2642 = vpop.xlane.xlu0 %2641
    %2643 = vmax.xlane.f32.xlu0 %v2501
    %v2644 = vpop.xlane.xlu0 %2643
    %2645 = vmax.xlane.f32.xlu0 %v2504
    %v2646 = vpop.xlane.xlu0 %2645
    %2647 = vmax.xlane.f32.xlu0 %v2509
    %v2648 = vpop.xlane.xlu0 %2647
    %2649 = vmax.xlane.f32.xlu0 %v2512
    %v2650 = vpop.xlane.xlu0 %2649
    %2651 = vmax.xlane.f32.xlu0 %v2517
    %v2652 = vpop.xlane.xlu0 %2651
    %2653 = vmax.xlane.f32.xlu0 %v2520
    %v2654 = vpop.xlane.xlu0 %2653
    %2655 = vmax.xlane.f32.xlu0 %v2525
    %v2656 = vpop.xlane.xlu0 %2655
    %2657 = vmax.xlane.f32.xlu0 %v2528
    %v2658 = vpop.xlane.xlu0 %2657
    %v2659 = vsub.f32 %v1962, %v2532
    %v2660 = vsub.f32 %v1965, %v2534
    %v2661 = vsub.f32 %v1970, %v2536
    %v2662 = vsub.f32 %v1973, %v2538
    %v2663 = vsub.f32 %v1978, %v2540
    %v2664 = vsub.f32 %v1981, %v2542
    %v2665 = vsub.f32 %v1986, %v2544
    %v2666 = vsub.f32 %v1989, %v2546
    %v2667 = vsub.f32 %v1994, %v2548
    %v2668 = vsub.f32 %v1997, %v2550
    %v2669 = vsub.f32 %v2002, %v2552
    %v2670 = vsub.f32 %v2005, %v2554
    %v2671 = vsub.f32 %v2010, %v2556
    %v2672 = vsub.f32 %v2013, %v2558
    %v2673 = vsub.f32 %v2018, %v2560
    %v2674 = vsub.f32 %v2021, %v2562
    %v2675 = vsub.f32 %v2131, %v2564
    %v2676 = vsub.f32 %v2134, %v2566
    %v2677 = vsub.f32 %v2139, %v2568
    %v2678 = vsub.f32 %v2142, %v2570
    %v2679 = vsub.f32 %v2147, %v2572
    %v2680 = vsub.f32 %v2150, %v2574
    %v2681 = vsub.f32 %v2155, %v2576
    %v2682 = vsub.f32 %v2158, %v2578
    %v2683 = vsub.f32 %v2163, %v2580
    %v2684 = vsub.f32 %v2166, %v2582
    %v2685 = vsub.f32 %v2171, %v2584
    %v2686 = vsub.f32 %v2174, %v2586
    %v2687 = vsub.f32 %v2179, %v2588
    %v2688 = vsub.f32 %v2182, %v2590
    %v2689 = vsub.f32 %v2187, %v2592
    %v2690 = vsub.f32 %v2190, %v2594
    %v2691 = vsub.f32 %v2300, %v2596
    %v2692 = vsub.f32 %v2303, %v2598
    %v2693 = vsub.f32 %v2308, %v2600
    %v2694 = vsub.f32 %v2311, %v2602
    %v2695 = vsub.f32 %v2316, %v2604
    %v2696 = vsub.f32 %v2319, %v2606
    %v2697 = vsub.f32 %v2324, %v2608
    %v2698 = vsub.f32 %v2327, %v2610
    %v2699 = vsub.f32 %v2332, %v2612
    %v2700 = vsub.f32 %v2335, %v2614
    %v2701 = vsub.f32 %v2340, %v2616
    %v2702 = vsub.f32 %v2343, %v2618
    %v2703 = vsub.f32 %v2348, %v2620
    %v2704 = vsub.f32 %v2351, %v2622
    %v2705 = vsub.f32 %v2356, %v2624
    %v2706 = vsub.f32 %v2359, %v2626
    %v2707 = vsub.f32 %v2469, %v2628
    %v2708 = vsub.f32 %v2472, %v2630
    %v2709 = vsub.f32 %v2477, %v2632
    %v2710 = vsub.f32 %v2480, %v2634
    %v2711 = vsub.f32 %v2485, %v2636
    %v2712 = vsub.f32 %v2488, %v2638
    %v2713 = vsub.f32 %v2493, %v2640
    %v2714 = vsub.f32 %v2496, %v2642
    %v2715 = vsub.f32 %v2501, %v2644
    %v2716 = vsub.f32 %v2504, %v2646
    %v2717 = vsub.f32 %v2509, %v2648
    %v2718 = vsub.f32 %v2512, %v2650
    %v2719 = vsub.f32 %v2517, %v2652
    %v2720 = vsub.f32 %v2520, %v2654
    %v2721 = vsub.f32 %v2525, %v2656
    %v2722 = vsub.f32 %v2528, %v2658
    %v2723 = vmul.f32 %v2659, 1.442695
    %v2724 = vpow.pop %v2723
    %v2725 = vmul.f32 %v2660, 1.442695
    %v2726 = vpow.pop %v2725
    %v2727 = vmul.f32 %v2661, 1.442695
    %v2728 = vpow.pop %v2727
    %v2729 = vmul.f32 %v2662, 1.442695
    %v2730 = vpow.pop %v2729
    %v2731 = vmul.f32 %v2663, 1.442695
    %v2732 = vpow.pop %v2731
    %v2733 = vmul.f32 %v2664, 1.442695
    %v2734 = vpow.pop %v2733
    %v2735 = vmul.f32 %v2665, 1.442695
    %v2736 = vpow.pop %v2735
    %v2737 = vmul.f32 %v2666, 1.442695
    %v2738 = vpow.pop %v2737
    %v2739 = vmul.f32 %v2667, 1.442695
    %v2740 = vpow.pop %v2739
    %v2741 = vmul.f32 %v2668, 1.442695
    %v2742 = vpow.pop %v2741
    %v2743 = vmul.f32 %v2669, 1.442695
    %v2744 = vpow.pop %v2743
    %v2745 = vmul.f32 %v2670, 1.442695
    %v2746 = vpow.pop %v2745
    %v2747 = vmul.f32 %v2671, 1.442695
    %v2748 = vpow.pop %v2747
    %v2749 = vmul.f32 %v2672, 1.442695
    %v2750 = vpow.pop %v2749
    %v2751 = vmul.f32 %v2673, 1.442695
    %v2752 = vpow.pop %v2751
    %v2753 = vmul.f32 %v2674, 1.442695
    %v2754 = vpow.pop %v2753
    %v2755 = vmul.f32 %v2675, 1.442695
    %v2756 = vpow.pop %v2755
    %v2757 = vmul.f32 %v2676, 1.442695
    %v2758 = vpow.pop %v2757
    %v2759 = vmul.f32 %v2677, 1.442695
    %v2760 = vpow.pop %v2759
    %v2761 = vmul.f32 %v2678, 1.442695
    %v2762 = vpow.pop %v2761
    %v2763 = vmul.f32 %v2679, 1.442695
    %v2764 = vpow.pop %v2763
    %v2765 = vmul.f32 %v2680, 1.442695
    %v2766 = vpow.pop %v2765
    %v2767 = vmul.f32 %v2681, 1.442695
    %v2768 = vpow.pop %v2767
    %v2769 = vmul.f32 %v2682, 1.442695
    %v2770 = vpow.pop %v2769
    %v2771 = vmul.f32 %v2683, 1.442695
    %v2772 = vpow.pop %v2771
    %v2773 = vmul.f32 %v2684, 1.442695
    %v2774 = vpow.pop %v2773
    %v2775 = vmul.f32 %v2685, 1.442695
    %v2776 = vpow.pop %v2775
    %v2777 = vmul.f32 %v2686, 1.442695
    %v2778 = vpow.pop %v2777
    %v2779 = vmul.f32 %v2687, 1.442695
    %v2780 = vpow.pop %v2779
    %v2781 = vmul.f32 %v2688, 1.442695
    %v2782 = vpow.pop %v2781
    %v2783 = vmul.f32 %v2689, 1.442695
    %v2784 = vpow.pop %v2783
    %v2785 = vmul.f32 %v2690, 1.442695
    %v2786 = vpow.pop %v2785
    %v2787 = vmul.f32 %v2691, 1.442695
    %v2788 = vpow.pop %v2787
    %v2789 = vmul.f32 %v2692, 1.442695
    %v2790 = vpow.pop %v2789
    %v2791 = vmul.f32 %v2693, 1.442695
    %v2792 = vpow.pop %v2791
    %v2793 = vmul.f32 %v2694, 1.442695
    %v2794 = vpow.pop %v2793
    %v2795 = vmul.f32 %v2695, 1.442695
    %v2796 = vpow.pop %v2795
    %v2797 = vmul.f32 %v2696, 1.442695
    %v2798 = vpow.pop %v2797
    %v2799 = vmul.f32 %v2697, 1.442695
    %v2800 = vpow.pop %v2799
    %v2801 = vmul.f32 %v2698, 1.442695
    %v2802 = vpow.pop %v2801
    %v2803 = vmul.f32 %v2699, 1.442695
    %v2804 = vpow.pop %v2803
    %v2805 = vmul.f32 %v2700, 1.442695
    %v2806 = vpow.pop %v2805
    %v2807 = vmul.f32 %v2701, 1.442695
    %v2808 = vpow.pop %v2807
    %v2809 = vmul.f32 %v2702, 1.442695
    %v2810 = vpow.pop %v2809
    %v2811 = vmul.f32 %v2703, 1.442695
    %v2812 = vpow.pop %v2811
    %v2813 = vmul.f32 %v2704, 1.442695
    %v2814 = vpow.pop %v2813
    %v2815 = vmul.f32 %v2705, 1.442695
    %v2816 = vpow.pop %v2815
    %v2817 = vmul.f32 %v2706, 1.442695
    %v2818 = vpow.pop %v2817
    %v2819 = vmul.f32 %v2707, 1.442695
    %v2820 = vpow.pop %v2819
    %v2821 = vmul.f32 %v2708, 1.442695
    %v2822 = vpow.pop %v2821
    %v2823 = vmul.f32 %v2709, 1.442695
    %v2824 = vpow.pop %v2823
    %v2825 = vmul.f32 %v2710, 1.442695
    %v2826 = vpow.pop %v2825
    %v2827 = vmul.f32 %v2711, 1.442695
    %v2828 = vpow.pop %v2827
    %v2829 = vmul.f32 %v2712, 1.442695
    %v2830 = vpow.pop %v2829
    %v2831 = vmul.f32 %v2713, 1.442695
    %v2832 = vpow.pop %v2831
    %v2833 = vmul.f32 %v2714, 1.442695
    %v2834 = vpow.pop %v2833
    %v2835 = vmul.f32 %v2715, 1.442695
    %v2836 = vpow.pop %v2835
    %v2837 = vmul.f32 %v2716, 1.442695
    %v2838 = vpow.pop %v2837
    %v2839 = vmul.f32 %v2717, 1.442695
    %v2840 = vpow.pop %v2839
    %v2841 = vmul.f32 %v2718, 1.442695
    %v2842 = vpow.pop %v2841
    %v2843 = vmul.f32 %v2719, 1.442695
    %v2844 = vpow.pop %v2843
    %v2845 = vmul.f32 %v2720, 1.442695
    %v2846 = vpow.pop %v2845
    %v2847 = vmul.f32 %v2721, 1.442695
    %v2848 = vpow.pop %v2847
    %v2849 = vmul.f32 %v2722, 1.442695
    %v2850 = vpow.pop %v2849
    %2851 = vadd.xlane.f32.xlu0 %v2724
    %v2852 = vpop.xlane.xlu0 %2851
    %2853 = vadd.xlane.f32.xlu0 %v2726
    %v2854 = vpop.xlane.xlu0 %2853
    %2855 = vadd.xlane.f32.xlu0 %v2728
    %v2856 = vpop.xlane.xlu0 %2855
    %2857 = vadd.xlane.f32.xlu0 %v2730
    %v2858 = vpop.xlane.xlu0 %2857
    %2859 = vadd.xlane.f32.xlu0 %v2732
    %v2860 = vpop.xlane.xlu0 %2859
    %2861 = vadd.xlane.f32.xlu0 %v2734
    %v2862 = vpop.xlane.xlu0 %2861
    %2863 = vadd.xlane.f32.xlu0 %v2736
    %v2864 = vpop.xlane.xlu0 %2863
    %2865 = vadd.xlane.f32.xlu0 %v2738
    %v2866 = vpop.xlane.xlu0 %2865
    %2867 = vadd.xlane.f32.xlu0 %v2740
    %v2868 = vpop.xlane.xlu0 %2867
    %2869 = vadd.xlane.f32.xlu0 %v2742
    %v2870 = vpop.xlane.xlu0 %2869
    %2871 = vadd.xlane.f32.xlu0 %v2744
    %v2872 = vpop.xlane.xlu0 %2871
    %2873 = vadd.xlane.f32.xlu0 %v2746
    %v2874 = vpop.xlane.xlu0 %2873
    %2875 = vadd.xlane.f32.xlu0 %v2748
    %v2876 = vpop.xlane.xlu0 %2875
    %2877 = vadd.xlane.f32.xlu0 %v2750
    %v2878 = vpop.xlane.xlu0 %2877
    %2879 = vadd.xlane.f32.xlu0 %v2752
    %v2880 = vpop.xlane.xlu0 %2879
    %2881 = vadd.xlane.f32.xlu0 %v2754
    %v2882 = vpop.xlane.xlu0 %2881
    %2883 = vadd.xlane.f32.xlu0 %v2756
    %v2884 = vpop.xlane.xlu0 %2883
    %2885 = vadd.xlane.f32.xlu0 %v2758
    %v2886 = vpop.xlane.xlu0 %2885
    %2887 = vadd.xlane.f32.xlu0 %v2760
    %v2888 = vpop.xlane.xlu0 %2887
    %2889 = vadd.xlane.f32.xlu0 %v2762
    %v2890 = vpop.xlane.xlu0 %2889
    %2891 = vadd.xlane.f32.xlu0 %v2764
    %v2892 = vpop.xlane.xlu0 %2891
    %2893 = vadd.xlane.f32.xlu0 %v2766
    %v2894 = vpop.xlane.xlu0 %2893
    %2895 = vadd.xlane.f32.xlu0 %v2768
    %v2896 = vpop.xlane.xlu0 %2895
    %2897 = vadd.xlane.f32.xlu0 %v2770
    %v2898 = vpop.xlane.xlu0 %2897
    %2899 = vadd.xlane.f32.xlu0 %v2772
    %v2900 = vpop.xlane.xlu0 %2899
    %2901 = vadd.xlane.f32.xlu0 %v2774
    %v2902 = vpop.xlane.xlu0 %2901
    %2903 = vadd.xlane.f32.xlu0 %v2776
    %v2904 = vpop.xlane.xlu0 %2903
    %2905 = vadd.xlane.f32.xlu0 %v2778
    %v2906 = vpop.xlane.xlu0 %2905
    %2907 = vadd.xlane.f32.xlu0 %v2780
    %v2908 = vpop.xlane.xlu0 %2907
    %2909 = vadd.xlane.f32.xlu0 %v2782
    %v2910 = vpop.xlane.xlu0 %2909
    %2911 = vadd.xlane.f32.xlu0 %v2784
    %v2912 = vpop.xlane.xlu0 %2911
    %2913 = vadd.xlane.f32.xlu0 %v2786
    %v2914 = vpop.xlane.xlu0 %2913
    %2915 = vadd.xlane.f32.xlu0 %v2788
    %v2916 = vpop.xlane.xlu0 %2915
    %2917 = vadd.xlane.f32.xlu0 %v2790
    %v2918 = vpop.xlane.xlu0 %2917
    %2919 = vadd.xlane.f32.xlu0 %v2792
    %v2920 = vpop.xlane.xlu0 %2919
    %2921 = vadd.xlane.f32.xlu0 %v2794
    %v2922 = vpop.xlane.xlu0 %2921
    %2923 = vadd.xlane.f32.xlu0 %v2796
    %v2924 = vpop.xlane.xlu0 %2923
    %2925 = vadd.xlane.f32.xlu0 %v2798
    %v2926 = vpop.xlane.xlu0 %2925
    %2927 = vadd.xlane.f32.xlu0 %v2800
    %v2928 = vpop.xlane.xlu0 %2927
    %2929 = vadd.xlane.f32.xlu0 %v2802
    %v2930 = vpop.xlane.xlu0 %2929
    %2931 = vadd.xlane.f32.xlu0 %v2804
    %v2932 = vpop.xlane.xlu0 %2931
    %2933 = vadd.xlane.f32.xlu0 %v2806
    %v2934 = vpop.xlane.xlu0 %2933
    %2935 = vadd.xlane.f32.xlu0 %v2808
    %v2936 = vpop.xlane.xlu0 %2935
    %2937 = vadd.xlane.f32.xlu0 %v2810
    %v2938 = vpop.xlane.xlu0 %2937
    %2939 = vadd.xlane.f32.xlu0 %v2812
    %v2940 = vpop.xlane.xlu0 %2939
    %2941 = vadd.xlane.f32.xlu0 %v2814
    %v2942 = vpop.xlane.xlu0 %2941
    %2943 = vadd.xlane.f32.xlu0 %v2816
    %v2944 = vpop.xlane.xlu0 %2943
    %2945 = vadd.xlane.f32.xlu0 %v2818
    %v2946 = vpop.xlane.xlu0 %2945
    %2947 = vadd.xlane.f32.xlu0 %v2820
    %v2948 = vpop.xlane.xlu0 %2947
    %2949 = vadd.xlane.f32.xlu0 %v2822
    %v2950 = vpop.xlane.xlu0 %2949
    %2951 = vadd.xlane.f32.xlu0 %v2824
    %v2952 = vpop.xlane.xlu0 %2951
    %2953 = vadd.xlane.f32.xlu0 %v2826
    %v2954 = vpop.xlane.xlu0 %2953
    %2955 = vadd.xlane.f32.xlu0 %v2828
    %v2956 = vpop.xlane.xlu0 %2955
    %2957 = vadd.xlane.f32.xlu0 %v2830
    %v2958 = vpop.xlane.xlu0 %2957
    %2959 = vadd.xlane.f32.xlu0 %v2832
    %v2960 = vpop.xlane.xlu0 %2959
    %2961 = vadd.xlane.f32.xlu0 %v2834
    %v2962 = vpop.xlane.xlu0 %2961
    %2963 = vadd.xlane.f32.xlu0 %v2836
    %v2964 = vpop.xlane.xlu0 %2963
    %2965 = vadd.xlane.f32.xlu0 %v2838
    %v2966 = vpop.xlane.xlu0 %2965
    %2967 = vadd.xlane.f32.xlu0 %v2840
    %v2968 = vpop.xlane.xlu0 %2967
    %2969 = vadd.xlane.f32.xlu0 %v2842
    %v2970 = vpop.xlane.xlu0 %2969
    %2971 = vadd.xlane.f32.xlu0 %v2844
    %v2972 = vpop.xlane.xlu0 %2971
    %2973 = vadd.xlane.f32.xlu0 %v2846
    %v2974 = vpop.xlane.xlu0 %2973
    %2975 = vadd.xlane.f32.xlu0 %v2848
    %v2976 = vpop.xlane.xlu0 %2975
    %2977 = vadd.xlane.f32.xlu0 %v2850
    %v2978 = vpop.xlane.xlu0 %2977
    %v2979 = vrcp.pop %v2852
    %v2980 = vrcp.pop %v2854
    %v2981 = vrcp.pop %v2856
    %v2982 = vrcp.pop %v2858
    %v2983 = vrcp.pop %v2860
    %v2984 = vrcp.pop %v2862
    %v2985 = vrcp.pop %v2864
    %v2986 = vrcp.pop %v2866
    %v2987 = vrcp.pop %v2868
    %v2988 = vrcp.pop %v2870
    %v2989 = vrcp.pop %v2872
    %v2990 = vrcp.pop %v2874
    %v2991 = vrcp.pop %v2876
    %v2992 = vrcp.pop %v2878
    %v2993 = vrcp.pop %v2880
    %v2994 = vrcp.pop %v2882
    %v2995 = vrcp.pop %v2884
    %v2996 = vrcp.pop %v2886
    %v2997 = vrcp.pop %v2888
    %v2998 = vrcp.pop %v2890
    %v2999 = vrcp.pop %v2892
    %v3000 = vrcp.pop %v2894
    %v3001 = vrcp.pop %v2896
    %v3002 = vrcp.pop %v2898
    %v3003 = vrcp.pop %v2900
    %v3004 = vrcp.pop %v2902
    %v3005 = vrcp.pop %v2904
    %v3006 = vrcp.pop %v2906
    %v3007 = vrcp.pop %v2908
    %v3008 = vrcp.pop %v2910
    %v3009 = vrcp.pop %v2912
    %v3010 = vrcp.pop %v2914
    %v3011 = vrcp.pop %v2916
    %v3012 = vrcp.pop %v2918
    %v3013 = vrcp.pop %v2920
    %v3014 = vrcp.pop %v2922
    %v3015 = vrcp.pop %v2924
    %v3016 = vrcp.pop %v2926
    %v3017 = vrcp.pop %v2928
    %v3018 = vrcp.pop %v2930
    %v3019 = vrcp.pop %v2932
    %v3020 = vrcp.pop %v2934
    %v3021 = vrcp.pop %v2936
    %v3022 = vrcp.pop %v2938
    %v3023 = vrcp.pop %v2940
    %v3024 = vrcp.pop %v2942
    %v3025 = vrcp.pop %v2944
    %v3026 = vrcp.pop %v2946
    %v3027 = vrcp.pop %v2948
    %v3028 = vrcp.pop %v2950
    %v3029 = vrcp.pop %v2952
    %v3030 = vrcp.pop %v2954
    %v3031 = vrcp.pop %v2956
    %v3032 = vrcp.pop %v2958
    %v3033 = vrcp.pop %v2960
    %v3034 = vrcp.pop %v2962
    %v3035 = vrcp.pop %v2964
    %v3036 = vrcp.pop %v2966
    %v3037 = vrcp.pop %v2968
    %v3038 = vrcp.pop %v2970
    %v3039 = vrcp.pop %v2972
    %v3040 = vrcp.pop %v2974
    %v3041 = vrcp.pop %v2976
    %v3042 = vrcp.pop %v2978
    %v3043 = vmul.f32 %v2724, %v2979
    %v3044 = vmul.f32 %v2726, %v2980
    %v3045 = vmul.f32 %v2728, %v2981
    %v3046 = vmul.f32 %v2730, %v2982
    %v3047 = vmul.f32 %v2732, %v2983
    %v3048 = vmul.f32 %v2734, %v2984
    %v3049 = vmul.f32 %v2736, %v2985
    %v3050 = vmul.f32 %v2738, %v2986
    %v3051 = vmul.f32 %v2740, %v2987
    %v3052 = vmul.f32 %v2742, %v2988
    %v3053 = vmul.f32 %v2744, %v2989
    %v3054 = vmul.f32 %v2746, %v2990
    %v3055 = vmul.f32 %v2748, %v2991
    %v3056 = vmul.f32 %v2750, %v2992
    %v3057 = vmul.f32 %v2752, %v2993
    %v3058 = vmul.f32 %v2754, %v2994
    %v3059 = vmul.f32 %v2756, %v2995
    %v3060 = vmul.f32 %v2758, %v2996
    %v3061 = vmul.f32 %v2760, %v2997
    %v3062 = vmul.f32 %v2762, %v2998
    %v3063 = vmul.f32 %v2764, %v2999
    %v3064 = vmul.f32 %v2766, %v3000
    %v3065 = vmul.f32 %v2768, %v3001
    %v3066 = vmul.f32 %v2770, %v3002
    %v3067 = vmul.f32 %v2772, %v3003
    %v3068 = vmul.f32 %v2774, %v3004
    %v3069 = vmul.f32 %v2776, %v3005
    %v3070 = vmul.f32 %v2778, %v3006
    %v3071 = vmul.f32 %v2780, %v3007
    %v3072 = vmul.f32 %v2782, %v3008
    %v3073 = vmul.f32 %v2784, %v3009
    %v3074 = vmul.f32 %v2786, %v3010
    %v3075 = vmul.f32 %v2788, %v3011
    %v3076 = vmul.f32 %v2790, %v3012
    %v3077 = vmul.f32 %v2792, %v3013
    %v3078 = vmul.f32 %v2794, %v3014
    %v3079 = vmul.f32 %v2796, %v3015
    %v3080 = vmul.f32 %v2798, %v3016
    %v3081 = vmul.f32 %v2800, %v3017
    %v3082 = vmul.f32 %v2802, %v3018
    %v3083 = vmul.f32 %v2804, %v3019
    %v3084 = vmul.f32 %v2806, %v3020
    %v3085 = vmul.f32 %v2808, %v3021
    %v3086 = vmul.f32 %v2810, %v3022
    %v3087 = vmul.f32 %v2812, %v3023
    %v3088 = vmul.f32 %v2814, %v3024
    %v3089 = vmul.f32 %v2816, %v3025
    %v3090 = vmul.f32 %v2818, %v3026
    %v3091 = vmul.f32 %v2820, %v3027
    %v3092 = vmul.f32 %v2822, %v3028
    %v3093 = vmul.f32 %v2824, %v3029
    %v3094 = vmul.f32 %v2826, %v3030
    %v3095 = vmul.f32 %v2828, %v3031
    %v3096 = vmul.f32 %v2830, %v3032
    %v3097 = vmul.f32 %v2832, %v3033
    %v3098 = vmul.f32 %v2834, %v3034
    %v3099 = vmul.f32 %v2836, %v3035
    %v3100 = vmul.f32 %v2838, %v3036
    %v3101 = vmul.f32 %v2840, %v3037
    %v3102 = vmul.f32 %v2842, %v3038
    %v3103 = vmul.f32 %v2844, %v3039
    %v3104 = vmul.f32 %v2846, %v3040
    %v3105 = vmul.f32 %v2848, %v3041
    %v3106 = vmul.f32 %v2850, %v3042
    %v3107 = vpack.c.bf16 %v3044, %v3043
    %v3108 = vpack.c.bf16 %v3046, %v3045
    %v3109 = vpack.c.bf16 %v3048, %v3047
    %v3110 = vpack.c.bf16 %v3050, %v3049
    %v3111 = vpack.c.bf16 %v3052, %v3051
    %v3112 = vpack.c.bf16 %v3054, %v3053
    %v3113 = vpack.c.bf16 %v3056, %v3055
    %v3114 = vpack.c.bf16 %v3058, %v3057
    %v3115 = vpack.c.bf16 %v3060, %v3059
    %v3116 = vpack.c.bf16 %v3062, %v3061
    %v3117 = vpack.c.bf16 %v3064, %v3063
    %v3118 = vpack.c.bf16 %v3066, %v3065
    %v3119 = vpack.c.bf16 %v3068, %v3067
    %v3120 = vpack.c.bf16 %v3070, %v3069
    %v3121 = vpack.c.bf16 %v3072, %v3071
    %v3122 = vpack.c.bf16 %v3074, %v3073
    %v3123 = vpack.c.bf16 %v3076, %v3075
    %v3124 = vpack.c.bf16 %v3078, %v3077
    %v3125 = vpack.c.bf16 %v3080, %v3079
    %v3126 = vpack.c.bf16 %v3082, %v3081
    %v3127 = vpack.c.bf16 %v3084, %v3083
    %v3128 = vpack.c.bf16 %v3086, %v3085
    %v3129 = vpack.c.bf16 %v3088, %v3087
    %v3130 = vpack.c.bf16 %v3090, %v3089
    %v3131 = vpack.c.bf16 %v3092, %v3091
    %v3132 = vpack.c.bf16 %v3094, %v3093
    %v3133 = vpack.c.bf16 %v3096, %v3095
    %v3134 = vpack.c.bf16 %v3098, %v3097
    %v3135 = vpack.c.bf16 %v3100, %v3099
    %v3136 = vpack.c.bf16 %v3102, %v3101
    %v3137 = vpack.c.bf16 %v3104, %v3103
    %v3138 = vpack.c.bf16 %v3106, %v3105
    %3139 = vmatprep.subr.bf16.mxu0 0
    %3140 = vmatpush1.bf16.msra.mxu0 %v1813
    %3141 = vmatprep.subr.bf16.mxu0 0
    %3142 = vmatpush1.bf16.msra.mxu0 %v1812
    %3143 = vmatprep.subr.bf16.mxu0 0
    %3144 = vmatpush1.bf16.msra.mxu0 %v1811
    %3145 = vmatprep.subr.bf16.mxu0 0
    %3146 = vmatpush1.bf16.msra.mxu0 %v1810
    %3147 = vmatprep.subr.bf16.mxu0 0
    %3148 = vmatpush1.bf16.msra.mxu0 %v1809
    %3149 = vmatprep.subr.bf16.mxu0 0
    %3150 = vmatpush1.bf16.msra.mxu0 %v1808
    %3151 = vmatprep.subr.bf16.mxu0 0
    %3152 = vmatpush1.bf16.msra.mxu0 %v1807
    %3153 = vmatprep.subr.bf16.mxu0 0
    %3154 = vmatpush1.bf16.msra.mxu0 %v1806
    %3155 = vmatprep.subr.bf16.mxu0 0
    %3156 = vmatpush2.bf16.msra.mxu0 0
    %3157 = vmatprep.subr.bf16.mxu0 0
    %3158 = vmatpush2.bf16.msra.mxu0 0
    %3159 = vmatprep.subr.bf16.mxu0 0
    %3160 = vmatpush2.bf16.msra.mxu0 0
    %3161 = vmatprep.subr.bf16.mxu0 0
    %3162 = vmatpush2.bf16.msra.mxu0 0
    %3163 = vmatprep.subr.bf16.mxu0 0
    %3164 = vmatpush2.bf16.msra.mxu0 0
    %3165 = vmatprep.subr.bf16.mxu0 0
    %3166 = vmatpush2.bf16.msra.mxu0 0
    %3167 = vmatprep.subr.bf16.mxu0 0
    %3168 = vmatpush2.bf16.msra.mxu0 0
    %3169 = vmatprep.subr.bf16.mxu0 0
    %3170 = vmatpush2.bf16.msra.mxu0 0
    %3171 = vmatprep.mubr.bf16.mxu0 0
    %3172 = vmatmul.mubr.bf16.gmra.mxu0 %v3107
    %v3173 = vpop.f32.mrf.mxu0
    %v3174 = vadd.f32 0.0, %v3173
    %v3175 = vpop.f32.mrf.mxu0
    %v3176 = vpop.f32.mrf.mxu0
    %v3177 = vadd.f32 0.0, %v3176
    %v3178 = vpop.f32.mrf.mxu0
    %3179 = vmatprep.mubr.bf16.mxu0 0
    %3180 = vmatmul.mubr.bf16.gmra.mxu0 %v3108
    %v3181 = vpop.f32.mrf.mxu0
    %v3182 = vadd.f32 0.0, %v3181
    %v3183 = vpop.f32.mrf.mxu0
    %v3184 = vpop.f32.mrf.mxu0
    %v3185 = vadd.f32 0.0, %v3184
    %v3186 = vpop.f32.mrf.mxu0
    %3187 = vmatprep.mubr.bf16.mxu0 0
    %3188 = vmatmul.mubr.bf16.gmra.mxu0 %v3109
    %v3189 = vpop.f32.mrf.mxu0
    %v3190 = vadd.f32 0.0, %v3189
    %v3191 = vpop.f32.mrf.mxu0
    %v3192 = vpop.f32.mrf.mxu0
    %v3193 = vadd.f32 0.0, %v3192
    %v3194 = vpop.f32.mrf.mxu0
    %3195 = vmatprep.mubr.bf16.mxu0 0
    %3196 = vmatmul.mubr.bf16.gmra.mxu0 %v3110
    %v3197 = vpop.f32.mrf.mxu0
    %v3198 = vadd.f32 0.0, %v3197
    %v3199 = vpop.f32.mrf.mxu0
    %v3200 = vpop.f32.mrf.mxu0
    %v3201 = vadd.f32 0.0, %v3200
    %v3202 = vpop.f32.mrf.mxu0
    %3203 = vmatprep.mubr.bf16.mxu0 0
    %3204 = vmatmul.mubr.bf16.gmra.mxu0 %v3111
    %v3205 = vpop.f32.mrf.mxu0
    %v3206 = vadd.f32 0.0, %v3205
    %v3207 = vpop.f32.mrf.mxu0
    %v3208 = vpop.f32.mrf.mxu0
    %v3209 = vadd.f32 0.0, %v3208
    %v3210 = vpop.f32.mrf.mxu0
    %3211 = vmatprep.mubr.bf16.mxu0 0
    %3212 = vmatmul.mubr.bf16.gmra.mxu0 %v3112
    %v3213 = vpop.f32.mrf.mxu0
    %v3214 = vadd.f32 0.0, %v3213
    %v3215 = vpop.f32.mrf.mxu0
    %v3216 = vpop.f32.mrf.mxu0
    %v3217 = vadd.f32 0.0, %v3216
    %v3218 = vpop.f32.mrf.mxu0
    %3219 = vmatprep.mubr.bf16.mxu0 0
    %3220 = vmatmul.mubr.bf16.gmra.mxu0 %v3113
    %v3221 = vpop.f32.mrf.mxu0
    %v3222 = vadd.f32 0.0, %v3221
    %v3223 = vpop.f32.mrf.mxu0
    %v3224 = vpop.f32.mrf.mxu0
    %v3225 = vadd.f32 0.0, %v3224
    %v3226 = vpop.f32.mrf.mxu0
    %3227 = vmatprep.mubr.bf16.mxu0 0
    %3228 = vmatmul.mubr.bf16.gmra.mxu0 %v3114
    %v3229 = vpop.f32.mrf.mxu0
    %v3230 = vadd.f32 0.0, %v3229
    %v3231 = vpop.f32.mrf.mxu0
    %v3232 = vpop.f32.mrf.mxu0
    %v3233 = vadd.f32 0.0, %v3232
    %v3234 = vpop.f32.mrf.mxu0
    %3235 = vdwg.mxu0
    %3236 = vmatprep.subr.bf16.mxu0 0
    %3237 = vmatpush1.bf16.msra.mxu0 %v1821
    %3238 = vmatprep.subr.bf16.mxu0 0
    %3239 = vmatpush1.bf16.msra.mxu0 %v1820
    %3240 = vmatprep.subr.bf16.mxu0 0
    %3241 = vmatpush1.bf16.msra.mxu0 %v1819
    %3242 = vmatprep.subr.bf16.mxu0 0
    %3243 = vmatpush1.bf16.msra.mxu0 %v1818
    %3244 = vmatprep.subr.bf16.mxu0 0
    %3245 = vmatpush1.bf16.msra.mxu0 %v1817
    %3246 = vmatprep.subr.bf16.mxu0 0
    %3247 = vmatpush1.bf16.msra.mxu0 %v1816
    %3248 = vmatprep.subr.bf16.mxu0 0
    %3249 = vmatpush1.bf16.msra.mxu0 %v1815
    %3250 = vmatprep.subr.bf16.mxu0 0
    %3251 = vmatpush1.bf16.msra.mxu0 %v1814
    %3252 = vmatprep.subr.bf16.mxu0 0
    %3253 = vmatpush2.bf16.msra.mxu0 0
    %3254 = vmatprep.subr.bf16.mxu0 0
    %3255 = vmatpush2.bf16.msra.mxu0 0
    %3256 = vmatprep.subr.bf16.mxu0 0
    %3257 = vmatpush2.bf16.msra.mxu0 0
    %3258 = vmatprep.subr.bf16.mxu0 0
    %3259 = vmatpush2.bf16.msra.mxu0 0
    %3260 = vmatprep.subr.bf16.mxu0 0
    %3261 = vmatpush2.bf16.msra.mxu0 0
    %3262 = vmatprep.subr.bf16.mxu0 0
    %3263 = vmatpush2.bf16.msra.mxu0 0
    %3264 = vmatprep.subr.bf16.mxu0 0
    %3265 = vmatpush2.bf16.msra.mxu0 0
    %3266 = vmatprep.subr.bf16.mxu0 0
    %3267 = vmatpush2.bf16.msra.mxu0 0
    %3268 = vmatprep.mubr.bf16.mxu0 0
    %3269 = vmatmul.mubr.bf16.gmra.mxu0 %v3115
    %v3270 = vpop.f32.mrf.mxu0
    %v3271 = vadd.f32 0.0, %v3270
    %v3272 = vpop.f32.mrf.mxu0
    %v3273 = vpop.f32.mrf.mxu0
    %v3274 = vadd.f32 0.0, %v3273
    %v3275 = vpop.f32.mrf.mxu0
    %3276 = vmatprep.mubr.bf16.mxu0 0
    %3277 = vmatmul.mubr.bf16.gmra.mxu0 %v3116
    %v3278 = vpop.f32.mrf.mxu0
    %v3279 = vadd.f32 0.0, %v3278
    %v3280 = vpop.f32.mrf.mxu0
    %v3281 = vpop.f32.mrf.mxu0
    %v3282 = vadd.f32 0.0, %v3281
    %v3283 = vpop.f32.mrf.mxu0
    %3284 = vmatprep.mubr.bf16.mxu0 0
    %3285 = vmatmul.mubr.bf16.gmra.mxu0 %v3117
    %v3286 = vpop.f32.mrf.mxu0
    %v3287 = vadd.f32 0.0, %v3286
    %v3288 = vpop.f32.mrf.mxu0
    %v3289 = vpop.f32.mrf.mxu0
    %v3290 = vadd.f32 0.0, %v3289
    %v3291 = vpop.f32.mrf.mxu0
    %3292 = vmatprep.mubr.bf16.mxu0 0
    %3293 = vmatmul.mubr.bf16.gmra.mxu0 %v3118
    %v3294 = vpop.f32.mrf.mxu0
    %v3295 = vadd.f32 0.0, %v3294
    %v3296 = vpop.f32.mrf.mxu0
    %v3297 = vpop.f32.mrf.mxu0
    %v3298 = vadd.f32 0.0, %v3297
    %v3299 = vpop.f32.mrf.mxu0
    %3300 = vmatprep.mubr.bf16.mxu0 0
    %3301 = vmatmul.mubr.bf16.gmra.mxu0 %v3119
    %v3302 = vpop.f32.mrf.mxu0
    %v3303 = vadd.f32 0.0, %v3302
    %v3304 = vpop.f32.mrf.mxu0
    %v3305 = vpop.f32.mrf.mxu0
    %v3306 = vadd.f32 0.0, %v3305
    %v3307 = vpop.f32.mrf.mxu0
    %3308 = vmatprep.mubr.bf16.mxu0 0
    %3309 = vmatmul.mubr.bf16.gmra.mxu0 %v3120
    %v3310 = vpop.f32.mrf.mxu0
    %v3311 = vadd.f32 0.0, %v3310
    %v3312 = vpop.f32.mrf.mxu0
    %v3313 = vpop.f32.mrf.mxu0
    %v3314 = vadd.f32 0.0, %v3313
    %v3315 = vpop.f32.mrf.mxu0
    %3316 = vmatprep.mubr.bf16.mxu0 0
    %3317 = vmatmul.mubr.bf16.gmra.mxu0 %v3121
    %v3318 = vpop.f32.mrf.mxu0
    %v3319 = vadd.f32 0.0, %v3318
    %v3320 = vpop.f32.mrf.mxu0
    %v3321 = vpop.f32.mrf.mxu0
    %v3322 = vadd.f32 0.0, %v3321
    %v3323 = vpop.f32.mrf.mxu0
    %3324 = vmatprep.mubr.bf16.mxu0 0
    %3325 = vmatmul.mubr.bf16.gmra.mxu0 %v3122
    %v3326 = vpop.f32.mrf.mxu0
    %v3327 = vadd.f32 0.0, %v3326
    %v3328 = vpop.f32.mrf.mxu0
    %v3329 = vpop.f32.mrf.mxu0
    %v3330 = vadd.f32 0.0, %v3329
    %v3331 = vpop.f32.mrf.mxu0
    %3332 = vdwg.mxu0
    %3333 = vmatprep.subr.bf16.mxu0 0
    %3334 = vmatpush1.bf16.msra.mxu0 %v1829
    %3335 = vmatprep.subr.bf16.mxu0 0
    %3336 = vmatpush1.bf16.msra.mxu0 %v1828
    %3337 = vmatprep.subr.bf16.mxu0 0
    %3338 = vmatpush1.bf16.msra.mxu0 %v1827
    %3339 = vmatprep.subr.bf16.mxu0 0
    %3340 = vmatpush1.bf16.msra.mxu0 %v1826
    %3341 = vmatprep.subr.bf16.mxu0 0
    %3342 = vmatpush1.bf16.msra.mxu0 %v1825
    %3343 = vmatprep.subr.bf16.mxu0 0
    %3344 = vmatpush1.bf16.msra.mxu0 %v1824
    %3345 = vmatprep.subr.bf16.mxu0 0
    %3346 = vmatpush1.bf16.msra.mxu0 %v1823
    %3347 = vmatprep.subr.bf16.mxu0 0
    %3348 = vmatpush1.bf16.msra.mxu0 %v1822
    %3349 = vmatprep.subr.bf16.mxu0 0
    %3350 = vmatpush2.bf16.msra.mxu0 0
    %3351 = vmatprep.subr.bf16.mxu0 0
    %3352 = vmatpush2.bf16.msra.mxu0 0
    %3353 = vmatprep.subr.bf16.mxu0 0
    %3354 = vmatpush2.bf16.msra.mxu0 0
    %3355 = vmatprep.subr.bf16.mxu0 0
    %3356 = vmatpush2.bf16.msra.mxu0 0
    %3357 = vmatprep.subr.bf16.mxu0 0
    %3358 = vmatpush2.bf16.msra.mxu0 0
    %3359 = vmatprep.subr.bf16.mxu0 0
    %3360 = vmatpush2.bf16.msra.mxu0 0
    %3361 = vmatprep.subr.bf16.mxu0 0
    %3362 = vmatpush2.bf16.msra.mxu0 0
    %3363 = vmatprep.subr.bf16.mxu0 0
    %3364 = vmatpush2.bf16.msra.mxu0 0
    %3365 = vmatprep.mubr.bf16.mxu0 0
    %3366 = vmatmul.mubr.bf16.gmra.mxu0 %v3123
    %v3367 = vpop.f32.mrf.mxu0
    %v3368 = vadd.f32 0.0, %v3367
    %v3369 = vpop.f32.mrf.mxu0
    %v3370 = vpop.f32.mrf.mxu0
    %v3371 = vadd.f32 0.0, %v3370
    %v3372 = vpop.f32.mrf.mxu0
    %3373 = vmatprep.mubr.bf16.mxu0 0
    %3374 = vmatmul.mubr.bf16.gmra.mxu0 %v3124
    %v3375 = vpop.f32.mrf.mxu0
    %v3376 = vadd.f32 0.0, %v3375
    %v3377 = vpop.f32.mrf.mxu0
    %v3378 = vpop.f32.mrf.mxu0
    %v3379 = vadd.f32 0.0, %v3378
    %v3380 = vpop.f32.mrf.mxu0
    %3381 = vmatprep.mubr.bf16.mxu0 0
    %3382 = vmatmul.mubr.bf16.gmra.mxu0 %v3125
    %v3383 = vpop.f32.mrf.mxu0
    %v3384 = vadd.f32 0.0, %v3383
    %v3385 = vpop.f32.mrf.mxu0
    %v3386 = vpop.f32.mrf.mxu0
    %v3387 = vadd.f32 0.0, %v3386
    %v3388 = vpop.f32.mrf.mxu0
    %3389 = vmatprep.mubr.bf16.mxu0 0
    %3390 = vmatmul.mubr.bf16.gmra.mxu0 %v3126
    %v3391 = vpop.f32.mrf.mxu0
    %v3392 = vadd.f32 0.0, %v3391
    %v3393 = vpop.f32.mrf.mxu0
    %v3394 = vpop.f32.mrf.mxu0
    %v3395 = vadd.f32 0.0, %v3394
    %v3396 = vpop.f32.mrf.mxu0
    %3397 = vmatprep.mubr.bf16.mxu0 0
    %3398 = vmatmul.mubr.bf16.gmra.mxu0 %v3127
    %v3399 = vpop.f32.mrf.mxu0
    %v3400 = vadd.f32 0.0, %v3399
    %v3401 = vpop.f32.mrf.mxu0
    %v3402 = vpop.f32.mrf.mxu0
    %v3403 = vadd.f32 0.0, %v3402
    %v3404 = vpop.f32.mrf.mxu0
    %3405 = vmatprep.mubr.bf16.mxu0 0
    %3406 = vmatmul.mubr.bf16.gmra.mxu0 %v3128
    %v3407 = vpop.f32.mrf.mxu0
    %v3408 = vadd.f32 0.0, %v3407
    %v3409 = vpop.f32.mrf.mxu0
    %v3410 = vpop.f32.mrf.mxu0
    %v3411 = vadd.f32 0.0, %v3410
    %v3412 = vpop.f32.mrf.mxu0
    %3413 = vmatprep.mubr.bf16.mxu0 0
    %3414 = vmatmul.mubr.bf16.gmra.mxu0 %v3129
    %v3415 = vpop.f32.mrf.mxu0
    %v3416 = vadd.f32 0.0, %v3415
    %v3417 = vpop.f32.mrf.mxu0
    %v3418 = vpop.f32.mrf.mxu0
    %v3419 = vadd.f32 0.0, %v3418
    %v3420 = vpop.f32.mrf.mxu0
    %3421 = vmatprep.mubr.bf16.mxu0 0
    %3422 = vmatmul.mubr.bf16.gmra.mxu0 %v3130
    %v3423 = vpop.f32.mrf.mxu0
    %v3424 = vadd.f32 0.0, %v3423
    %v3425 = vpop.f32.mrf.mxu0
    %v3426 = vpop.f32.mrf.mxu0
    %v3427 = vadd.f32 0.0, %v3426
    %v3428 = vpop.f32.mrf.mxu0
    %3429 = vdwg.mxu0
    %3430 = vmatprep.subr.bf16.mxu0 0
    %3431 = vmatpush1.bf16.msra.mxu0 %v1837
    %3432 = vmatprep.subr.bf16.mxu0 0
    %3433 = vmatpush1.bf16.msra.mxu0 %v1836
    %3434 = vmatprep.subr.bf16.mxu0 0
    %3435 = vmatpush1.bf16.msra.mxu0 %v1835
    %3436 = vmatprep.subr.bf16.mxu0 0
    %3437 = vmatpush1.bf16.msra.mxu0 %v1834
    %3438 = vmatprep.subr.bf16.mxu0 0
    %3439 = vmatpush1.bf16.msra.mxu0 %v1833
    %3440 = vmatprep.subr.bf16.mxu0 0
    %3441 = vmatpush1.bf16.msra.mxu0 %v1832
    %3442 = vmatprep.subr.bf16.mxu0 0
    %3443 = vmatpush1.bf16.msra.mxu0 %v1831
    %3444 = vmatprep.subr.bf16.mxu0 0
    %3445 = vmatpush1.bf16.msra.mxu0 %v1830
    %3446 = vmatprep.subr.bf16.mxu0 0
    %3447 = vmatpush2.bf16.msra.mxu0 0
    %3448 = vmatprep.subr.bf16.mxu0 0
    %3449 = vmatpush2.bf16.msra.mxu0 0
    %3450 = vmatprep.subr.bf16.mxu0 0
    %3451 = vmatpush2.bf16.msra.mxu0 0
    %3452 = vmatprep.subr.bf16.mxu0 0
    %3453 = vmatpush2.bf16.msra.mxu0 0
    %3454 = vmatprep.subr.bf16.mxu0 0
    %3455 = vmatpush2.bf16.msra.mxu0 0
    %3456 = vmatprep.subr.bf16.mxu0 0
    %3457 = vmatpush2.bf16.msra.mxu0 0
    %3458 = vmatprep.subr.bf16.mxu0 0
    %3459 = vmatpush2.bf16.msra.mxu0 0
    %3460 = vmatprep.subr.bf16.mxu0 0
    %3461 = vmatpush2.bf16.msra.mxu0 0
    %3462 = vmatprep.mubr.bf16.mxu0 0
    %3463 = vmatmul.mubr.bf16.gmra.mxu0 %v3131
    %v3464 = vpop.f32.mrf.mxu0
    %v3465 = vadd.f32 0.0, %v3464
    %v3466 = vpop.f32.mrf.mxu0
    %v3467 = vpop.f32.mrf.mxu0
    %v3468 = vadd.f32 0.0, %v3467
    %v3469 = vpop.f32.mrf.mxu0
    %3470 = vmatprep.mubr.bf16.mxu0 0
    %3471 = vmatmul.mubr.bf16.gmra.mxu0 %v3132
    %v3472 = vpop.f32.mrf.mxu0
    %v3473 = vadd.f32 0.0, %v3472
    %v3474 = vpop.f32.mrf.mxu0
    %v3475 = vpop.f32.mrf.mxu0
    %v3476 = vadd.f32 0.0, %v3475
    %v3477 = vpop.f32.mrf.mxu0
    %3478 = vmatprep.mubr.bf16.mxu0 0
    %3479 = vmatmul.mubr.bf16.gmra.mxu0 %v3133
    %v3480 = vpop.f32.mrf.mxu0
    %v3481 = vadd.f32 0.0, %v3480
    %v3482 = vpop.f32.mrf.mxu0
    %v3483 = vpop.f32.mrf.mxu0
    %v3484 = vadd.f32 0.0, %v3483
    %v3485 = vpop.f32.mrf.mxu0
    %3486 = vmatprep.mubr.bf16.mxu0 0
    %3487 = vmatmul.mubr.bf16.gmra.mxu0 %v3134
    %v3488 = vpop.f32.mrf.mxu0
    %v3489 = vadd.f32 0.0, %v3488
    %v3490 = vpop.f32.mrf.mxu0
    %v3491 = vpop.f32.mrf.mxu0
    %v3492 = vadd.f32 0.0, %v3491
    %v3493 = vpop.f32.mrf.mxu0
    %3494 = vmatprep.mubr.bf16.mxu0 0
    %3495 = vmatmul.mubr.bf16.gmra.mxu0 %v3135
    %v3496 = vpop.f32.mrf.mxu0
    %v3497 = vadd.f32 0.0, %v3496
    %v3498 = vpop.f32.mrf.mxu0
    %v3499 = vpop.f32.mrf.mxu0
    %v3500 = vadd.f32 0.0, %v3499
    %v3501 = vpop.f32.mrf.mxu0
    %3502 = vmatprep.mubr.bf16.mxu0 0
    %3503 = vmatmul.mubr.bf16.gmra.mxu0 %v3136
    %v3504 = vpop.f32.mrf.mxu0
    %v3505 = vadd.f32 0.0, %v3504
    %v3506 = vpop.f32.mrf.mxu0
    %v3507 = vpop.f32.mrf.mxu0
    %v3508 = vadd.f32 0.0, %v3507
    %v3509 = vpop.f32.mrf.mxu0
    %3510 = vmatprep.mubr.bf16.mxu0 0
    %3511 = vmatmul.mubr.bf16.gmra.mxu0 %v3137
    %v3512 = vpop.f32.mrf.mxu0
    %v3513 = vadd.f32 0.0, %v3512
    %v3514 = vpop.f32.mrf.mxu0
    %v3515 = vpop.f32.mrf.mxu0
    %v3516 = vadd.f32 0.0, %v3515
    %v3517 = vpop.f32.mrf.mxu0
    %3518 = vmatprep.mubr.bf16.mxu0 0
    %3519 = vmatmul.mubr.bf16.gmra.mxu0 %v3138
    %v3520 = vpop.f32.mrf.mxu0
    %v3521 = vadd.f32 0.0, %v3520
    %v3522 = vpop.f32.mrf.mxu0
    %v3523 = vpop.f32.mrf.mxu0
    %v3524 = vadd.f32 0.0, %v3523
    %v3525 = vpop.f32.mrf.mxu0
    %3526 = vdwg.mxu0
    %3527 = vst.msk [vmem:[%s4] sm:$0xff] %vm1878, %v3174
    %3528 = vst.msk [vmem:[%s4 + $0x8] sm:$0xff] %vm1878, %v3177
    %3529 = vst.msk [vmem:[%s4 + $0x10] sm:$0xff] %vm1878, %v3182
    %3530 = vst.msk [vmem:[%s4 + $0x18] sm:$0xff] %vm1878, %v3185
    %3531 = vst.msk [vmem:[%s4 + $0x20] sm:$0xff] %vm1878, %v3190
    %3532 = vst.msk [vmem:[%s4 + $0x28] sm:$0xff] %vm1878, %v3193
    %3533 = vst.msk [vmem:[%s4 + $0x30] sm:$0xff] %vm1878, %v3198
    %3534 = vst.msk [vmem:[%s4 + $0x38] sm:$0xff] %vm1878, %v3201
    %3535 = vst.msk [vmem:[%s4 + $0x40] sm:$0xff] %vm1878, %v3206
    %3536 = vst.msk [vmem:[%s4 + $0x48] sm:$0xff] %vm1878, %v3209
    %3537 = vst.msk [vmem:[%s4 + $0x50] sm:$0xff] %vm1878, %v3214
    %3538 = vst.msk [vmem:[%s4 + $0x58] sm:$0xff] %vm1878, %v3217
    %3539 = vst.msk [vmem:[%s4 + $0x60] sm:$0xff] %vm1878, %v3222
    %3540 = vst.msk [vmem:[%s4 + $0x68] sm:$0xff] %vm1878, %v3225
    %3541 = vst.msk [vmem:[%s4 + $0x70] sm:$0xff] %vm1878, %v3230
    %3542 = vst.msk [vmem:[%s4 + $0x78] sm:$0xff] %vm1878, %v3233
    %3543 = vst.msk [vmem:[%s4 + $0x80] sm:$0xff] %vm1878, %v3271
    %3544 = vst.msk [vmem:[%s4 + $0x88] sm:$0xff] %vm1878, %v3274
    %3545 = vst.msk [vmem:[%s4 + $0x90] sm:$0xff] %vm1878, %v3279
    %3546 = vst.msk [vmem:[%s4 + $0x98] sm:$0xff] %vm1878, %v3282
    %3547 = vst.msk [vmem:[%s4 + $0xa0] sm:$0xff] %vm1878, %v3287
    %3548 = vst.msk [vmem:[%s4 + $0xa8] sm:$0xff] %vm1878, %v3290
    %3549 = vst.msk [vmem:[%s4 + $0xb0] sm:$0xff] %vm1878, %v3295
    %3550 = vst.msk [vmem:[%s4 + $0xb8] sm:$0xff] %vm1878, %v3298
    %3551 = vst.msk [vmem:[%s4 + $0xc0] sm:$0xff] %vm1878, %v3303
    %3552 = vst.msk [vmem:[%s4 + $0xc8] sm:$0xff] %vm1878, %v3306
    %3553 = vst.msk [vmem:[%s4 + $0xd0] sm:$0xff] %vm1878, %v3311
    %3554 = vst.msk [vmem:[%s4 + $0xd8] sm:$0xff] %vm1878, %v3314
    %3555 = vst.msk [vmem:[%s4 + $0xe0] sm:$0xff] %vm1878, %v3319
    %3556 = vst.msk [vmem:[%s4 + $0xe8] sm:$0xff] %vm1878, %v3322
    %3557 = vst.msk [vmem:[%s4 + $0xf0] sm:$0xff] %vm1878, %v3327
    %3558 = vst.msk [vmem:[%s4 + $0xf8] sm:$0xff] %vm1878, %v3330
    %3559 = vst.msk [vmem:[%s4 + $0x100] sm:$0xff] %vm1878, %v3368
    %3560 = vst.msk [vmem:[%s4 + $0x108] sm:$0xff] %vm1878, %v3371
    %3561 = vst.msk [vmem:[%s4 + $0x110] sm:$0xff] %vm1878, %v3376
    %3562 = vst.msk [vmem:[%s4 + $0x118] sm:$0xff] %vm1878, %v3379
    %3563 = vst.msk [vmem:[%s4 + $0x120] sm:$0xff] %vm1878, %v3384
    %3564 = vst.msk [vmem:[%s4 + $0x128] sm:$0xff] %vm1878, %v3387
    %3565 = vst.msk [vmem:[%s4 + $0x130] sm:$0xff] %vm1878, %v3392
    %3566 = vst.msk [vmem:[%s4 + $0x138] sm:$0xff] %vm1878, %v3395
    %3567 = vst.msk [vmem:[%s4 + $0x140] sm:$0xff] %vm1878, %v3400
    %3568 = vst.msk [vmem:[%s4 + $0x148] sm:$0xff] %vm1878, %v3403
    %3569 = vst.msk [vmem:[%s4 + $0x150] sm:$0xff] %vm1878, %v3408
    %3570 = vst.msk [vmem:[%s4 + $0x158] sm:$0xff] %vm1878, %v3411
    %3571 = vst.msk [vmem:[%s4 + $0x160] sm:$0xff] %vm1878, %v3416
    %3572 = vst.msk [vmem:[%s4 + $0x168] sm:$0xff] %vm1878, %v3419
    %3573 = vst.msk [vmem:[%s4 + $0x170] sm:$0xff] %vm1878, %v3424
    %3574 = vst.msk [vmem:[%s4 + $0x178] sm:$0xff] %vm1878, %v3427
    %3575 = vst.msk [vmem:[%s4 + $0x180] sm:$0xff] %vm1878, %v3465
    %3576 = vst.msk [vmem:[%s4 + $0x188] sm:$0xff] %vm1878, %v3468
    %3577 = vst.msk [vmem:[%s4 + $0x190] sm:$0xff] %vm1878, %v3473
    %3578 = vst.msk [vmem:[%s4 + $0x198] sm:$0xff] %vm1878, %v3476
    %3579 = vst.msk [vmem:[%s4 + $0x1a0] sm:$0xff] %vm1878, %v3481
    %3580 = vst.msk [vmem:[%s4 + $0x1a8] sm:$0xff] %vm1878, %v3484
    %3581 = vst.msk [vmem:[%s4 + $0x1b0] sm:$0xff] %vm1878, %v3489
    %3582 = vst.msk [vmem:[%s4 + $0x1b8] sm:$0xff] %vm1878, %v3492
    %3583 = vst.msk [vmem:[%s4 + $0x1c0] sm:$0xff] %vm1878, %v3497
    %3584 = vst.msk [vmem:[%s4 + $0x1c8] sm:$0xff] %vm1878, %v3500
    %3585 = vst.msk [vmem:[%s4 + $0x1d0] sm:$0xff] %vm1878, %v3505
    %3586 = vst.msk [vmem:[%s4 + $0x1d8] sm:$0xff] %vm1878, %v3508
    %3587 = vst.msk [vmem:[%s4 + $0x1e0] sm:$0xff] %vm1878, %v3513
    %3588 = vst.msk [vmem:[%s4 + $0x1e8] sm:$0xff] %vm1878, %v3516
    %3589 = vst.msk [vmem:[%s4 + $0x1f0] sm:$0xff] %vm1878, %v3521
    %3590 = vst.msk [vmem:[%s4 + $0x1f8] sm:$0xff] %vm1878, %v3524
    // Predicated region
    $region22: #{tpu_custom_call.1} parent=1 // pred_check
      _
    $region23: #{tpu_custom_call.1} parent=1 // pred_check_branch
      %3592 = sbr.rel (0) target = $region25
    $region24: #{tpu_custom_call.1} parent=1 // pred_region
      _
    $region25: #{tpu_custom_call.1} parent=1 // pred_fallthru
      _
    // Predicated region
    $region26: #{tpu_custom_call.1} parent=1 // pred_check
      _
    $region27: #{tpu_custom_call.1} parent=1 // pred_check_branch
      %3594 = sbr.rel (0) target = $region29
    $region28: #{tpu_custom_call.1} parent=1 // pred_region
      _
    $region29: #{tpu_custom_call.1} parent=1 // pred_fallthru
      _
    %3595 = vsyncpa [#allocation3], 1

</llo_original>
